<compile_context>
chip_gen: v5e
topology: v5e:2x2
jax: 0.10.0
libtpu: 0.0.40
codegen_flags: <defaults>
</compile_context>

<pallas_src>
import functools
import math

import jax
import jax.numpy as jnp
from jax import lax
from jax.experimental import pallas as pl
from jax.experimental.pallas import tpu as pltpu


# -----------------------------------------------------------------------------
# Generation-dependent VMEM budget and tile preferences.
# -----------------------------------------------------------------------------
def _tpu_vmem_capacity_bytes():
    try:
        info = pltpu.get_tpu_info()
        cap = getattr(info, "vmem_capacity_bytes", None)
        if cap:
            return int(cap)
    except Exception:
        pass
    return 64 * 1024 * 1024  # conservative default (v7x per-TensorCore VMEM)


_VMEM_CAP = _tpu_vmem_capacity_bytes()
if _VMEM_CAP >= 100 * 1024 * 1024:          # 128 MiB parts: v5e / v6e
    _VMEM_LIMIT_BYTES = 96 * 1024 * 1024
    _TILES = dict(lin_m=512, lin_f=512, lin_k=1024, attn_q=512, attn_k=1024)
else:                                        # 64 MiB per-TC parts: v7x
    _VMEM_LIMIT_BYTES = 40 * 1024 * 1024
    _TILES = dict(lin_m=256, lin_f=256, lin_k=512, attn_q=256, attn_k=512)


def _pick_tile(dim, preferred, min_tile, min_blocks=1):
    """Largest aligned tile <= preferred that divides dim; falls back to full dim.

    min_blocks > 1 caps the tile so the grid axis exposes >= min_blocks blocks
    (keeps both v7x TensorCores busy on 'parallel' axes).
    """
    if min_blocks > 1:
        cand = (dim // min_blocks) // min_tile * min_tile
        if cand >= min_tile:
            preferred = min(preferred, cand)
    if dim <= preferred:
        return dim
    t = preferred
    while t >= min_tile:
        if dim % t == 0 and t % min_tile == 0:
            return t
        t //= 2
    return dim


# -----------------------------------------------------------------------------
# Fused LayerNorm + Linear (+ optional ReLU).
#   x (N, K) is LayerNorm'd over K inside the kernel (K resident in one block)
#   and multiplied by one of G stacked weight groups w (G, K, Fg).
#   Used for LN1 + fused (scaled) QKV projection (G=3) and LN2 + FFN1 (G=1).
# -----------------------------------------------------------------------------
def _ln_linear_kernel(x_ref, g_ref, bln_ref, w_ref, b_ref, o_ref, *, eps, activation):
    x = x_ref[...].astype(jnp.float32)                       # (TM, K)
    mu = jnp.mean(x, axis=-1, keepdims=True)
    xc = x - mu
    var = jnp.mean(xc * xc, axis=-1, keepdims=True)
    xn = (xc * lax.rsqrt(var + eps) * g_ref[...].astype(jnp.float32)
          + bln_ref[...].astype(jnp.float32))                # (TM, K)
    y = jnp.dot(xn, w_ref[0].astype(jnp.float32),
                preferred_element_type=jnp.float32)          # (TM, TF)
    y = y + b_ref[0].astype(jnp.float32)
    if activation == "relu":
        y = jnp.maximum(y, 0.0)
    if len(o_ref.shape) == 3:
        o_ref[0] = y.astype(o_ref.dtype)
    else:
        o_ref[...] = y.astype(o_ref.dtype)


def pallas_ln_linear(x2, gamma, beta, w, b, activation=None, eps=1e-5):
    """x2: (N, K); w: (G, K, Fg); b: (G, 1, Fg). Returns (G, N, Fg), or (N, Fg) if G==1."""
    N, K = x2.shape
    G, _, Fg = w.shape
    TM = _pick_tile(N, _TILES["lin_m"], 8, min_blocks=2)
    TF = _pick_tile(Fg, _TILES["lin_f"], 128)
    grid = (N // TM, G, Fg // TF)

    if G == 1:
        out_shape = jax.ShapeDtypeStruct((N, Fg), x2.dtype)
        out_spec = pl.BlockSpec((TM, TF), lambda i, g, j: (i, j))
    else:
        out_shape = jax.ShapeDtypeStruct((G, N, Fg), x2.dtype)
        out_spec = pl.BlockSpec((1, TM, TF), lambda i, g, j: (g, i, j))

    kernel = functools.partial(_ln_linear_kernel, eps=eps, activation=activation)
    return pl.pallas_call(
        kernel,
        out_shape=out_shape,
        grid=grid,
        in_specs=[
            pl.BlockSpec((TM, K), lambda i, g, j: (i, 0)),
            pl.BlockSpec((1, K), lambda i, g, j: (0, 0)),
            pl.BlockSpec((1, K), lambda i, g, j: (0, 0)),
            pl.BlockSpec((1, K, TF), lambda i, g, j: (g, 0, j)),
            pl.BlockSpec((1, 1, TF), lambda i, g, j: (g, 0, j)),
        ],
        out_specs=out_spec,
        compiler_params=pltpu.CompilerParams(
            dimension_semantics=("parallel", "parallel", "parallel"),
            vmem_limit_bytes=_VMEM_LIMIT_BYTES),
    )(x2, gamma.reshape(1, K), beta.reshape(1, K), w, b)


# -----------------------------------------------------------------------------
# K-tiled linear with bias + residual fused into the finalize (W_O and FFN2).
# -----------------------------------------------------------------------------
def _linear_res_kernel(x_ref, w_ref, b_ref, res_ref, o_ref, acc_ref):
    kk = pl.program_id(2)

    @pl.when(kk == 0)
    def _():
        acc_ref[...] = jnp.zeros_like(acc_ref)

    acc_ref[...] += jnp.dot(x_ref[...], w_ref[...],
                            preferred_element_type=jnp.float32)

    @pl.when(kk == pl.num_programs(2) - 1)
    def _():
        y = (acc_ref[...] + b_ref[...].astype(jnp.float32)
             + res_ref[...].astype(jnp.float32))
        o_ref[...] = y.astype(o_ref.dtype)


def pallas_linear_residual(x2, w, b, res):
    """Returns res + x2 @ w + b.   x2: (N, K); w: (K, F); b: (F,); res: (N, F)."""
    N, K = x2.shape
    F = w.shape[1]
    TM = _pick_tile(N, _TILES["lin_m"], 8, min_blocks=2)
    TF = _pick_tile(F, _TILES["lin_f"], 128)
    TK = _pick_tile(K, _TILES["lin_k"], 128)
    grid = (N // TM, F // TF, K // TK)
    return pl.pallas_call(
        _linear_res_kernel,
        out_shape=jax.ShapeDtypeStruct((N, F), x2.dtype),
        grid=grid,
        in_specs=[
            pl.BlockSpec((TM, TK), lambda i, j, k: (i, k)),
            pl.BlockSpec((TK, TF), lambda i, j, k: (k, j)),
            pl.BlockSpec((1, TF), lambda i, j, k: (0, j)),
            pl.BlockSpec((TM, TF), lambda i, j, k: (i, j)),
        ],
        out_specs=pl.BlockSpec((TM, TF), lambda i, j, k: (i, j)),
        scratch_shapes=[pltpu.VMEM((TM, TF), jnp.float32)],
        compiler_params=pltpu.CompilerParams(
            dimension_semantics=("parallel", "parallel", "arbitrary"),
            vmem_limit_bytes=_VMEM_LIMIT_BYTES),
    )(x2, w, b.reshape(1, F), res)


# -----------------------------------------------------------------------------
# Flash attention over the fused QKV tensor.
#   qkv: (3, B, S, d_model); all heads are processed inside one grid step
#   via static lane slices, so K/V are DMA'd once per (b, q-tile, k-tile) for
#   ALL heads and no XLA head transposes are needed.  The attention matrix is
#   never written to HBM.  The 1/sqrt(d_k) scale is already folded into W_q.
# -----------------------------------------------------------------------------
def _flash_attn_kernel(*refs, n_heads, d_k, has_mask, mask_per_head):
    if has_mask:
        q_ref, k_ref, v_ref, cap_ref, o_ref, m_scr, l_scr, acc_scr = refs
    else:
        q_ref, k_ref, v_ref, o_ref, m_scr, l_scr, acc_scr = refs
        cap_ref = None

    ki = pl.program_id(2)

    @pl.when(ki == 0)
    def _():
        m_scr[...] = jnp.full_like(m_scr, -jnp.inf)
        l_scr[...] = jnp.zeros_like(l_scr)
        acc_scr[...] = jnp.zeros_like(acc_scr)

    q = q_ref[0, 0]    # (TQ, Dm)
    k = k_ref[0, 0]    # (TK, Dm)
    v = v_ref[0, 0]    # (TK, Dm)

    for h in range(n_heads):      # static unroll; heads share the K/V DMA
        sl = slice(h * d_k, (h + 1) * d_k)
        s = lax.dot_general(q[:, sl], k[:, sl], (((1,), (1,)), ((), ())),
                            preferred_element_type=jnp.float32)      # (TQ, TK)
        if has_mask:
            cap = cap_ref[0, h] if mask_per_head else cap_ref[0, 0]
            s = jnp.minimum(s, cap)   # exact masked_fill(mask == 0, -1e9)

        m_prev = m_scr[h]                                             # (TQ, 1)
        m_new = jnp.maximum(m_prev, jnp.max(s, axis=-1, keepdims=True))
        alpha = jnp.exp(m_prev - m_new)
        p = jnp.exp(s - m_new)
        l_scr[h] = alpha * l_scr[h] + jnp.sum(p, axis=-1, keepdims=True)
        acc_scr[h] = alpha * acc_scr[h] + lax.dot_general(
            p.astype(v.dtype), v[:, sl], (((1,), (0,)), ((), ())),
            preferred_element_type=jnp.float32)
        m_scr[h] = m_new

    @pl.when(ki == pl.num_programs(2) - 1)
    def _():
        # Exact reciprocal: it runs once per q-block in the epilogue, so the
        # approx EUP variant buys nothing measurable but would cost accuracy.
        outs = []
        for h in range(n_heads):
            inv = pl.reciprocal(l_scr[h], approx=False)
            outs.append(acc_scr[h] * inv)
        o_ref[0] = jnp.concatenate(outs, axis=-1).astype(o_ref.dtype)


def flash_attention(qkv, n_heads, mask_cap=None):
    """qkv: (3, B, S, Dm). mask_cap: (Bm, Hm, S, S) score cap (f32) or None.
    Returns (B, S, Dm) with heads concatenated along the feature dim."""
    _, B, S, Dm = qkv.shape
    d_k = Dm // n_heads
    TQ = _pick_tile(S, _TILES["attn_q"], 8)
    TKa = _pick_tile(S, _TILES["attn_k"], 128)
    nq, nk = S // TQ, S // TKa

    q_spec = pl.BlockSpec((1, 1, TQ, Dm), lambda b, qi, ki: (0, b, qi, 0))
    k_spec = pl.BlockSpec((1, 1, TKa, Dm), lambda b, qi, ki: (1, b, ki, 0))
    v_spec = pl.BlockSpec((1, 1, TKa, Dm), lambda b, qi, ki: (2, b, ki, 0))
    o_spec = pl.BlockSpec((1, TQ, Dm), lambda b, qi, ki: (b, qi, 0))

    scratch = [
        pltpu.VMEM((n_heads, TQ, 1), jnp.float32),     # running max (per head)
        pltpu.VMEM((n_heads, TQ, 1), jnp.float32),     # running denominator
        pltpu.VMEM((n_heads, TQ, d_k), jnp.float32),   # output accumulator
    ]

    if mask_cap is None:
        in_specs = [q_spec, k_spec, v_spec]
        args = (qkv, qkv, qkv)
        mask_per_head = False
    else:
        Bm, Hm = mask_cap.shape[0], mask_cap.shape[1]
        mask_per_head = Hm > 1
        if Bm > 1:
            c_spec = pl.BlockSpec((1, Hm, TQ, TKa), lambda b, qi, ki: (b, 0, qi, ki))
        else:
            c_spec = pl.BlockSpec((1, Hm, TQ, TKa), lambda b, qi, ki: (0, 0, qi, ki))
        in_specs = [q_spec, k_spec, v_spec, c_spec]
        args = (qkv, qkv, qkv, mask_cap)

    kernel = functools.partial(_flash_attn_kernel, n_heads=n_heads, d_k=d_k,
                               has_mask=mask_cap is not None,
                               mask_per_head=mask_per_head)
    return pl.pallas_call(
        kernel,
        out_shape=jax.ShapeDtypeStruct((B, S, Dm), qkv.dtype),
        grid=(B, nq, nk),
        in_specs=in_specs,
        out_specs=o_spec,
        scratch_shapes=scratch,
        compiler_params=pltpu.CompilerParams(
            dimension_semantics=("parallel", "parallel", "arbitrary"),
            vmem_limit_bytes=_VMEM_LIMIT_BYTES),
    )(*args)


# -----------------------------------------------------------------------------
# Module-level forward (EncoderLayer / Encoder / Transformer).
# -----------------------------------------------------------------------------
def _prepare_mask_cap(mask, B, H, Sq, Sk):
    """mask (broadcastable to (B,H,Sq,Sk)) -> f32 score cap: +inf keep, -1e9 masked."""
    m = jnp.asarray(mask)
    while m.ndim < 4:
        m = m[None]
    Bm = B if m.shape[0] != 1 else 1
    Hm = H if m.shape[1] != 1 else 1
    mb = jnp.broadcast_to(m, (Bm, Hm, Sq, Sk))
    return jnp.where(mb == 0, jnp.float32(-1000000000.0),
                     jnp.float32(jnp.inf)).astype(jnp.float32)


def encoder_layer(x, p, n_heads, mask_cap=None):
    """x: (B, S, d_model). Pre-LN encoder layer; dropout = eval-mode identity."""
    B, S, Dm = x.shape
    N = B * S
    xf = x.reshape(N, Dm)

    # LN1 fused into the single (scaled) Q/K/V projection.
    qkv = pallas_ln_linear(xf, p["ln1_g"], p["ln1_b"], p["wqkv"], p["bqkv"])   # (3, N, Dm)
    attn = flash_attention(qkv.reshape(3, B, S, Dm), n_heads, mask_cap)        # (B, S, Dm)
    # Output projection with the residual add fused into the finalize.
    xf = pallas_linear_residual(attn.reshape(N, Dm), p["wo"], p["bo"], xf)     # (N, Dm)

    # LN2 fused into FFN linear1 + ReLU, then FFN linear2 with fused residual.
    h = pallas_ln_linear(xf, p["ln2_g"], p["ln2_b"], p["w1g"], p["b1g"],
                         activation="relu")                                    # (N, d_ff)
    xf = pallas_linear_residual(h, p["w2"], p["b2"], xf)                       # (N, Dm)
    return xf.reshape(B, S, Dm)


def transformer_forward(src, params, n_heads, mask=None):
    B, S, _ = src.shape
    mask_cap = None if mask is None else _prepare_mask_cap(mask, B, n_heads, S, S)
    x = src
    for p in params:
        x = encoder_layer(x, p, n_heads, mask_cap)
    return x


# -----------------------------------------------------------------------------
# Parameter init (PyTorch-style uniform for Linear; ones/zeros for LayerNorm).
# Weights are stored as (in, out) — i.e. already transposed vs nn.Linear.
# Fused/scaled Pallas-layout copies (wqkv, bqkv, w1g, b1g) are built here so
# the concat / 1/sqrt(d_k) scaling costs nothing at forward time.
# -----------------------------------------------------------------------------
def _init_linear(key, din, dout):
    kw, kb = jax.random.split(key)
    bound = 1.0 / math.sqrt(din)
    w = jax.random.uniform(kw, (din, dout), jnp.float32, -bound, bound)
    b = jax.random.uniform(kb, (dout,), jnp.float32, -bound, bound)
    return w, b


def init_transformer_params(key, d_model, n_heads, d_ff, num_layers):
    d_k = d_model // n_heads
    scale = 1.0 / math.sqrt(d_k)
    params = []
    for lk in jax.random.split(key, num_layers):
        ks = jax.random.split(lk, 6)
        wq, bq = _init_linear(ks[0], d_model, d_model)
        wk, bk = _init_linear(ks[1], d_model, d_model)
        wv, bv = _init_linear(ks[2], d_model, d_model)
        wo, bo = _init_linear(ks[3], d_model, d_model)
        w1, b1 = _init_linear(ks[4], d_model, d_ff)
        w2, b2 = _init_linear(ks[5], d_ff, d_model)
        p = dict(
            wq=wq, bq=bq, wk=wk, bk=bk, wv=wv, bv=bv, wo=wo, bo=bo,
            w1=w1, b1=b1, w2=w2, b2=b2,
            ln1_g=jnp.ones((d_model,), jnp.float32),
            ln1_b=jnp.zeros((d_model,), jnp.float32),
            ln2_g=jnp.ones((d_model,), jnp.float32),
            ln2_b=jnp.zeros((d_model,), jnp.float32),
        )
        # Pallas-layout fused parameters (q-scale folded into W_q / b_q).
        p["wqkv"] = jnp.stack([wq * scale, wk, wv], axis=0)              # (3, Dm, Dm)
        p["bqkv"] = jnp.stack([bq * scale, bk, bv], axis=0).reshape(3, 1, d_model)
        p["w1g"] = w1.reshape(1, d_model, d_ff)                          # (1, Dm, d_ff)
        p["b1g"] = b1.reshape(1, 1, d_ff)
        params.append(p)
    return params


# -----------------------------------------------------------------------------
# Pure-JAX reference (mirrors the PyTorch module exactly, dropout in eval).
# -----------------------------------------------------------------------------
def _ref_layernorm(x, g, b, eps=1e-5):
    mu = jnp.mean(x, axis=-1, keepdims=True)
    var = jnp.mean((x - mu) ** 2, axis=-1, keepdims=True)
    return (x - mu) / jnp.sqrt(var + eps) * g + b


def _ref_linear(x, w, b):
    return x @ w + b


def _ref_attention(q, k, v, mask, d_k):
    scores = jnp.einsum("bhqd,bhkd->bhqk", q, k) / math.sqrt(d_k)
    if mask is not None:
        scores = jnp.where(mask == 0, -1000000000.0, scores)
    attn = jax.nn.softmax(scores, axis=-1)
    return jnp.einsum("bhqk,bhkd->bhqd", attn, v)


def _ref_transformer(src, params, n_heads, mask=None):
    x = src
    for p in params:
        B, S, Dm = x.shape
        dk = Dm // n_heads
        x2 = _ref_layernorm(x, p["ln1_g"], p["ln1_b"])
        q = _ref_linear(x2, p["wq"], p["bq"]).reshape(B, S, n_heads, dk).transpose(0, 2, 1, 3)
        k = _ref_linear(x2, p["wk"], p["bk"]).reshape(B, S, n_heads, dk).transpose(0, 2, 1, 3)
        v = _ref_linear(x2, p["wv"], p["bv"]).reshape(B, S, n_heads, dk).transpose(0, 2, 1, 3)
        o = _ref_attention(q, k, v, mask, dk)
        o = o.transpose(0, 2, 1, 3).reshape(B, S, Dm)
        x = x + _ref_linear(o, p["wo"], p["bo"])
        x2 = _ref_layernorm(x, p["ln2_g"], p["ln2_b"])
        h = jnp.maximum(_ref_linear(x2, p["w1"], p["b1"]), 0.0)
        x = x + _ref_linear(h, p["w2"], p["b2"])
    return x


if __name__ == "__main__":
    key = jax.random.PRNGKey(0)
    B, S, d_model, n_heads, d_ff, num_layers = 2, 8, 32, 4, 64, 2

    k_src, k_par = jax.random.split(key)
    src = jax.random.normal(k_src, (B, S, d_model), dtype=jnp.float32)
    # Causal mask broadcast over batch/heads (1 = keep, 0 = masked out).
    mask = jnp.tril(jnp.ones((S, S), dtype=jnp.int32))[None, None]

    params = init_transformer_params(k_par, d_model, n_heads, d_ff, num_layers)

    fwd = jax.jit(functools.partial(transformer_forward, n_heads=n_heads))
    out_masked = fwd(src, params, mask=mask)
    out_nomask = fwd(src, params, mask=None)
    jax.block_until_ready((out_masked, out_nomask))

    ref_masked = _ref_transformer(src, params, n_heads, mask=mask)
    ref_nomask = _ref_transformer(src, params, n_heads, mask=None)

    err_m = float(jnp.max(jnp.abs(out_masked - ref_masked)))
    err_n = float(jnp.max(jnp.abs(out_nomask - ref_nomask)))
    assert jnp.allclose(out_masked, ref_masked, atol=2e-4, rtol=2e-4), err_m
    assert jnp.allclose(out_nomask, ref_nomask, atol=2e-4, rtol=2e-4), err_n

    print("KERNEL_OK")
</pallas_src>

<mosaic_0001>
module attributes {stable_mosaic.version = 11 : i64} {
  func.func @_linear_res_kernel(%arg0: i32, %arg1: i32, %arg2: i32, %arg3: memref<8x32xf32, #tpu.memory_space<vmem>>, %arg4: memref<32x32xf32, #tpu.memory_space<vmem>>, %arg5: memref<1x32xf32, #tpu.memory_space<vmem>>, %arg6: memref<8x32xf32, #tpu.memory_space<vmem>>, %arg7: memref<8x32xf32, #tpu.memory_space<vmem>>, %arg8: memref<8x32xf32, #tpu.memory_space<vmem>>) attributes {dimension_semantics = [#tpu.dimension_semantics<parallel>, #tpu.dimension_semantics<parallel>, #tpu.dimension_semantics<arbitrary>], iteration_bounds = array<i64: 2, 1, 1>, scalar_prefetch = 0 : i64, scratch_operands = 1 : i64, tpu.core_type = #tpu.core_type<tc>, window_params = [{transform_indices = @transform_0, window_bounds = array<i64: 8, 32>}, {transform_indices = @transform_1, window_bounds = array<i64: 32, 32>}, {transform_indices = @transform_2, window_bounds = array<i64: 1, 32>}, {transform_indices = @transform_3, window_bounds = array<i64: 8, 32>}, {transform_indices = @transform_4, window_bounds = array<i64: 8, 32>}]} {
    %c0_i32 = arith.constant 0 : i32
    %0 = arith.cmpi eq, %arg2, %c0_i32 : i32
    %1 = arith.extui %0 : i1 to i32
    %c0_i32_0 = arith.constant 0 : i32
    %2 = arith.cmpi ne, %1, %c0_i32_0 : i32
    scf.if %2 {
      %cst_10 = arith.constant 0.000000e+00 : f32
      %12 = vector.broadcast %cst_10 : f32 to vector<8x32xf32>
      %c0_11 = arith.constant 0 : index
      %c0_12 = arith.constant 0 : index
      %13 = vector.load %arg8[%c0_11, %c0_12] : memref<8x32xf32, #tpu.memory_space<vmem>>, vector<8x32xf32>
      tpu.vector_store %arg8[%c0_11, %c0_12], %12 {strides = array<i32>} : memref<8x32xf32, #tpu.memory_space<vmem>>, vector<8x32xf32>,
    } else {
    }
    %c0 = arith.constant 0 : index
    %c0_1 = arith.constant 0 : index
    %3 = vector.load %arg8[%c0, %c0_1] : memref<8x32xf32, #tpu.memory_space<vmem>>, vector<8x32xf32>
    %c0_2 = arith.constant 0 : index
    %c0_3 = arith.constant 0 : index
    %4 = vector.load %arg3[%c0_2, %c0_3] : memref<8x32xf32, #tpu.memory_space<vmem>>, vector<8x32xf32>
    %c0_4 = arith.constant 0 : index
    %c0_5 = arith.constant 0 : index
    %5 = vector.load %arg4[%c0_4, %c0_5] : memref<32x32xf32, #tpu.memory_space<vmem>>, vector<32x32xf32>
    %cst = arith.constant dense<0.000000e+00> : vector<8x32xf32>
    %6 = tpu.matmul %4, %5, %cst {dimension_numbers = #tpu.dot_dimension_numbers<[1], [0], [0], [1], [0, 0, 1, 1], [], []>} : vector<8x32xf32>, vector<32x32xf32>, vector<8x32xf32> -> vector<8x32xf32>
    %7 = arith.addf %3, %6 : vector<8x32xf32>
    %c0_6 = arith.constant 0 : index
    %c0_7 = arith.constant 0 : index
    %8 = vector.load %arg8[%c0_6, %c0_7] : memref<8x32xf32, #tpu.memory_space<vmem>>, vector<8x32xf32>
    tpu.vector_store %arg8[%c0_6, %c0_7], %7 {strides = array<i32>} : memref<8x32xf32, #tpu.memory_space<vmem>>, vector<8x32xf32>,
    %c0_i32_8 = arith.constant 0 : i32
    %9 = arith.cmpi eq, %arg2, %c0_i32_8 : i32
    %10 = arith.extui %9 : i1 to i32
    %c0_i32_9 = arith.constant 0 : i32
    %11 = arith.cmpi ne, %10, %c0_i32_9 : i32
    scf.if %11 {
      %c0_10 = arith.constant 0 : index
      %c0_11 = arith.constant 0 : index
      %12 = vector.load %arg8[%c0_10, %c0_11] : memref<8x32xf32, #tpu.memory_space<vmem>>, vector<8x32xf32>
      %c0_12 = arith.constant 0 : index
      %c0_13 = arith.constant 0 : index
      %13 = vector.load %arg5[%c0_12, %c0_13] : memref<1x32xf32, #tpu.memory_space<vmem>>, vector<1x32xf32>
      %14 = vector.broadcast %13 : vector<1x32xf32> to vector<8x32xf32>
      %15 = arith.addf %12, %14 : vector<8x32xf32>
      %c0_14 = arith.constant 0 : index
      %c0_15 = arith.constant 0 : index
      %16 = vector.load %arg6[%c0_14, %c0_15] : memref<8x32xf32, #tpu.memory_space<vmem>>, vector<8x32xf32>
      %17 = arith.addf %15, %16 : vector<8x32xf32>
      %c0_16 = arith.constant 0 : index
      %c0_17 = arith.constant 0 : index
      %18 = vector.load %arg7[%c0_16, %c0_17] : memref<8x32xf32, #tpu.memory_space<vmem>>, vector<8x32xf32>
      tpu.vector_store %arg7[%c0_16, %c0_17], %17 {strides = array<i32>} : memref<8x32xf32, #tpu.memory_space<vmem>>, vector<8x32xf32>,
    } else {
    }
    return
  }
  func.func @transform_0(%arg0: i32, %arg1: i32, %arg2: i32) -> (i32, i32) {
    %c0_i32 = arith.constant 0 : i32
    return %arg0, %arg2 : i32, i32
  }
  func.func @transform_1(%arg0: i32, %arg1: i32, %arg2: i32) -> (i32, i32) {
    %c0_i32 = arith.constant 0 : i32
    return %arg2, %arg1 : i32, i32
  }
  func.func @transform_2(%arg0: i32, %arg1: i32, %arg2: i32) -> (i32, i32) {
    %c0_i32 = arith.constant 0 : i32
    %c0_i32_0 = arith.constant 0 : i32
    return %c0_i32, %arg1 : i32, i32
  }
  func.func @transform_3(%arg0: i32, %arg1: i32, %arg2: i32) -> (i32, i32) {
    %c0_i32 = arith.constant 0 : i32
    return %arg0, %arg1 : i32, i32
  }
  func.func @transform_4(%arg0: i32, %arg1: i32, %arg2: i32) -> (i32, i32) {
    %c0_i32 = arith.constant 0 : i32
    return %arg0, %arg1 : i32, i32
  }
}

module attributes {stable_mosaic.version = 11 : i64} {
  func.func @_flash_attn_kernel(%arg0: i32, %arg1: i32, %arg2: i32, %arg3: memref<1x1x8x32xf32, #tpu.memory_space<vmem>>, %arg4: memref<1x1x8x32xf32, #tpu.memory_space<vmem>>, %arg5: memref<1x1x8x32xf32, #tpu.memory_space<vmem>>, %arg6: memref<1x1x8x8xf32, #tpu.memory_space<vmem>>, %arg7: memref<1x8x32xf32, #tpu.memory_space<vmem>>, %arg8: memref<4x8x1xf32, #tpu.memory_space<vmem>>, %arg9: memref<4x8x1xf32, #tpu.memory_space<vmem>>, %arg10: memref<4x8x8xf32, #tpu.memory_space<vmem>>) attributes {dimension_semantics = [#tpu.dimension_semantics<parallel>, #tpu.dimension_semantics<parallel>, #tpu.dimension_semantics<arbitrary>], iteration_bounds = array<i64: 2, 1, 1>, scalar_prefetch = 0 : i64, scratch_operands = 3 : i64, tpu.core_type = #tpu.core_type<tc>, window_params = [{transform_indices = @transform_0, window_bounds = array<i64: 1, 1, 8, 32>}, {transform_indices = @transform_1, window_bounds = array<i64: 1, 1, 8, 32>}, {transform_indices = @transform_2, window_bounds = array<i64: 1, 1, 8, 32>}, {transform_indices = @transform_3, window_bounds = array<i64: 1, 1, 8, 8>}, {transform_indices = @transform_4, window_bounds = array<i64: 1, 8, 32>}]} {
    %c0_i32 = arith.constant 0 : i32
    %0 = arith.cmpi eq, %arg2, %c0_i32 : i32
    %1 = arith.extui %0 : i1 to i32
    %c0_i32_0 = arith.constant 0 : i32
    %2 = arith.cmpi ne, %1, %c0_i32_0 : i32
    scf.if %2 {
      %cst_114 = arith.constant 0xFF800000 : f32
      %164 = vector.broadcast %cst_114 : f32 to vector<4x8x1xf32>
      %c0_115 = arith.constant 0 : index
      %c0_116 = arith.constant 0 : index
      %c0_117 = arith.constant 0 : index
      %165 = vector.load %arg8[%c0_115, %c0_116, %c0_117] : memref<4x8x1xf32, #tpu.memory_space<vmem>>, vector<4x8x1xf32>
      tpu.vector_store %arg8[%c0_115, %c0_116, %c0_117], %164 {strides = array<i32>} : memref<4x8x1xf32, #tpu.memory_space<vmem>>, vector<4x8x1xf32>,
      %cst_118 = arith.constant 0.000000e+00 : f32
      %166 = vector.broadcast %cst_118 : f32 to vector<4x8x1xf32>
      %c0_119 = arith.constant 0 : index
      %c0_120 = arith.constant 0 : index
      %c0_121 = arith.constant 0 : index
      %167 = vector.load %arg9[%c0_119, %c0_120, %c0_121] : memref<4x8x1xf32, #tpu.memory_space<vmem>>, vector<4x8x1xf32>
      tpu.vector_store %arg9[%c0_119, %c0_120, %c0_121], %166 {strides = array<i32>} : memref<4x8x1xf32, #tpu.memory_space<vmem>>, vector<4x8x1xf32>,
      %cst_122 = arith.constant 0.000000e+00 : f32
      %168 = vector.broadcast %cst_122 : f32 to vector<4x8x8xf32>
      %c0_123 = arith.constant 0 : index
      %c0_124 = arith.constant 0 : index
      %c0_125 = arith.constant 0 : index
      %169 = vector.load %arg10[%c0_123, %c0_124, %c0_125] : memref<4x8x8xf32, #tpu.memory_space<vmem>>, vector<4x8x8xf32>
      tpu.vector_store %arg10[%c0_123, %c0_124, %c0_125], %168 {strides = array<i32>} : memref<4x8x8xf32, #tpu.memory_space<vmem>>, vector<4x8x8xf32>,
    } else {
    }
    %c0 = arith.constant 0 : index
    %c0_1 = arith.constant 0 : index
    %c0_2 = arith.constant 0 : index
    %c0_3 = arith.constant 0 : index
    %3 = vector.load %arg3[%c0, %c0_1, %c0_2, %c0_3] : memref<1x1x8x32xf32, #tpu.memory_space<vmem>>, vector<1x1x8x32xf32>
    %4 = vector.shape_cast %3 : vector<1x1x8x32xf32> to vector<8x32xf32>
    %c0_4 = arith.constant 0 : index
    %c0_5 = arith.constant 0 : index
    %c0_6 = arith.constant 0 : index
    %c0_7 = arith.constant 0 : index
    %5 = vector.load %arg4[%c0_4, %c0_5, %c0_6, %c0_7] : memref<1x1x8x32xf32, #tpu.memory_space<vmem>>, vector<1x1x8x32xf32>
    %6 = vector.shape_cast %5 : vector<1x1x8x32xf32> to vector<8x32xf32>
    %c0_8 = arith.constant 0 : index
    %c0_9 = arith.constant 0 : index
    %c0_10 = arith.constant 0 : index
    %c0_11 = arith.constant 0 : index
    %7 = vector.load %arg5[%c0_8, %c0_9, %c0_10, %c0_11] : memref<1x1x8x32xf32, #tpu.memory_space<vmem>>, vector<1x1x8x32xf32>
    %8 = vector.shape_cast %7 : vector<1x1x8x32xf32> to vector<8x32xf32>
    %9 = vector.extract_strided_slice %4 {offsets = [0, 0], sizes = [8, 8], strides = [1, 1]} : vector<8x32xf32> to vector<8x8xf32>
    %10 = vector.extract_strided_slice %6 {offsets = [0, 0], sizes = [8, 8], strides = [1, 1]} : vector<8x32xf32> to vector<8x8xf32>
    %cst = arith.constant dense<0.000000e+00> : vector<8x8xf32>
    %11 = tpu.matmul %9, %10, %cst {dimension_numbers = #tpu.dot_dimension_numbers<[1], [1], [0], [0], [0, 0, 1, 0], [], []>} : vector<8x8xf32>, vector<8x8xf32>, vector<8x8xf32> -> vector<8x8xf32>
    %c0_12 = arith.constant 0 : index
    %c0_13 = arith.constant 0 : index
    %c0_14 = arith.constant 0 : index
    %c0_15 = arith.constant 0 : index
    %12 = vector.load %arg6[%c0_12, %c0_13, %c0_14, %c0_15] : memref<1x1x8x8xf32, #tpu.memory_space<vmem>>, vector<1x1x8x8xf32>
    %13 = vector.shape_cast %12 : vector<1x1x8x8xf32> to vector<8x8xf32>
    %14 = arith.minimumf %11, %13 : vector<8x8xf32>
    %c0_16 = arith.constant 0 : index
    %c0_17 = arith.constant 0 : index
    %c0_18 = arith.constant 0 : index
    %15 = vector.load %arg8[%c0_16, %c0_17, %c0_18] : memref<4x8x1xf32, #tpu.memory_space<vmem>>, vector<1x8x1xf32>
    %16 = vector.shape_cast %15 : vector<1x8x1xf32> to vector<8x1xf32>
    %cst_19 = arith.constant dense<0xFF800000> : vector<8xf32>
    %17 = vector.multi_reduction <maximumf>, %14, %cst_19 [1] : vector<8x8xf32> to vector<8xf32>
    %18 = vector.shape_cast %17 : vector<8xf32> to vector<8x1xf32>
    %19 = arith.maximumf %16, %18 : vector<8x1xf32>
    %20 = arith.subf %16, %19 : vector<8x1xf32>
    %21 = math.exp %20 : vector<8x1xf32>
    %22 = vector.broadcast %19 : vector<8x1xf32> to vector<8x8xf32>
    %23 = arith.subf %14, %22 : vector<8x8xf32>
    %24 = math.exp %23 : vector<8x8xf32>
    %c0_20 = arith.constant 0 : index
    %c0_21 = arith.constant 0 : index
    %c0_22 = arith.constant 0 : index
    %25 = vector.load %arg9[%c0_20, %c0_21, %c0_22] : memref<4x8x1xf32, #tpu.memory_space<vmem>>, vector<1x8x1xf32>
    %26 = vector.shape_cast %25 : vector<1x8x1xf32> to vector<8x1xf32>
    %27 = arith.mulf %21, %26 : vector<8x1xf32>
    %cst_23 = arith.constant dense<0.000000e+00> : vector<8xf32>
    %28 = vector.multi_reduction <add>, %24, %cst_23 [1] : vector<8x8xf32> to vector<8xf32>
    %29 = vector.shape_cast %28 : vector<8xf32> to vector<8x1xf32>
    %30 = arith.addf %27, %29 : vector<8x1xf32>
    %c0_24 = arith.constant 0 : index
    %c0_25 = arith.constant 0 : index
    %c0_26 = arith.constant 0 : index
    %31 = vector.load %arg9[%c0_24, %c0_25, %c0_26] : memref<4x8x1xf32, #tpu.memory_space<vmem>>, vector<1x8x1xf32>
    %32 = vector.shape_cast %31 : vector<1x8x1xf32> to vector<8x1xf32>
    %33 = vector.shape_cast %30 : vector<8x1xf32> to vector<1x8x1xf32>
    tpu.vector_store %arg9[%c0_24, %c0_25, %c0_26], %33 {strides = array<i32>} : memref<4x8x1xf32, #tpu.memory_space<vmem>>, vector<1x8x1xf32>,
    %c0_27 = arith.constant 0 : index
    %c0_28 = arith.constant 0 : index
    %c0_29 = arith.constant 0 : index
    %34 = vector.load %arg10[%c0_27, %c0_28, %c0_29] : memref<4x8x8xf32, #tpu.memory_space<vmem>>, vector<1x8x8xf32>
    %35 = vector.shape_cast %34 : vector<1x8x8xf32> to vector<8x8xf32>
    %36 = vector.broadcast %21 : vector<8x1xf32> to vector<8x8xf32>
    %37 = arith.mulf %36, %35 : vector<8x8xf32>
    %38 = vector.extract_strided_slice %8 {offsets = [0, 0], sizes = [8, 8], strides = [1, 1]} : vector<8x32xf32> to vector<8x8xf32>
    %cst_30 = arith.constant dense<0.000000e+00> : vector<8x8xf32>
    %39 = tpu.matmul %24, %38, %cst_30 {dimension_numbers = #tpu.dot_dimension_numbers<[1], [0], [0], [1], [0, 0, 1, 1], [], []>} : vector<8x8xf32>, vector<8x8xf32>, vector<8x8xf32> -> vector<8x8xf32>
    %40 = arith.addf %37, %39 : vector<8x8xf32>
    %c0_31 = arith.constant 0 : index
    %c0_32 = arith.constant 0 : index
    %c0_33 = arith.constant 0 : index
    %41 = vector.load %arg10[%c0_31, %c0_32, %c0_33] : memref<4x8x8xf32, #tpu.memory_space<vmem>>, vector<1x8x8xf32>
    %42 = vector.shape_cast %41 : vector<1x8x8xf32> to vector<8x8xf32>
    %43 = vector.shape_cast %40 : vector<8x8xf32> to vector<1x8x8xf32>
    tpu.vector_store %arg10[%c0_31, %c0_32, %c0_33], %43 {strides = array<i32>} : memref<4x8x8xf32, #tpu.memory_space<vmem>>, vector<1x8x8xf32>,
    %c0_34 = arith.constant 0 : index
    %c0_35 = arith.constant 0 : index
    %c0_36 = arith.constant 0 : index
    %44 = vector.load %arg8[%c0_34, %c0_35, %c0_36] : memref<4x8x1xf32, #tpu.memory_space<vmem>>, vector<1x8x1xf32>
    %45 = vector.shape_cast %44 : vector<1x8x1xf32> to vector<8x1xf32>
    %46 = vector.shape_cast %19 : vector<8x1xf32> to vector<1x8x1xf32>
    tpu.vector_store %arg8[%c0_34, %c0_35, %c0_36], %46 {strides = array<i32>} : memref<4x8x1xf32, #tpu.memory_space<vmem>>, vector<1x8x1xf32>,
    %47 = vector.extract_strided_slice %4 {offsets = [0, 8], sizes = [8, 8], strides = [1, 1]} : vector<8x32xf32> to vector<8x8xf32>
    %48 = vector.extract_strided_slice %6 {offsets = [0, 8], sizes = [8, 8], strides = [1, 1]} : vector<8x32xf32> to vector<8x8xf32>
    %cst_37 = arith.constant dense<0.000000e+00> : vector<8x8xf32>
    %49 = tpu.matmul %47, %48, %cst_37 {dimension_numbers = #tpu.dot_dimension_numbers<[1], [1], [0], [0], [0, 0, 1, 0], [], []>} : vector<8x8xf32>, vector<8x8xf32>, vector<8x8xf32> -> vector<8x8xf32>
    %c0_38 = arith.constant 0 : index
    %c0_39 = arith.constant 0 : index
    %c0_40 = arith.constant 0 : index
    %c0_41 = arith.constant 0 : index
    %50 = vector.load %arg6[%c0_38, %c0_39, %c0_40, %c0_41] : memref<1x1x8x8xf32, #tpu.memory_space<vmem>>, vector<1x1x8x8xf32>
    %51 = vector.shape_cast %50 : vector<1x1x8x8xf32> to vector<8x8xf32>
    %52 = arith.minimumf %49, %51 : vector<8x8xf32>
    %c1 = arith.constant 1 : index
    %c0_42 = arith.constant 0 : index
    %c0_43 = arith.constant 0 : index
    %53 = vector.load %arg8[%c1, %c0_42, %c0_43] : memref<4x8x1xf32, #tpu.memory_space<vmem>>, vector<1x8x1xf32>
    %54 = vector.shape_cast %53 : vector<1x8x1xf32> to vector<8x1xf32>
    %cst_44 = arith.constant dense<0xFF800000> : vector<8xf32>
    %55 = vector.multi_reduction <maximumf>, %52, %cst_44 [1] : vector<8x8xf32> to vector<8xf32>
    %56 = vector.shape_cast %55 : vector<8xf32> to vector<8x1xf32>
    %57 = arith.maximumf %54, %56 : vector<8x1xf32>
    %58 = arith.subf %54, %57 : vector<8x1xf32>
    %59 = math.exp %58 : vector<8x1xf32>
    %60 = vector.broadcast %57 : vector<8x1xf32> to vector<8x8xf32>
    %61 = arith.subf %52, %60 : vector<8x8xf32>
    %62 = math.exp %61 : vector<8x8xf32>
    %c1_45 = arith.constant 1 : index
    %c0_46 = arith.constant 0 : index
    %c0_47 = arith.constant 0 : index
    %63 = vector.load %arg9[%c1_45, %c0_46, %c0_47] : memref<4x8x1xf32, #tpu.memory_space<vmem>>, vector<1x8x1xf32>
    %64 = vector.shape_cast %63 : vector<1x8x1xf32> to vector<8x1xf32>
    %65 = arith.mulf %59, %64 : vector<8x1xf32>
    %cst_48 = arith.constant dense<0.000000e+00> : vector<8xf32>
    %66 = vector.multi_reduction <add>, %62, %cst_48 [1] : vector<8x8xf32> to vector<8xf32>
    %67 = vector.shape_cast %66 : vector<8xf32> to vector<8x1xf32>
    %68 = arith.addf %65, %67 : vector<8x1xf32>
    %c1_49 = arith.constant 1 : index
    %c0_50 = arith.constant 0 : index
    %c0_51 = arith.constant 0 : index
    %69 = vector.load %arg9[%c1_49, %c0_50, %c0_51] : memref<4x8x1xf32, #tpu.memory_space<vmem>>, vector<1x8x1xf32>
    %70 = vector.shape_cast %69 : vector<1x8x1xf32> to vector<8x1xf32>
    %71 = vector.shape_cast %68 : vector<8x1xf32> to vector<1x8x1xf32>
    tpu.vector_store %arg9[%c1_49, %c0_50, %c0_51], %71 {strides = array<i32>} : memref<4x8x1xf32, #tpu.memory_space<vmem>>, vector<1x8x1xf32>,
    %c1_52 = arith.constant 1 : index
    %c0_53 = arith.constant 0 : index
    %c0_54 = arith.constant 0 : index
    %72 = vector.load %arg10[%c1_52, %c0_53, %c0_54] : memref<4x8x8xf32, #tpu.memory_space<vmem>>, vector<1x8x8xf32>
    %73 = vector.shape_cast %72 : vector<1x8x8xf32> to vector<8x8xf32>
    %74 = vector.broadcast %59 : vector<8x1xf32> to vector<8x8xf32>
    %75 = arith.mulf %74, %73 : vector<8x8xf32>
    %76 = vector.extract_strided_slice %8 {offsets = [0, 8], sizes = [8, 8], strides = [1, 1]} : vector<8x32xf32> to vector<8x8xf32>
    %cst_55 = arith.constant dense<0.000000e+00> : vector<8x8xf32>
    %77 = tpu.matmul %62, %76, %cst_55 {dimension_numbers = #tpu.dot_dimension_numbers<[1], [0], [0], [1], [0, 0, 1, 1], [], []>} : vector<8x8xf32>, vector<8x8xf32>, vector<8x8xf32> -> vector<8x8xf32>
    %78 = arith.addf %75, %77 : vector<8x8xf32>
    %c1_56 = arith.constant 1 : index
    %c0_57 = arith.constant 0 : index
    %c0_58 = arith.constant 0 : index
    %79 = vector.load %arg10[%c1_56, %c0_57, %c0_58] : memref<4x8x8xf32, #tpu.memory_space<vmem>>, vector<1x8x8xf32>
    %80 = vector.shape_cast %79 : vector<1x8x8xf32> to vector<8x8xf32>
    %81 = vector.shape_cast %78 : vector<8x8xf32> to vector<1x8x8xf32>
    tpu.vector_store %arg10[%c1_56, %c0_57, %c0_58], %81 {strides = array<i32>} : memref<4x8x8xf32, #tpu.memory_space<vmem>>, vector<1x8x8xf32>,
    %c1_59 = arith.constant 1 : index
    %c0_60 = arith.constant 0 : index
    %c0_61 = arith.constant 0 : index
    %82 = vector.load %arg8[%c1_59, %c0_60, %c0_61] : memref<4x8x1xf32, #tpu.memory_space<vmem>>, vector<1x8x1xf32>
    %83 = vector.shape_cast %82 : vector<1x8x1xf32> to vector<8x1xf32>
    %84 = vector.shape_cast %57 : vector<8x1xf32> to vector<1x8x1xf32>
    tpu.vector_store %arg8[%c1_59, %c0_60, %c0_61], %84 {strides = array<i32>} : memref<4x8x1xf32, #tpu.memory_space<vmem>>, vector<1x8x1xf32>,
    %85 = vector.extract_strided_slice %4 {offsets = [0, 16], sizes = [8, 8], strides = [1, 1]} : vector<8x32xf32> to vector<8x8xf32>
    %86 = vector.extract_strided_slice %6 {offsets = [0, 16], sizes = [8, 8], strides = [1, 1]} : vector<8x32xf32> to vector<8x8xf32>
    %cst_62 = arith.constant dense<0.000000e+00> : vector<8x8xf32>
    %87 = tpu.matmul %85, %86, %cst_62 {dimension_numbers = #tpu.dot_dimension_numbers<[1], [1], [0], [0], [0, 0, 1, 0], [], []>} : vector<8x8xf32>, vector<8x8xf32>, vector<8x8xf32> -> vector<8x8xf32>
    %c0_63 = arith.constant 0 : index
    %c0_64 = arith.constant 0 : index
    %c0_65 = arith.constant 0 : index
    %c0_66 = arith.constant 0 : index
    %88 = vector.load %arg6[%c0_63, %c0_64, %c0_65, %c0_66] : memref<1x1x8x8xf32, #tpu.memory_space<vmem>>, vector<1x1x8x8xf32>
    %89 = vector.shape_cast %88 : vector<1x1x8x8xf32> to vector<8x8xf32>
    %90 = arith.minimumf %87, %89 : vector<8x8xf32>
    %c2 = arith.constant 2 : index
    %c0_67 = arith.constant 0 : index
    %c0_68 = arith.constant 0 : index
    %91 = vector.load %arg8[%c2, %c0_67, %c0_68] : memref<4x8x1xf32, #tpu.memory_space<vmem>>, vector<1x8x1xf32>
    %92 = vector.shape_cast %91 : vector<1x8x1xf32> to vector<8x1xf32>
    %cst_69 = arith.constant dense<0xFF800000> : vector<8xf32>
    %93 = vector.multi_reduction <maximumf>, %90, %cst_69 [1] : vector<8x8xf32> to vector<8xf32>
    %94 = vector.shape_cast %93 : vector<8xf32> to vector<8x1xf32>
    %95 = arith.maximumf %92, %94 : vector<8x1xf32>
    %96 = arith.subf %92, %95 : vector<8x1xf32>
    %97 = math.exp %96 : vector<8x1xf32>
    %98 = vector.broadcast %95 : vector<8x1xf32> to vector<8x8xf32>
    %99 = arith.subf %90, %98 : vector<8x8xf32>
    %100 = math.exp %99 : vector<8x8xf32>
    %c2_70 = arith.constant 2 : index
    %c0_71 = arith.constant 0 : index
    %c0_72 = arith.constant 0 : index
    %101 = vector.load %arg9[%c2_70, %c0_71, %c0_72] : memref<4x8x1xf32, #tpu.memory_space<vmem>>, vector<1x8x1xf32>
    %102 = vector.shape_cast %101 : vector<1x8x1xf32> to vector<8x1xf32>
    %103 = arith.mulf %97, %102 : vector<8x1xf32>
    %cst_73 = arith.constant dense<0.000000e+00> : vector<8xf32>
    %104 = vector.multi_reduction <add>, %100, %cst_73 [1] : vector<8x8xf32> to vector<8xf32>
    %105 = vector.shape_cast %104 : vector<8xf32> to vector<8x1xf32>
    %106 = arith.addf %103, %105 : vector<8x1xf32>
    %c2_74 = arith.constant 2 : index
    %c0_75 = arith.constant 0 : index
    %c0_76 = arith.constant 0 : index
    %107 = vector.load %arg9[%c2_74, %c0_75, %c0_76] : memref<4x8x1xf32, #tpu.memory_space<vmem>>, vector<1x8x1xf32>
    %108 = vector.shape_cast %107 : vector<1x8x1xf32> to vector<8x1xf32>
    %109 = vector.shape_cast %106 : vector<8x1xf32> to vector<1x8x1xf32>
    tpu.vector_store %arg9[%c2_74, %c0_75, %c0_76], %109 {strides = array<i32>} : memref<4x8x1xf32, #tpu.memory_space<vmem>>, vector<1x8x1xf32>,
    %c2_77 = arith.constant 2 : index
    %c0_78 = arith.constant 0 : index
    %c0_79 = arith.constant 0 : index
    %110 = vector.load %arg10[%c2_77, %c0_78, %c0_79] : memref<4x8x8xf32, #tpu.memory_space<vmem>>, vector<1x8x8xf32>
    %111 = vector.shape_cast %110 : vector<1x8x8xf32> to vector<8x8xf32>
    %112 = vector.broadcast %97 : vector<8x1xf32> to vector<8x8xf32>
    %113 = arith.mulf %112, %111 : vector<8x8xf32>
    %114 = vector.extract_strided_slice %8 {offsets = [0, 16], sizes = [8, 8], strides = [1, 1]} : vector<8x32xf32> to vector<8x8xf32>
    %cst_80 = arith.constant dense<0.000000e+00> : vector<8x8xf32>
    %115 = tpu.matmul %100, %114, %cst_80 {dimension_numbers = #tpu.dot_dimension_numbers<[1], [0], [0], [1], [0, 0, 1, 1], [], []>} : vector<8x8xf32>, vector<8x8xf32>, vector<8x8xf32> -> vector<8x8xf32>
    %116 = arith.addf %113, %115 : vector<8x8xf32>
    %c2_81 = arith.constant 2 : index
    %c0_82 = arith.constant 0 : index
    %c0_83 = arith.constant 0 : index
    %117 = vector.load %arg10[%c2_81, %c0_82, %c0_83] : memref<4x8x8xf32, #tpu.memory_space<vmem>>, vector<1x8x8xf32>
    %118 = vector.shape_cast %117 : vector<1x8x8xf32> to vector<8x8xf32>
    %119 = vector.shape_cast %116 : vector<8x8xf32> to vector<1x8x8xf32>
    tpu.vector_store %arg10[%c2_81, %c0_82, %c0_83], %119 {strides = array<i32>} : memref<4x8x8xf32, #tpu.memory_space<vmem>>, vector<1x8x8xf32>,
    %c2_84 = arith.constant 2 : index
    %c0_85 = arith.constant 0 : index
    %c0_86 = arith.constant 0 : index
    %120 = vector.load %arg8[%c2_84, %c0_85, %c0_86] : memref<4x8x1xf32, #tpu.memory_space<vmem>>, vector<1x8x1xf32>
    %121 = vector.shape_cast %120 : vector<1x8x1xf32> to vector<8x1xf32>
    %122 = vector.shape_cast %95 : vector<8x1xf32> to vector<1x8x1xf32>
    tpu.vector_store %arg8[%c2_84, %c0_85, %c0_86], %122 {strides = array<i32>} : memref<4x8x1xf32, #tpu.memory_space<vmem>>, vector<1x8x1xf32>,
    %123 = vector.extract_strided_slice %4 {offsets = [0, 24], sizes = [8, 8], strides = [1, 1]} : vector<8x32xf32> to vector<8x8xf32>
    %124 = vector.extract_strided_slice %6 {offsets = [0, 24], sizes = [8, 8], strides = [1, 1]} : vector<8x32xf32> to vector<8x8xf32>
    %cst_87 = arith.constant dense<0.000000e+00> : vector<8x8xf32>
    %125 = tpu.matmul %123, %124, %cst_87 {dimension_numbers = #tpu.dot_dimension_numbers<[1], [1], [0], [0], [0, 0, 1, 0], [], []>} : vector<8x8xf32>, vector<8x8xf32>, vector<8x8xf32> -> vector<8x8xf32>
    %c0_88 = arith.constant 0 : index
    %c0_89 = arith.constant 0 : index
    %c0_90 = arith.constant 0 : index
    %c0_91 = arith.constant 0 : index
    %126 = vector.load %arg6[%c0_88, %c0_89, %c0_90, %c0_91] : memref<1x1x8x8xf32, #tpu.memory_space<vmem>>, vector<1x1x8x8xf32>
    %127 = vector.shape_cast %126 : vector<1x1x8x8xf32> to vector<8x8xf32>
    %128 = arith.minimumf %125, %127 : vector<8x8xf32>
    %c3 = arith.constant 3 : index
    %c0_92 = arith.constant 0 : index
    %c0_93 = arith.constant 0 : index
    %129 = vector.load %arg8[%c3, %c0_92, %c0_93] : memref<4x8x1xf32, #tpu.memory_space<vmem>>, vector<1x8x1xf32>
    %130 = vector.shape_cast %129 : vector<1x8x1xf32> to vector<8x1xf32>
    %cst_94 = arith.constant dense<0xFF800000> : vector<8xf32>
    %131 = vector.multi_reduction <maximumf>, %128, %cst_94 [1] : vector<8x8xf32> to vector<8xf32>
    %132 = vector.shape_cast %131 : vector<8xf32> to vector<8x1xf32>
    %133 = arith.maximumf %130, %132 : vector<8x1xf32>
    %134 = arith.subf %130, %133 : vector<8x1xf32>
    %135 = math.exp %134 : vector<8x1xf32>
    %136 = vector.broadcast %133 : vector<8x1xf32> to vector<8x8xf32>
    %137 = arith.subf %128, %136 : vector<8x8xf32>
    %138 = math.exp %137 : vector<8x8xf32>
    %c3_95 = arith.constant 3 : index
    %c0_96 = arith.constant 0 : index
    %c0_97 = arith.constant 0 : index
    %139 = vector.load %arg9[%c3_95, %c0_96, %c0_97] : memref<4x8x1xf32, #tpu.memory_space<vmem>>, vector<1x8x1xf32>
    %140 = vector.shape_cast %139 : vector<1x8x1xf32> to vector<8x1xf32>
    %141 = arith.mulf %135, %140 : vector<8x1xf32>
    %cst_98 = arith.constant dense<0.000000e+00> : vector<8xf32>
    %142 = vector.multi_reduction <add>, %138, %cst_98 [1] : vector<8x8xf32> to vector<8xf32>
    %143 = vector.shape_cast %142 : vector<8xf32> to vector<8x1xf32>
    %144 = arith.addf %141, %143 : vector<8x1xf32>
    %c3_99 = arith.constant 3 : index
    %c0_100 = arith.constant 0 : index
    %c0_101 = arith.constant 0 : index
    %145 = vector.load %arg9[%c3_99, %c0_100, %c0_101] : memref<4x8x1xf32, #tpu.memory_space<vmem>>, vector<1x8x1xf32>
    %146 = vector.shape_cast %145 : vector<1x8x1xf32> to vector<8x1xf32>
    %147 = vector.shape_cast %144 : vector<8x1xf32> to vector<1x8x1xf32>
    tpu.vector_store %arg9[%c3_99, %c0_100, %c0_101], %147 {strides = array<i32>} : memref<4x8x1xf32, #tpu.memory_space<vmem>>, vector<1x8x1xf32>,
    %c3_102 = arith.constant 3 : index
    %c0_103 = arith.constant 0 : index
    %c0_104 = arith.constant 0 : index
    %148 = vector.load %arg10[%c3_102, %c0_103, %c0_104] : memref<4x8x8xf32, #tpu.memory_space<vmem>>, vector<1x8x8xf32>
    %149 = vector.shape_cast %148 : vector<1x8x8xf32> to vector<8x8xf32>
    %150 = vector.broadcast %135 : vector<8x1xf32> to vector<8x8xf32>
    %151 = arith.mulf %150, %149 : vector<8x8xf32>
    %152 = vector.extract_strided_slice %8 {offsets = [0, 24], sizes = [8, 8], strides = [1, 1]} : vector<8x32xf32> to vector<8x8xf32>
    %cst_105 = arith.constant dense<0.000000e+00> : vector<8x8xf32>
    %153 = tpu.matmul %138, %152, %cst_105 {dimension_numbers = #tpu.dot_dimension_numbers<[1], [0], [0], [1], [0, 0, 1, 1], [], []>} : vector<8x8xf32>, vector<8x8xf32>, vector<8x8xf32> -> vector<8x8xf32>
    %154 = arith.addf %151, %153 : vector<8x8xf32>
    %c3_106 = arith.constant 3 : index
    %c0_107 = arith.constant 0 : index
    %c0_108 = arith.constant 0 : index
    %155 = vector.load %arg10[%c3_106, %c0_107, %c0_108] : memref<4x8x8xf32, #tpu.memory_space<vmem>>, vector<1x8x8xf32>
    %156 = vector.shape_cast %155 : vector<1x8x8xf32> to vector<8x8xf32>
    %157 = vector.shape_cast %154 : vector<8x8xf32> to vector<1x8x8xf32>
    tpu.vector_store %arg10[%c3_106, %c0_107, %c0_108], %157 {strides = array<i32>} : memref<4x8x8xf32, #tpu.memory_space<vmem>>, vector<1x8x8xf32>,
    %c3_109 = arith.constant 3 : index
    %c0_110 = arith.constant 0 : index
    %c0_111 = arith.constant 0 : index
    %158 = vector.load %arg8[%c3_109, %c0_110, %c0_111] : memref<4x8x1xf32, #tpu.memory_space<vmem>>, vector<1x8x1xf32>
    %159 = vector.shape_cast %158 : vector<1x8x1xf32> to vector<8x1xf32>
    %160 = vector.shape_cast %133 : vector<8x1xf32> to vector<1x8x1xf32>
    tpu.vector_store %arg8[%c3_109, %c0_110, %c0_111], %160 {strides = array<i32>} : memref<4x8x1xf32, #tpu.memory_space<vmem>>, vector<1x8x1xf32>,
    %c0_i32_112 = arith.constant 0 : i32
    %161 = arith.cmpi eq, %arg2, %c0_i32_112 : i32
    %162 = arith.extui %161 : i1 to i32
    %c0_i32_113 = arith.constant 0 : i32
    %163 = arith.cmpi ne, %162, %c0_i32_113 : i32
    scf.if %163 {
      %c0_114 = arith.constant 0 : index
      %c0_115 = arith.constant 0 : index
      %c0_116 = arith.constant 0 : index
      %164 = vector.load %arg9[%c0_114, %c0_115, %c0_116] : memref<4x8x1xf32, #tpu.memory_space<vmem>>, vector<1x8x1xf32>
      %165 = vector.shape_cast %164 : vector<1x8x1xf32> to vector<8x1xf32>
      %166 = tpu.reciprocal %165 : vector<8x1xf32> -> vector<8x1xf32>
      %c0_117 = arith.constant 0 : index
      %c0_118 = arith.constant 0 : index
      %c0_119 = arith.constant 0 : index
      %167 = vector.load %arg10[%c0_117, %c0_118, %c0_119] : memref<4x8x8xf32, #tpu.memory_space<vmem>>, vector<1x8x8xf32>
      %168 = vector.shape_cast %167 : vector<1x8x8xf32> to vector<8x8xf32>
      %169 = vector.broadcast %166 : vector<8x1xf32> to vector<8x8xf32>
      %170 = arith.mulf %168, %169 : vector<8x8xf32>
      %c1_120 = arith.constant 1 : index
      %c0_121 = arith.constant 0 : index
      %c0_122 = arith.constant 0 : index
      %171 = vector.load %arg9[%c1_120, %c0_121, %c0_122] : memref<4x8x1xf32, #tpu.memory_space<vmem>>, vector<1x8x1xf32>
      %172 = vector.shape_cast %171 : vector<1x8x1xf32> to vector<8x1xf32>
      %173 = tpu.reciprocal %172 : vector<8x1xf32> -> vector<8x1xf32>
      %c1_123 = arith.constant 1 : index
      %c0_124 = arith.constant 0 : index
      %c0_125 = arith.constant 0 : index
      %174 = vector.load %arg10[%c1_123, %c0_124, %c0_125] : memref<4x8x8xf32, #tpu.memory_space<vmem>>, vector<1x8x8xf32>
      %175 = vector.shape_cast %174 : vector<1x8x8xf32> to vector<8x8xf32>
      %176 = vector.broadcast %173 : vector<8x1xf32> to vector<8x8xf32>
      %177 = arith.mulf %175, %176 : vector<8x8xf32>
      %c2_126 = arith.constant 2 : index
      %c0_127 = arith.constant 0 : index
      %c0_128 = arith.constant 0 : index
      %178 = vector.load %arg9[%c2_126, %c0_127, %c0_128] : memref<4x8x1xf32, #tpu.memory_space<vmem>>, vector<1x8x1xf32>
      %179 = vector.shape_cast %178 : vector<1x8x1xf32> to vector<8x1xf32>
      %180 = tpu.reciprocal %179 : vector<8x1xf32> -> vector<8x1xf32>
      %c2_129 = arith.constant 2 : index
      %c0_130 = arith.constant 0 : index
      %c0_131 = arith.constant 0 : index
      %181 = vector.load %arg10[%c2_129, %c0_130, %c0_131] : memref<4x8x8xf32, #tpu.memory_space<vmem>>, vector<1x8x8xf32>
      %182 = vector.shape_cast %181 : vector<1x8x8xf32> to vector<8x8xf32>
      %183 = vector.broadcast %180 : vector<8x1xf32> to vector<8x8xf32>
      %184 = arith.mulf %182, %183 : vector<8x8xf32>
      %c3_132 = arith.constant 3 : index
      %c0_133 = arith.constant 0 : index
      %c0_134 = arith.constant 0 : index
      %185 = vector.load %arg9[%c3_132, %c0_133, %c0_134] : memref<4x8x1xf32, #tpu.memory_space<vmem>>, vector<1x8x1xf32>
      %186 = vector.shape_cast %185 : vector<1x8x1xf32> to vector<8x1xf32>
      %187 = tpu.reciprocal %186 : vector<8x1xf32> -> vector<8x1xf32>
      %c3_135 = arith.constant 3 : index
      %c0_136 = arith.constant 0 : index
      %c0_137 = arith.constant 0 : index
      %188 = vector.load %arg10[%c3_135, %c0_136, %c0_137] : memref<4x8x8xf32, #tpu.memory_space<vmem>>, vector<1x8x8xf32>
      %189 = vector.shape_cast %188 : vector<1x8x8xf32> to vector<8x8xf32>
      %190 = vector.broadcast %187 : vector<8x1xf32> to vector<8x8xf32>
      %191 = arith.mulf %189, %190 : vector<8x8xf32>
      %192 = tpu.concatenate %170, %177, %184, %191 in 1 : vector<8x8xf32>, vector<8x8xf32>, vector<8x8xf32>, vector<8x8xf32> -> vector<8x32xf32>
      %c0_138 = arith.constant 0 : index
      %c0_139 = arith.constant 0 : index
      %c0_140 = arith.constant 0 : index
      %193 = vector.load %arg7[%c0_138, %c0_139, %c0_140] : memref<1x8x32xf32, #tpu.memory_space<vmem>>, vector<1x8x32xf32>
      %194 = vector.shape_cast %193 : vector<1x8x32xf32> to vector<8x32xf32>
      %195 = vector.shape_cast %192 : vector<8x32xf32> to vector<1x8x32xf32>
      tpu.vector_store %arg7[%c0_138, %c0_139, %c0_140], %195 {strides = array<i32>} : memref<1x8x32xf32, #tpu.memory_space<vmem>>, vector<1x8x32xf32>,
    } else {
    }
    return
  }
  func.func @transform_0(%arg0: i32, %arg1: i32, %arg2: i32) -> (i32, i32, i32, i32) {
    %c0_i32 = arith.constant 0 : i32
    %c0_i32_0 = arith.constant 0 : i32
    %c0_i32_1 = arith.constant 0 : i32
    return %c0_i32, %arg0, %arg1, %c0_i32_0 : i32, i32, i32, i32
  }
  func.func @transform_1(%arg0: i32, %arg1: i32, %arg2: i32) -> (i32, i32, i32, i32) {
    %c1_i32 = arith.constant 1 : i32
    %c0_i32 = arith.constant 0 : i32
    %c0_i32_0 = arith.constant 0 : i32
    return %c1_i32, %arg0, %arg2, %c0_i32 : i32, i32, i32, i32
  }
  func.func @transform_2(%arg0: i32, %arg1: i32, %arg2: i32) -> (i32, i32, i32, i32) {
    %c2_i32 = arith.constant 2 : i32
    %c0_i32 = arith.constant 0 : i32
    %c0_i32_0 = arith.constant 0 : i32
    return %c2_i32, %arg0, %arg2, %c0_i32 : i32, i32, i32, i32
  }
  func.func @transform_3(%arg0: i32, %arg1: i32, %arg2: i32) -> (i32, i32, i32, i32) {
    %c0_i32 = arith.constant 0 : i32
    %c0_i32_0 = arith.constant 0 : i32
    %c0_i32_1 = arith.constant 0 : i32
    return %c0_i32, %c0_i32_0, %arg1, %arg2 : i32, i32, i32, i32
  }
  func.func @transform_4(%arg0: i32, %arg1: i32, %arg2: i32) -> (i32, i32, i32) {
    %c0_i32 = arith.constant 0 : i32
    %c0_i32_0 = arith.constant 0 : i32
    return %arg0, %arg1, %c0_i32 : i32, i32, i32
  }
}

module attributes {stable_mosaic.version = 11 : i64} {
  func.func @_ln_linear_kernel(%arg0: i32, %arg1: i32, %arg2: i32, %arg3: memref<8x32xf32, #tpu.memory_space<vmem>>, %arg4: memref<1x32xf32, #tpu.memory_space<vmem>>, %arg5: memref<1x32xf32, #tpu.memory_space<vmem>>, %arg6: memref<1x32x32xf32, #tpu.memory_space<vmem>>, %arg7: memref<1x1x32xf32, #tpu.memory_space<vmem>>, %arg8: memref<1x8x32xf32, #tpu.memory_space<vmem>>) attributes {dimension_semantics = [#tpu.dimension_semantics<parallel>, #tpu.dimension_semantics<parallel>, #tpu.dimension_semantics<parallel>], iteration_bounds = array<i64: 2, 3, 1>, scalar_prefetch = 0 : i64, scratch_operands = 0 : i64, tpu.core_type = #tpu.core_type<tc>, window_params = [{transform_indices = @transform_0, window_bounds = array<i64: 8, 32>}, {pipeline_mode = #tpu.pipeline_mode<synchronous>, transform_indices = @transform_1, window_bounds = array<i64: 1, 32>}, {pipeline_mode = #tpu.pipeline_mode<synchronous>, transform_indices = @transform_2, window_bounds = array<i64: 1, 32>}, {transform_indices = @transform_3, window_bounds = array<i64: 1, 32, 32>}, {transform_indices = @transform_4, window_bounds = array<i64: 1, 1, 32>}, {transform_indices = @transform_5, window_bounds = array<i64: 1, 8, 32>}]} {
    %c0 = arith.constant 0 : index
    %c0_0 = arith.constant 0 : index
    %0 = vector.load %arg3[%c0, %c0_0] : memref<8x32xf32, #tpu.memory_space<vmem>>, vector<8x32xf32>
    %cst = arith.constant dense<0.000000e+00> : vector<8xf32>
    %1 = vector.multi_reduction <add>, %0, %cst [1] : vector<8x32xf32> to vector<8xf32>
    %2 = vector.shape_cast %1 : vector<8xf32> to vector<8x1xf32>
    %cst_1 = arith.constant 3.200000e+01 : f32
    %3 = vector.broadcast %cst_1 : f32 to vector<8x1xf32>
    %4 = arith.divf %2, %3 : vector<8x1xf32>
    %5 = vector.broadcast %4 : vector<8x1xf32> to vector<8x32xf32>
    %6 = arith.subf %0, %5 : vector<8x32xf32>
    %7 = arith.mulf %6, %6 : vector<8x32xf32>
    %cst_2 = arith.constant dense<0.000000e+00> : vector<8xf32>
    %8 = vector.multi_reduction <add>, %7, %cst_2 [1] : vector<8x32xf32> to vector<8xf32>
    %9 = vector.shape_cast %8 : vector<8xf32> to vector<8x1xf32>
    %cst_3 = arith.constant 3.200000e+01 : f32
    %10 = vector.broadcast %cst_3 : f32 to vector<8x1xf32>
    %11 = arith.divf %9, %10 : vector<8x1xf32>
    %cst_4 = arith.constant 9.99999974E-6 : f32
    %12 = vector.broadcast %cst_4 : f32 to vector<8x1xf32>
    %13 = arith.addf %11, %12 : vector<8x1xf32>
    %14 = math.rsqrt %13 : vector<8x1xf32>
    %15 = vector.broadcast %14 : vector<8x1xf32> to vector<8x32xf32>
    %16 = arith.mulf %6, %15 : vector<8x32xf32>
    %c0_5 = arith.constant 0 : index
    %c0_6 = arith.constant 0 : index
    %17 = vector.load %arg4[%c0_5, %c0_6] : memref<1x32xf32, #tpu.memory_space<vmem>>, vector<1x32xf32>
    %18 = vector.broadcast %17 : vector<1x32xf32> to vector<8x32xf32>
    %19 = arith.mulf %16, %18 : vector<8x32xf32>
    %c0_7 = arith.constant 0 : index
    %c0_8 = arith.constant 0 : index
    %20 = vector.load %arg5[%c0_7, %c0_8] : memref<1x32xf32, #tpu.memory_space<vmem>>, vector<1x32xf32>
    %21 = vector.broadcast %20 : vector<1x32xf32> to vector<8x32xf32>
    %22 = arith.addf %19, %21 : vector<8x32xf32>
    %c0_9 = arith.constant 0 : index
    %c0_10 = arith.constant 0 : index
    %c0_11 = arith.constant 0 : index
    %23 = vector.load %arg6[%c0_9, %c0_10, %c0_11] : memref<1x32x32xf32, #tpu.memory_space<vmem>>, vector<1x32x32xf32>
    %24 = vector.shape_cast %23 : vector<1x32x32xf32> to vector<32x32xf32>
    %cst_12 = arith.constant dense<0.000000e+00> : vector<8x32xf32>
    %25 = tpu.matmul %22, %24, %cst_12 {dimension_numbers = #tpu.dot_dimension_numbers<[1], [0], [0], [1], [0, 0, 1, 1], [], []>} : vector<8x32xf32>, vector<32x32xf32>, vector<8x32xf32> -> vector<8x32xf32>
    %c0_13 = arith.constant 0 : index
    %c0_14 = arith.constant 0 : index
    %c0_15 = arith.constant 0 : index
    %26 = vector.load %arg7[%c0_13, %c0_14, %c0_15] : memref<1x1x32xf32, #tpu.memory_space<vmem>>, vector<1x1x32xf32>
    %27 = vector.shape_cast %26 : vector<1x1x32xf32> to vector<1x32xf32>
    %28 = vector.broadcast %27 : vector<1x32xf32> to vector<8x32xf32>
    %29 = arith.addf %25, %28 : vector<8x32xf32>
    %c0_16 = arith.constant 0 : index
    %c0_17 = arith.constant 0 : index
    %c0_18 = arith.constant 0 : index
    %30 = vector.load %arg8[%c0_16, %c0_17, %c0_18] : memref<1x8x32xf32, #tpu.memory_space<vmem>>, vector<1x8x32xf32>
    %31 = vector.shape_cast %30 : vector<1x8x32xf32> to vector<8x32xf32>
    %32 = vector.shape_cast %29 : vector<8x32xf32> to vector<1x8x32xf32>
    tpu.vector_store %arg8[%c0_16, %c0_17, %c0_18], %32 {strides = array<i32>} : memref<1x8x32xf32, #tpu.memory_space<vmem>>, vector<1x8x32xf32>,
    return
  }
  func.func @transform_0(%arg0: i32, %arg1: i32, %arg2: i32) -> (i32, i32) {
    %c0_i32 = arith.constant 0 : i32
    %c0_i32_0 = arith.constant 0 : i32
    return %arg0, %c0_i32 : i32, i32
  }
  func.func @transform_1(%arg0: i32, %arg1: i32, %arg2: i32) -> (i32, i32) {
    %c0_i32 = arith.constant 0 : i32
    %c0_i32_0 = arith.constant 0 : i32
    %c0_i32_1 = arith.constant 0 : i32
    return %c0_i32, %c0_i32_0 : i32, i32
  }
  func.func @transform_2(%arg0: i32, %arg1: i32, %arg2: i32) -> (i32, i32) {
    %c0_i32 = arith.constant 0 : i32
    %c0_i32_0 = arith.constant 0 : i32
    %c0_i32_1 = arith.constant 0 : i32
    return %c0_i32, %c0_i32_0 : i32, i32
  }
  func.func @transform_3(%arg0: i32, %arg1: i32, %arg2: i32) -> (i32, i32, i32) {
    %c0_i32 = arith.constant 0 : i32
    %c0_i32_0 = arith.constant 0 : i32
    return %arg1, %c0_i32, %arg2 : i32, i32, i32
  }
  func.func @transform_4(%arg0: i32, %arg1: i32, %arg2: i32) -> (i32, i32, i32) {
    %c0_i32 = arith.constant 0 : i32
    %c0_i32_0 = arith.constant 0 : i32
    return %arg1, %c0_i32, %arg2 : i32, i32, i32
  }
  func.func @transform_5(%arg0: i32, %arg1: i32, %arg2: i32) -> (i32, i32, i32) {
    %c0_i32 = arith.constant 0 : i32
    return %arg1, %arg0, %arg2 : i32, i32, i32
  }
}

module attributes {stable_mosaic.version = 11 : i64} {
  func.func @_ln_linear_kernel(%arg0: i32, %arg1: i32, %arg2: i32, %arg3: memref<8x32xf32, #tpu.memory_space<vmem>>, %arg4: memref<1x32xf32, #tpu.memory_space<vmem>>, %arg5: memref<1x32xf32, #tpu.memory_space<vmem>>, %arg6: memref<1x32x64xf32, #tpu.memory_space<vmem>>, %arg7: memref<1x1x64xf32, #tpu.memory_space<vmem>>, %arg8: memref<8x64xf32, #tpu.memory_space<vmem>>) attributes {dimension_semantics = [#tpu.dimension_semantics<parallel>, #tpu.dimension_semantics<parallel>, #tpu.dimension_semantics<parallel>], iteration_bounds = array<i64: 2, 1, 1>, scalar_prefetch = 0 : i64, scratch_operands = 0 : i64, tpu.core_type = #tpu.core_type<tc>, window_params = [{transform_indices = @transform_0, window_bounds = array<i64: 8, 32>}, {pipeline_mode = #tpu.pipeline_mode<synchronous>, transform_indices = @transform_1, window_bounds = array<i64: 1, 32>}, {pipeline_mode = #tpu.pipeline_mode<synchronous>, transform_indices = @transform_2, window_bounds = array<i64: 1, 32>}, {transform_indices = @transform_3, window_bounds = array<i64: 1, 32, 64>}, {transform_indices = @transform_4, window_bounds = array<i64: 1, 1, 64>}, {transform_indices = @transform_5, window_bounds = array<i64: 8, 64>}]} {
    %c0 = arith.constant 0 : index
    %c0_0 = arith.constant 0 : index
    %0 = vector.load %arg3[%c0, %c0_0] : memref<8x32xf32, #tpu.memory_space<vmem>>, vector<8x32xf32>
    %cst = arith.constant dense<0.000000e+00> : vector<8xf32>
    %1 = vector.multi_reduction <add>, %0, %cst [1] : vector<8x32xf32> to vector<8xf32>
    %2 = vector.shape_cast %1 : vector<8xf32> to vector<8x1xf32>
    %cst_1 = arith.constant 3.200000e+01 : f32
    %3 = vector.broadcast %cst_1 : f32 to vector<8x1xf32>
    %4 = arith.divf %2, %3 : vector<8x1xf32>
    %5 = vector.broadcast %4 : vector<8x1xf32> to vector<8x32xf32>
    %6 = arith.subf %0, %5 : vector<8x32xf32>
    %7 = arith.mulf %6, %6 : vector<8x32xf32>
    %cst_2 = arith.constant dense<0.000000e+00> : vector<8xf32>
    %8 = vector.multi_reduction <add>, %7, %cst_2 [1] : vector<8x32xf32> to vector<8xf32>
    %9 = vector.shape_cast %8 : vector<8xf32> to vector<8x1xf32>
    %cst_3 = arith.constant 3.200000e+01 : f32
    %10 = vector.broadcast %cst_3 : f32 to vector<8x1xf32>
    %11 = arith.divf %9, %10 : vector<8x1xf32>
    %cst_4 = arith.constant 9.99999974E-6 : f32
    %12 = vector.broadcast %cst_4 : f32 to vector<8x1xf32>
    %13 = arith.addf %11, %12 : vector<8x1xf32>
    %14 = math.rsqrt %13 : vector<8x1xf32>
    %15 = vector.broadcast %14 : vector<8x1xf32> to vector<8x32xf32>
    %16 = arith.mulf %6, %15 : vector<8x32xf32>
    %c0_5 = arith.constant 0 : index
    %c0_6 = arith.constant 0 : index
    %17 = vector.load %arg4[%c0_5, %c0_6] : memref<1x32xf32, #tpu.memory_space<vmem>>, vector<1x32xf32>
    %18 = vector.broadcast %17 : vector<1x32xf32> to vector<8x32xf32>
    %19 = arith.mulf %16, %18 : vector<8x32xf32>
    %c0_7 = arith.constant 0 : index
    %c0_8 = arith.constant 0 : index
    %20 = vector.load %arg5[%c0_7, %c0_8] : memref<1x32xf32, #tpu.memory_space<vmem>>, vector<1x32xf32>
    %21 = vector.broadcast %20 : vector<1x32xf32> to vector<8x32xf32>
    %22 = arith.addf %19, %21 : vector<8x32xf32>
    %c0_9 = arith.constant 0 : index
    %c0_10 = arith.constant 0 : index
    %c0_11 = arith.constant 0 : index
    %23 = vector.load %arg6[%c0_9, %c0_10, %c0_11] : memref<1x32x64xf32, #tpu.memory_space<vmem>>, vector<1x32x64xf32>
    %24 = vector.shape_cast %23 : vector<1x32x64xf32> to vector<32x64xf32>
    %cst_12 = arith.constant dense<0.000000e+00> : vector<8x64xf32>
    %25 = tpu.matmul %22, %24, %cst_12 {dimension_numbers = #tpu.dot_dimension_numbers<[1], [0], [0], [1], [0, 0, 1, 1], [], []>} : vector<8x32xf32>, vector<32x64xf32>, vector<8x64xf32> -> vector<8x64xf32>
    %c0_13 = arith.constant 0 : index
    %c0_14 = arith.constant 0 : index
    %c0_15 = arith.constant 0 : index
    %26 = vector.load %arg7[%c0_13, %c0_14, %c0_15] : memref<1x1x64xf32, #tpu.memory_space<vmem>>, vector<1x1x64xf32>
    %27 = vector.shape_cast %26 : vector<1x1x64xf32> to vector<1x64xf32>
    %28 = vector.broadcast %27 : vector<1x64xf32> to vector<8x64xf32>
    %29 = arith.addf %25, %28 : vector<8x64xf32>
    %cst_16 = arith.constant 0.000000e+00 : f32
    %30 = vector.broadcast %cst_16 : f32 to vector<8x64xf32>
    %31 = arith.maximumf %29, %30 : vector<8x64xf32>
    %c0_17 = arith.constant 0 : index
    %c0_18 = arith.constant 0 : index
    %32 = vector.load %arg8[%c0_17, %c0_18] : memref<8x64xf32, #tpu.memory_space<vmem>>, vector<8x64xf32>
    tpu.vector_store %arg8[%c0_17, %c0_18], %31 {strides = array<i32>} : memref<8x64xf32, #tpu.memory_space<vmem>>, vector<8x64xf32>,
    return
  }
  func.func @transform_0(%arg0: i32, %arg1: i32, %arg2: i32) -> (i32, i32) {
    %c0_i32 = arith.constant 0 : i32
    %c0_i32_0 = arith.constant 0 : i32
    return %arg0, %c0_i32 : i32, i32
  }
  func.func @transform_1(%arg0: i32, %arg1: i32, %arg2: i32) -> (i32, i32) {
    %c0_i32 = arith.constant 0 : i32
    %c0_i32_0 = arith.constant 0 : i32
    %c0_i32_1 = arith.constant 0 : i32
    return %c0_i32, %c0_i32_0 : i32, i32
  }
  func.func @transform_2(%arg0: i32, %arg1: i32, %arg2: i32) -> (i32, i32) {
    %c0_i32 = arith.constant 0 : i32
    %c0_i32_0 = arith.constant 0 : i32
    %c0_i32_1 = arith.constant 0 : i32
    return %c0_i32, %c0_i32_0 : i32, i32
  }
  func.func @transform_3(%arg0: i32, %arg1: i32, %arg2: i32) -> (i32, i32, i32) {
    %c0_i32 = arith.constant 0 : i32
    %c0_i32_0 = arith.constant 0 : i32
    return %arg1, %c0_i32, %arg2 : i32, i32, i32
  }
  func.func @transform_4(%arg0: i32, %arg1: i32, %arg2: i32) -> (i32, i32, i32) {
    %c0_i32 = arith.constant 0 : i32
    %c0_i32_0 = arith.constant 0 : i32
    return %arg1, %c0_i32, %arg2 : i32, i32, i32
  }
  func.func @transform_5(%arg0: i32, %arg1: i32, %arg2: i32) -> (i32, i32) {
    %c0_i32 = arith.constant 0 : i32
    return %arg0, %arg2 : i32, i32
  }
}

module attributes {stable_mosaic.version = 11 : i64} {
  func.func @_linear_res_kernel(%arg0: i32, %arg1: i32, %arg2: i32, %arg3: memref<8x64xf32, #tpu.memory_space<vmem>>, %arg4: memref<64x32xf32, #tpu.memory_space<vmem>>, %arg5: memref<1x32xf32, #tpu.memory_space<vmem>>, %arg6: memref<8x32xf32, #tpu.memory_space<vmem>>, %arg7: memref<8x32xf32, #tpu.memory_space<vmem>>, %arg8: memref<8x32xf32, #tpu.memory_space<vmem>>) attributes {dimension_semantics = [#tpu.dimension_semantics<parallel>, #tpu.dimension_semantics<parallel>, #tpu.dimension_semantics<arbitrary>], iteration_bounds = array<i64: 2, 1, 1>, scalar_prefetch = 0 : i64, scratch_operands = 1 : i64, tpu.core_type = #tpu.core_type<tc>, window_params = [{transform_indices = @transform_0, window_bounds = array<i64: 8, 64>}, {transform_indices = @transform_1, window_bounds = array<i64: 64, 32>}, {transform_indices = @transform_2, window_bounds = array<i64: 1, 32>}, {transform_indices = @transform_3, window_bounds = array<i64: 8, 32>}, {transform_indices = @transform_4, window_bounds = array<i64: 8, 32>}]} {
    %c0_i32 = arith.constant 0 : i32
    %0 = arith.cmpi eq, %arg2, %c0_i32 : i32
    %1 = arith.extui %0 : i1 to i32
    %c0_i32_0 = arith.constant 0 : i32
    %2 = arith.cmpi ne, %1, %c0_i32_0 : i32
    scf.if %2 {
      %cst_10 = arith.constant 0.000000e+00 : f32
      %12 = vector.broadcast %cst_10 : f32 to vector<8x32xf32>
      %c0_11 = arith.constant 0 : index
      %c0_12 = arith.constant 0 : index
      %13 = vector.load %arg8[%c0_11, %c0_12] : memref<8x32xf32, #tpu.memory_space<vmem>>, vector<8x32xf32>
      tpu.vector_store %arg8[%c0_11, %c0_12], %12 {strides = array<i32>} : memref<8x32xf32, #tpu.memory_space<vmem>>, vector<8x32xf32>,
    } else {
    }
    %c0 = arith.constant 0 : index
    %c0_1 = arith.constant 0 : index
    %3 = vector.load %arg8[%c0, %c0_1] : memref<8x32xf32, #tpu.memory_space<vmem>>, vector<8x32xf32>
    %c0_2 = arith.constant 0 : index
    %c0_3 = arith.constant 0 : index
    %4 = vector.load %arg3[%c0_2, %c0_3] : memref<8x64xf32, #tpu.memory_space<vmem>>, vector<8x64xf32>
    %c0_4 = arith.constant 0 : index
    %c0_5 = arith.constant 0 : index
    %5 = vector.load %arg4[%c0_4, %c0_5] : memref<64x32xf32, #tpu.memory_space<vmem>>, vector<64x32xf32>
    %cst = arith.constant dense<0.000000e+00> : vector<8x32xf32>
    %6 = tpu.matmul %4, %5, %cst {dimension_numbers = #tpu.dot_dimension_numbers<[1], [0], [0], [1], [0, 0, 1, 1], [], []>} : vector<8x64xf32>, vector<64x32xf32>, vector<8x32xf32> -> vector<8x32xf32>
    %7 = arith.addf %3, %6 : vector<8x32xf32>
    %c0_6 = arith.constant 0 : index
    %c0_7 = arith.constant 0 : index
    %8 = vector.load %arg8[%c0_6, %c0_7] : memref<8x32xf32, #tpu.memory_space<vmem>>, vector<8x32xf32>
    tpu.vector_store %arg8[%c0_6, %c0_7], %7 {strides = array<i32>} : memref<8x32xf32, #tpu.memory_space<vmem>>, vector<8x32xf32>,
    %c0_i32_8 = arith.constant 0 : i32
    %9 = arith.cmpi eq, %arg2, %c0_i32_8 : i32
    %10 = arith.extui %9 : i1 to i32
    %c0_i32_9 = arith.constant 0 : i32
    %11 = arith.cmpi ne, %10, %c0_i32_9 : i32
    scf.if %11 {
      %c0_10 = arith.constant 0 : index
      %c0_11 = arith.constant 0 : index
      %12 = vector.load %arg8[%c0_10, %c0_11] : memref<8x32xf32, #tpu.memory_space<vmem>>, vector<8x32xf32>
      %c0_12 = arith.constant 0 : index
      %c0_13 = arith.constant 0 : index
      %13 = vector.load %arg5[%c0_12, %c0_13] : memref<1x32xf32, #tpu.memory_space<vmem>>, vector<1x32xf32>
      %14 = vector.broadcast %13 : vector<1x32xf32> to vector<8x32xf32>
      %15 = arith.addf %12, %14 : vector<8x32xf32>
      %c0_14 = arith.constant 0 : index
      %c0_15 = arith.constant 0 : index
      %16 = vector.load %arg6[%c0_14, %c0_15] : memref<8x32xf32, #tpu.memory_space<vmem>>, vector<8x32xf32>
      %17 = arith.addf %15, %16 : vector<8x32xf32>
      %c0_16 = arith.constant 0 : index
      %c0_17 = arith.constant 0 : index
      %18 = vector.load %arg7[%c0_16, %c0_17] : memref<8x32xf32, #tpu.memory_space<vmem>>, vector<8x32xf32>
      tpu.vector_store %arg7[%c0_16, %c0_17], %17 {strides = array<i32>} : memref<8x32xf32, #tpu.memory_space<vmem>>, vector<8x32xf32>,
    } else {
    }
    return
  }
  func.func @transform_0(%arg0: i32, %arg1: i32, %arg2: i32) -> (i32, i32) {
    %c0_i32 = arith.constant 0 : i32
    return %arg0, %arg2 : i32, i32
  }
  func.func @transform_1(%arg0: i32, %arg1: i32, %arg2: i32) -> (i32, i32) {
    %c0_i32 = arith.constant 0 : i32
    return %arg2, %arg1 : i32, i32
  }
  func.func @transform_2(%arg0: i32, %arg1: i32, %arg2: i32) -> (i32, i32) {
    %c0_i32 = arith.constant 0 : i32
    %c0_i32_0 = arith.constant 0 : i32
    return %c0_i32, %arg1 : i32, i32
  }
  func.func @transform_3(%arg0: i32, %arg1: i32, %arg2: i32) -> (i32, i32) {
    %c0_i32 = arith.constant 0 : i32
    return %arg0, %arg1 : i32, i32
  }
  func.func @transform_4(%arg0: i32, %arg1: i32, %arg2: i32) -> (i32, i32) {
    %c0_i32 = arith.constant 0 : i32
    return %arg0, %arg1 : i32, i32
  }
}

module attributes {stable_mosaic.version = 11 : i64} {
  func.func @_linear_res_kernel(%arg0: i32, %arg1: i32, %arg2: i32, %arg3: memref<8x32xf32, #tpu.memory_space<vmem>>, %arg4: memref<32x32xf32, #tpu.memory_space<vmem>>, %arg5: memref<1x32xf32, #tpu.memory_space<vmem>>, %arg6: memref<8x32xf32, #tpu.memory_space<vmem>>, %arg7: memref<8x32xf32, #tpu.memory_space<vmem>>, %arg8: memref<8x32xf32, #tpu.memory_space<vmem>>) attributes {dimension_semantics = [#tpu.dimension_semantics<parallel>, #tpu.dimension_semantics<parallel>, #tpu.dimension_semantics<arbitrary>], iteration_bounds = array<i64: 2, 1, 1>, scalar_prefetch = 0 : i64, scratch_operands = 1 : i64, tpu.core_type = #tpu.core_type<tc>, window_params = [{transform_indices = @transform_0, window_bounds = array<i64: 8, 32>}, {transform_indices = @transform_1, window_bounds = array<i64: 32, 32>}, {transform_indices = @transform_2, window_bounds = array<i64: 1, 32>}, {transform_indices = @transform_3, window_bounds = array<i64: 8, 32>}, {transform_indices = @transform_4, window_bounds = array<i64: 8, 32>}]} {
    %c0_i32 = arith.constant 0 : i32
    %0 = arith.cmpi eq, %arg2, %c0_i32 : i32
    %1 = arith.extui %0 : i1 to i32
    %c0_i32_0 = arith.constant 0 : i32
    %2 = arith.cmpi ne, %1, %c0_i32_0 : i32
    scf.if %2 {
      %cst_10 = arith.constant 0.000000e+00 : f32
      %12 = vector.broadcast %cst_10 : f32 to vector<8x32xf32>
      %c0_11 = arith.constant 0 : index
      %c0_12 = arith.constant 0 : index
      %13 = vector.load %arg8[%c0_11, %c0_12] : memref<8x32xf32, #tpu.memory_space<vmem>>, vector<8x32xf32>
      tpu.vector_store %arg8[%c0_11, %c0_12], %12 {strides = array<i32>} : memref<8x32xf32, #tpu.memory_space<vmem>>, vector<8x32xf32>,
    } else {
    }
    %c0 = arith.constant 0 : index
    %c0_1 = arith.constant 0 : index
    %3 = vector.load %arg8[%c0, %c0_1] : memref<8x32xf32, #tpu.memory_space<vmem>>, vector<8x32xf32>
    %c0_2 = arith.constant 0 : index
    %c0_3 = arith.constant 0 : index
    %4 = vector.load %arg3[%c0_2, %c0_3] : memref<8x32xf32, #tpu.memory_space<vmem>>, vector<8x32xf32>
    %c0_4 = arith.constant 0 : index
    %c0_5 = arith.constant 0 : index
    %5 = vector.load %arg4[%c0_4, %c0_5] : memref<32x32xf32, #tpu.memory_space<vmem>>, vector<32x32xf32>
    %cst = arith.constant dense<0.000000e+00> : vector<8x32xf32>
    %6 = tpu.matmul %4, %5, %cst {dimension_numbers = #tpu.dot_dimension_numbers<[1], [0], [0], [1], [0, 0, 1, 1], [], []>} : vector<8x32xf32>, vector<32x32xf32>, vector<8x32xf32> -> vector<8x32xf32>
    %7 = arith.addf %3, %6 : vector<8x32xf32>
    %c0_6 = arith.constant 0 : index
    %c0_7 = arith.constant 0 : index
    %8 = vector.load %arg8[%c0_6, %c0_7] : memref<8x32xf32, #tpu.memory_space<vmem>>, vector<8x32xf32>
    tpu.vector_store %arg8[%c0_6, %c0_7], %7 {strides = array<i32>} : memref<8x32xf32, #tpu.memory_space<vmem>>, vector<8x32xf32>,
    %c0_i32_8 = arith.constant 0 : i32
    %9 = arith.cmpi eq, %arg2, %c0_i32_8 : i32
    %10 = arith.extui %9 : i1 to i32
    %c0_i32_9 = arith.constant 0 : i32
    %11 = arith.cmpi ne, %10, %c0_i32_9 : i32
    scf.if %11 {
      %c0_10 = arith.constant 0 : index
      %c0_11 = arith.constant 0 : index
      %12 = vector.load %arg8[%c0_10, %c0_11] : memref<8x32xf32, #tpu.memory_space<vmem>>, vector<8x32xf32>
      %c0_12 = arith.constant 0 : index
      %c0_13 = arith.constant 0 : index
      %13 = vector.load %arg5[%c0_12, %c0_13] : memref<1x32xf32, #tpu.memory_space<vmem>>, vector<1x32xf32>
      %14 = vector.broadcast %13 : vector<1x32xf32> to vector<8x32xf32>
      %15 = arith.addf %12, %14 : vector<8x32xf32>
      %c0_14 = arith.constant 0 : index
      %c0_15 = arith.constant 0 : index
      %16 = vector.load %arg6[%c0_14, %c0_15] : memref<8x32xf32, #tpu.memory_space<vmem>>, vector<8x32xf32>
      %17 = arith.addf %15, %16 : vector<8x32xf32>
      %c0_16 = arith.constant 0 : index
      %c0_17 = arith.constant 0 : index
      %18 = vector.load %arg7[%c0_16, %c0_17] : memref<8x32xf32, #tpu.memory_space<vmem>>, vector<8x32xf32>
      tpu.vector_store %arg7[%c0_16, %c0_17], %17 {strides = array<i32>} : memref<8x32xf32, #tpu.memory_space<vmem>>, vector<8x32xf32>,
    } else {
    }
    return
  }
  func.func @transform_0(%arg0: i32, %arg1: i32, %arg2: i32) -> (i32, i32) {
    %c0_i32 = arith.constant 0 : i32
    return %arg0, %arg2 : i32, i32
  }
  func.func @transform_1(%arg0: i32, %arg1: i32, %arg2: i32) -> (i32, i32) {
    %c0_i32 = arith.constant 0 : i32
    return %arg2, %arg1 : i32, i32
  }
  func.func @transform_2(%arg0: i32, %arg1: i32, %arg2: i32) -> (i32, i32) {
    %c0_i32 = arith.constant 0 : i32
    %c0_i32_0 = arith.constant 0 : i32
    return %c0_i32, %arg1 : i32, i32
  }
  func.func @transform_3(%arg0: i32, %arg1: i32, %arg2: i32) -> (i32, i32) {
    %c0_i32 = arith.constant 0 : i32
    return %arg0, %arg1 : i32, i32
  }
  func.func @transform_4(%arg0: i32, %arg1: i32, %arg2: i32) -> (i32, i32) {
    %c0_i32 = arith.constant 0 : i32
    return %arg0, %arg1 : i32, i32
  }
}

module attributes {stable_mosaic.version = 11 : i64} {
  func.func @_ln_linear_kernel(%arg0: i32, %arg1: i32, %arg2: i32, %arg3: memref<8x32xf32, #tpu.memory_space<vmem>>, %arg4: memref<1x32xf32, #tpu.memory_space<vmem>>, %arg5: memref<1x32xf32, #tpu.memory_space<vmem>>, %arg6: memref<1x32x32xf32, #tpu.memory_space<vmem>>, %arg7: memref<1x1x32xf32, #tpu.memory_space<vmem>>, %arg8: memref<1x8x32xf32, #tpu.memory_space<vmem>>) attributes {dimension_semantics = [#tpu.dimension_semantics<parallel>, #tpu.dimension_semantics<parallel>, #tpu.dimension_semantics<parallel>], iteration_bounds = array<i64: 2, 3, 1>, scalar_prefetch = 0 : i64, scratch_operands = 0 : i64, tpu.core_type = #tpu.core_type<tc>, window_params = [{transform_indices = @transform_0, window_bounds = array<i64: 8, 32>}, {pipeline_mode = #tpu.pipeline_mode<synchronous>, transform_indices = @transform_1, window_bounds = array<i64: 1, 32>}, {pipeline_mode = #tpu.pipeline_mode<synchronous>, transform_indices = @transform_2, window_bounds = array<i64: 1, 32>}, {transform_indices = @transform_3, window_bounds = array<i64: 1, 32, 32>}, {transform_indices = @transform_4, window_bounds = array<i64: 1, 1, 32>}, {transform_indices = @transform_5, window_bounds = array<i64: 1, 8, 32>}]} {
    %c0 = arith.constant 0 : index
    %c0_0 = arith.constant 0 : index
    %0 = vector.load %arg3[%c0, %c0_0] : memref<8x32xf32, #tpu.memory_space<vmem>>, vector<8x32xf32>
    %cst = arith.constant dense<0.000000e+00> : vector<8xf32>
    %1 = vector.multi_reduction <add>, %0, %cst [1] : vector<8x32xf32> to vector<8xf32>
    %2 = vector.shape_cast %1 : vector<8xf32> to vector<8x1xf32>
    %cst_1 = arith.constant 3.200000e+01 : f32
    %3 = vector.broadcast %cst_1 : f32 to vector<8x1xf32>
    %4 = arith.divf %2, %3 : vector<8x1xf32>
    %5 = vector.broadcast %4 : vector<8x1xf32> to vector<8x32xf32>
    %6 = arith.subf %0, %5 : vector<8x32xf32>
    %7 = arith.mulf %6, %6 : vector<8x32xf32>
    %cst_2 = arith.constant dense<0.000000e+00> : vector<8xf32>
    %8 = vector.multi_reduction <add>, %7, %cst_2 [1] : vector<8x32xf32> to vector<8xf32>
    %9 = vector.shape_cast %8 : vector<8xf32> to vector<8x1xf32>
    %cst_3 = arith.constant 3.200000e+01 : f32
    %10 = vector.broadcast %cst_3 : f32 to vector<8x1xf32>
    %11 = arith.divf %9, %10 : vector<8x1xf32>
    %cst_4 = arith.constant 9.99999974E-6 : f32
    %12 = vector.broadcast %cst_4 : f32 to vector<8x1xf32>
    %13 = arith.addf %11, %12 : vector<8x1xf32>
    %14 = math.rsqrt %13 : vector<8x1xf32>
    %15 = vector.broadcast %14 : vector<8x1xf32> to vector<8x32xf32>
    %16 = arith.mulf %6, %15 : vector<8x32xf32>
    %c0_5 = arith.constant 0 : index
    %c0_6 = arith.constant 0 : index
    %17 = vector.load %arg4[%c0_5, %c0_6] : memref<1x32xf32, #tpu.memory_space<vmem>>, vector<1x32xf32>
    %18 = vector.broadcast %17 : vector<1x32xf32> to vector<8x32xf32>
    %19 = arith.mulf %16, %18 : vector<8x32xf32>
    %c0_7 = arith.constant 0 : index
    %c0_8 = arith.constant 0 : index
    %20 = vector.load %arg5[%c0_7, %c0_8] : memref<1x32xf32, #tpu.memory_space<vmem>>, vector<1x32xf32>
    %21 = vector.broadcast %20 : vector<1x32xf32> to vector<8x32xf32>
    %22 = arith.addf %19, %21 : vector<8x32xf32>
    %c0_9 = arith.constant 0 : index
    %c0_10 = arith.constant 0 : index
    %c0_11 = arith.constant 0 : index
    %23 = vector.load %arg6[%c0_9, %c0_10, %c0_11] : memref<1x32x32xf32, #tpu.memory_space<vmem>>, vector<1x32x32xf32>
    %24 = vector.shape_cast %23 : vector<1x32x32xf32> to vector<32x32xf32>
    %cst_12 = arith.constant dense<0.000000e+00> : vector<8x32xf32>
    %25 = tpu.matmul %22, %24, %cst_12 {dimension_numbers = #tpu.dot_dimension_numbers<[1], [0], [0], [1], [0, 0, 1, 1], [], []>} : vector<8x32xf32>, vector<32x32xf32>, vector<8x32xf32> -> vector<8x32xf32>
    %c0_13 = arith.constant 0 : index
    %c0_14 = arith.constant 0 : index
    %c0_15 = arith.constant 0 : index
    %26 = vector.load %arg7[%c0_13, %c0_14, %c0_15] : memref<1x1x32xf32, #tpu.memory_space<vmem>>, vector<1x1x32xf32>
    %27 = vector.shape_cast %26 : vector<1x1x32xf32> to vector<1x32xf32>
    %28 = vector.broadcast %27 : vector<1x32xf32> to vector<8x32xf32>
    %29 = arith.addf %25, %28 : vector<8x32xf32>
    %c0_16 = arith.constant 0 : index
    %c0_17 = arith.constant 0 : index
    %c0_18 = arith.constant 0 : index
    %30 = vector.load %arg8[%c0_16, %c0_17, %c0_18] : memref<1x8x32xf32, #tpu.memory_space<vmem>>, vector<1x8x32xf32>
    %31 = vector.shape_cast %30 : vector<1x8x32xf32> to vector<8x32xf32>
    %32 = vector.shape_cast %29 : vector<8x32xf32> to vector<1x8x32xf32>
    tpu.vector_store %arg8[%c0_16, %c0_17, %c0_18], %32 {strides = array<i32>} : memref<1x8x32xf32, #tpu.memory_space<vmem>>, vector<1x8x32xf32>,
    return
  }
  func.func @transform_0(%arg0: i32, %arg1: i32, %arg2: i32) -> (i32, i32) {
    %c0_i32 = arith.constant 0 : i32
    %c0_i32_0 = arith.constant 0 : i32
    return %arg0, %c0_i32 : i32, i32
  }
  func.func @transform_1(%arg0: i32, %arg1: i32, %arg2: i32) -> (i32, i32) {
    %c0_i32 = arith.constant 0 : i32
    %c0_i32_0 = arith.constant 0 : i32
    %c0_i32_1 = arith.constant 0 : i32
    return %c0_i32, %c0_i32_0 : i32, i32
  }
  func.func @transform_2(%arg0: i32, %arg1: i32, %arg2: i32) -> (i32, i32) {
    %c0_i32 = arith.constant 0 : i32
    %c0_i32_0 = arith.constant 0 : i32
    %c0_i32_1 = arith.constant 0 : i32
    return %c0_i32, %c0_i32_0 : i32, i32
  }
  func.func @transform_3(%arg0: i32, %arg1: i32, %arg2: i32) -> (i32, i32, i32) {
    %c0_i32 = arith.constant 0 : i32
    %c0_i32_0 = arith.constant 0 : i32
    return %arg1, %c0_i32, %arg2 : i32, i32, i32
  }
  func.func @transform_4(%arg0: i32, %arg1: i32, %arg2: i32) -> (i32, i32, i32) {
    %c0_i32 = arith.constant 0 : i32
    %c0_i32_0 = arith.constant 0 : i32
    return %arg1, %c0_i32, %arg2 : i32, i32, i32
  }
  func.func @transform_5(%arg0: i32, %arg1: i32, %arg2: i32) -> (i32, i32, i32) {
    %c0_i32 = arith.constant 0 : i32
    return %arg1, %arg0, %arg2 : i32, i32, i32
  }
}

module attributes {stable_mosaic.version = 11 : i64} {
  func.func @_ln_linear_kernel(%arg0: i32, %arg1: i32, %arg2: i32, %arg3: memref<8x32xf32, #tpu.memory_space<vmem>>, %arg4: memref<1x32xf32, #tpu.memory_space<vmem>>, %arg5: memref<1x32xf32, #tpu.memory_space<vmem>>, %arg6: memref<1x32x64xf32, #tpu.memory_space<vmem>>, %arg7: memref<1x1x64xf32, #tpu.memory_space<vmem>>, %arg8: memref<8x64xf32, #tpu.memory_space<vmem>>) attributes {dimension_semantics = [#tpu.dimension_semantics<parallel>, #tpu.dimension_semantics<parallel>, #tpu.dimension_semantics<parallel>], iteration_bounds = array<i64: 2, 1, 1>, scalar_prefetch = 0 : i64, scratch_operands = 0 : i64, tpu.core_type = #tpu.core_type<tc>, window_params = [{transform_indices = @transform_0, window_bounds = array<i64: 8, 32>}, {pipeline_mode = #tpu.pipeline_mode<synchronous>, transform_indices = @transform_1, window_bounds = array<i64: 1, 32>}, {pipeline_mode = #tpu.pipeline_mode<synchronous>, transform_indices = @transform_2, window_bounds = array<i64: 1, 32>}, {transform_indices = @transform_3, window_bounds = array<i64: 1, 32, 64>}, {transform_indices = @transform_4, window_bounds = array<i64: 1, 1, 64>}, {transform_indices = @transform_5, window_bounds = array<i64: 8, 64>}]} {
    %c0 = arith.constant 0 : index
    %c0_0 = arith.constant 0 : index
    %0 = vector.load %arg3[%c0, %c0_0] : memref<8x32xf32, #tpu.memory_space<vmem>>, vector<8x32xf32>
    %cst = arith.constant dense<0.000000e+00> : vector<8xf32>
    %1 = vector.multi_reduction <add>, %0, %cst [1] : vector<8x32xf32> to vector<8xf32>
    %2 = vector.shape_cast %1 : vector<8xf32> to vector<8x1xf32>
    %cst_1 = arith.constant 3.200000e+01 : f32
    %3 = vector.broadcast %cst_1 : f32 to vector<8x1xf32>
    %4 = arith.divf %2, %3 : vector<8x1xf32>
    %5 = vector.broadcast %4 : vector<8x1xf32> to vector<8x32xf32>
    %6 = arith.subf %0, %5 : vector<8x32xf32>
    %7 = arith.mulf %6, %6 : vector<8x32xf32>
    %cst_2 = arith.constant dense<0.000000e+00> : vector<8xf32>
    %8 = vector.multi_reduction <add>, %7, %cst_2 [1] : vector<8x32xf32> to vector<8xf32>
    %9 = vector.shape_cast %8 : vector<8xf32> to vector<8x1xf32>
    %cst_3 = arith.constant 3.200000e+01 : f32
    %10 = vector.broadcast %cst_3 : f32 to vector<8x1xf32>
    %11 = arith.divf %9, %10 : vector<8x1xf32>
    %cst_4 = arith.constant 9.99999974E-6 : f32
    %12 = vector.broadcast %cst_4 : f32 to vector<8x1xf32>
    %13 = arith.addf %11, %12 : vector<8x1xf32>
    %14 = math.rsqrt %13 : vector<8x1xf32>
    %15 = vector.broadcast %14 : vector<8x1xf32> to vector<8x32xf32>
    %16 = arith.mulf %6, %15 : vector<8x32xf32>
    %c0_5 = arith.constant 0 : index
    %c0_6 = arith.constant 0 : index
    %17 = vector.load %arg4[%c0_5, %c0_6] : memref<1x32xf32, #tpu.memory_space<vmem>>, vector<1x32xf32>
    %18 = vector.broadcast %17 : vector<1x32xf32> to vector<8x32xf32>
    %19 = arith.mulf %16, %18 : vector<8x32xf32>
    %c0_7 = arith.constant 0 : index
    %c0_8 = arith.constant 0 : index
    %20 = vector.load %arg5[%c0_7, %c0_8] : memref<1x32xf32, #tpu.memory_space<vmem>>, vector<1x32xf32>
    %21 = vector.broadcast %20 : vector<1x32xf32> to vector<8x32xf32>
    %22 = arith.addf %19, %21 : vector<8x32xf32>
    %c0_9 = arith.constant 0 : index
    %c0_10 = arith.constant 0 : index
    %c0_11 = arith.constant 0 : index
    %23 = vector.load %arg6[%c0_9, %c0_10, %c0_11] : memref<1x32x64xf32, #tpu.memory_space<vmem>>, vector<1x32x64xf32>
    %24 = vector.shape_cast %23 : vector<1x32x64xf32> to vector<32x64xf32>
    %cst_12 = arith.constant dense<0.000000e+00> : vector<8x64xf32>
    %25 = tpu.matmul %22, %24, %cst_12 {dimension_numbers = #tpu.dot_dimension_numbers<[1], [0], [0], [1], [0, 0, 1, 1], [], []>} : vector<8x32xf32>, vector<32x64xf32>, vector<8x64xf32> -> vector<8x64xf32>
    %c0_13 = arith.constant 0 : index
    %c0_14 = arith.constant 0 : index
    %c0_15 = arith.constant 0 : index
    %26 = vector.load %arg7[%c0_13, %c0_14, %c0_15] : memref<1x1x64xf32, #tpu.memory_space<vmem>>, vector<1x1x64xf32>
    %27 = vector.shape_cast %26 : vector<1x1x64xf32> to vector<1x64xf32>
    %28 = vector.broadcast %27 : vector<1x64xf32> to vector<8x64xf32>
    %29 = arith.addf %25, %28 : vector<8x64xf32>
    %cst_16 = arith.constant 0.000000e+00 : f32
    %30 = vector.broadcast %cst_16 : f32 to vector<8x64xf32>
    %31 = arith.maximumf %29, %30 : vector<8x64xf32>
    %c0_17 = arith.constant 0 : index
    %c0_18 = arith.constant 0 : index
    %32 = vector.load %arg8[%c0_17, %c0_18] : memref<8x64xf32, #tpu.memory_space<vmem>>, vector<8x64xf32>
    tpu.vector_store %arg8[%c0_17, %c0_18], %31 {strides = array<i32>} : memref<8x64xf32, #tpu.memory_space<vmem>>, vector<8x64xf32>,
    return
  }
  func.func @transform_0(%arg0: i32, %arg1: i32, %arg2: i32) -> (i32, i32) {
    %c0_i32 = arith.constant 0 : i32
    %c0_i32_0 = arith.constant 0 : i32
    return %arg0, %c0_i32 : i32, i32
  }
  func.func @transform_1(%arg0: i32, %arg1: i32, %arg2: i32) -> (i32, i32) {
    %c0_i32 = arith.constant 0 : i32
    %c0_i32_0 = arith.constant 0 : i32
    %c0_i32_1 = arith.constant 0 : i32
    return %c0_i32, %c0_i32_0 : i32, i32
  }
  func.func @transform_2(%arg0: i32, %arg1: i32, %arg2: i32) -> (i32, i32) {
    %c0_i32 = arith.constant 0 : i32
    %c0_i32_0 = arith.constant 0 : i32
    %c0_i32_1 = arith.constant 0 : i32
    return %c0_i32, %c0_i32_0 : i32, i32
  }
  func.func @transform_3(%arg0: i32, %arg1: i32, %arg2: i32) -> (i32, i32, i32) {
    %c0_i32 = arith.constant 0 : i32
    %c0_i32_0 = arith.constant 0 : i32
    return %arg1, %c0_i32, %arg2 : i32, i32, i32
  }
  func.func @transform_4(%arg0: i32, %arg1: i32, %arg2: i32) -> (i32, i32, i32) {
    %c0_i32 = arith.constant 0 : i32
    %c0_i32_0 = arith.constant 0 : i32
    return %arg1, %c0_i32, %arg2 : i32, i32, i32
  }
  func.func @transform_5(%arg0: i32, %arg1: i32, %arg2: i32) -> (i32, i32) {
    %c0_i32 = arith.constant 0 : i32
    return %arg0, %arg2 : i32, i32
  }
}

module attributes {stable_mosaic.version = 11 : i64} {
  func.func @_linear_res_kernel(%arg0: i32, %arg1: i32, %arg2: i32, %arg3: memref<8x64xf32, #tpu.memory_space<vmem>>, %arg4: memref<64x32xf32, #tpu.memory_space<vmem>>, %arg5: memref<1x32xf32, #tpu.memory_space<vmem>>, %arg6: memref<8x32xf32, #tpu.memory_space<vmem>>, %arg7: memref<8x32xf32, #tpu.memory_space<vmem>>, %arg8: memref<8x32xf32, #tpu.memory_space<vmem>>) attributes {dimension_semantics = [#tpu.dimension_semantics<parallel>, #tpu.dimension_semantics<parallel>, #tpu.dimension_semantics<arbitrary>], iteration_bounds = array<i64: 2, 1, 1>, scalar_prefetch = 0 : i64, scratch_operands = 1 : i64, tpu.core_type = #tpu.core_type<tc>, window_params = [{transform_indices = @transform_0, window_bounds = array<i64: 8, 64>}, {transform_indices = @transform_1, window_bounds = array<i64: 64, 32>}, {transform_indices = @transform_2, window_bounds = array<i64: 1, 32>}, {transform_indices = @transform_3, window_bounds = array<i64: 8, 32>}, {transform_indices = @transform_4, window_bounds = array<i64: 8, 32>}]} {
    %c0_i32 = arith.constant 0 : i32
    %0 = arith.cmpi eq, %arg2, %c0_i32 : i32
    %1 = arith.extui %0 : i1 to i32
    %c0_i32_0 = arith.constant 0 : i32
    %2 = arith.cmpi ne, %1, %c0_i32_0 : i32
    scf.if %2 {
      %cst_10 = arith.constant 0.000000e+00 : f32
      %12 = vector.broadcast %cst_10 : f32 to vector<8x32xf32>
      %c0_11 = arith.constant 0 : index
      %c0_12 = arith.constant 0 : index
      %13 = vector.load %arg8[%c0_11, %c0_12] : memref<8x32xf32, #tpu.memory_space<vmem>>, vector<8x32xf32>
      tpu.vector_store %arg8[%c0_11, %c0_12], %12 {strides = array<i32>} : memref<8x32xf32, #tpu.memory_space<vmem>>, vector<8x32xf32>,
    } else {
    }
    %c0 = arith.constant 0 : index
    %c0_1 = arith.constant 0 : index
    %3 = vector.load %arg8[%c0, %c0_1] : memref<8x32xf32, #tpu.memory_space<vmem>>, vector<8x32xf32>
    %c0_2 = arith.constant 0 : index
    %c0_3 = arith.constant 0 : index
    %4 = vector.load %arg3[%c0_2, %c0_3] : memref<8x64xf32, #tpu.memory_space<vmem>>, vector<8x64xf32>
    %c0_4 = arith.constant 0 : index
    %c0_5 = arith.constant 0 : index
    %5 = vector.load %arg4[%c0_4, %c0_5] : memref<64x32xf32, #tpu.memory_space<vmem>>, vector<64x32xf32>
    %cst = arith.constant dense<0.000000e+00> : vector<8x32xf32>
    %6 = tpu.matmul %4, %5, %cst {dimension_numbers = #tpu.dot_dimension_numbers<[1], [0], [0], [1], [0, 0, 1, 1], [], []>} : vector<8x64xf32>, vector<64x32xf32>, vector<8x32xf32> -> vector<8x32xf32>
    %7 = arith.addf %3, %6 : vector<8x32xf32>
    %c0_6 = arith.constant 0 : index
    %c0_7 = arith.constant 0 : index
    %8 = vector.load %arg8[%c0_6, %c0_7] : memref<8x32xf32, #tpu.memory_space<vmem>>, vector<8x32xf32>
    tpu.vector_store %arg8[%c0_6, %c0_7], %7 {strides = array<i32>} : memref<8x32xf32, #tpu.memory_space<vmem>>, vector<8x32xf32>,
    %c0_i32_8 = arith.constant 0 : i32
    %9 = arith.cmpi eq, %arg2, %c0_i32_8 : i32
    %10 = arith.extui %9 : i1 to i32
    %c0_i32_9 = arith.constant 0 : i32
    %11 = arith.cmpi ne, %10, %c0_i32_9 : i32
    scf.if %11 {
      %c0_10 = arith.constant 0 : index
      %c0_11 = arith.constant 0 : index
      %12 = vector.load %arg8[%c0_10, %c0_11] : memref<8x32xf32, #tpu.memory_space<vmem>>, vector<8x32xf32>
      %c0_12 = arith.constant 0 : index
      %c0_13 = arith.constant 0 : index
      %13 = vector.load %arg5[%c0_12, %c0_13] : memref<1x32xf32, #tpu.memory_space<vmem>>, vector<1x32xf32>
      %14 = vector.broadcast %13 : vector<1x32xf32> to vector<8x32xf32>
      %15 = arith.addf %12, %14 : vector<8x32xf32>
      %c0_14 = arith.constant 0 : index
      %c0_15 = arith.constant 0 : index
      %16 = vector.load %arg6[%c0_14, %c0_15] : memref<8x32xf32, #tpu.memory_space<vmem>>, vector<8x32xf32>
      %17 = arith.addf %15, %16 : vector<8x32xf32>
      %c0_16 = arith.constant 0 : index
      %c0_17 = arith.constant 0 : index
      %18 = vector.load %arg7[%c0_16, %c0_17] : memref<8x32xf32, #tpu.memory_space<vmem>>, vector<8x32xf32>
      tpu.vector_store %arg7[%c0_16, %c0_17], %17 {strides = array<i32>} : memref<8x32xf32, #tpu.memory_space<vmem>>, vector<8x32xf32>,
    } else {
    }
    return
  }
  func.func @transform_0(%arg0: i32, %arg1: i32, %arg2: i32) -> (i32, i32) {
    %c0_i32 = arith.constant 0 : i32
    return %arg0, %arg2 : i32, i32
  }
  func.func @transform_1(%arg0: i32, %arg1: i32, %arg2: i32) -> (i32, i32) {
    %c0_i32 = arith.constant 0 : i32
    return %arg2, %arg1 : i32, i32
  }
  func.func @transform_2(%arg0: i32, %arg1: i32, %arg2: i32) -> (i32, i32) {
    %c0_i32 = arith.constant 0 : i32
    %c0_i32_0 = arith.constant 0 : i32
    return %c0_i32, %arg1 : i32, i32
  }
  func.func @transform_3(%arg0: i32, %arg1: i32, %arg2: i32) -> (i32, i32) {
    %c0_i32 = arith.constant 0 : i32
    return %arg0, %arg1 : i32, i32
  }
  func.func @transform_4(%arg0: i32, %arg1: i32, %arg2: i32) -> (i32, i32) {
    %c0_i32 = arith.constant 0 : i32
    return %arg0, %arg1 : i32, i32
  }
}

</mosaic_0001>

<llo_original>
// kernel: transformer_forward.13
$region0: #{transformer_forward.13}
  #allocation0 [shape = 'u32[]', space=smem, size = 0x4, offset = 0x4, fixed_abs, tag = 'smem constant byte address 0x4 - core index']
  #allocation1 [shape = 'u32[72,128]{1,0:T(1,128)}', space=vmem, size = 0x9000, scoped, tag = 'internal scratch']
  %s0 = inlined_call_operand.vmem [shape: f32[16,32], index: 0, kind: input, shape index: {}]
  %s1 = inlined_call_operand.vmem [shape: f32[1,32], index: 1, kind: input, shape index: {}]
  %s2 = inlined_call_operand.vmem [shape: f32[1,32], index: 2, kind: input, shape index: {}]
  %s3 = inlined_call_operand.hbm [shape: f32[1,32,64], index: 3, kind: input, shape index: {}]
  %s4 = inlined_call_operand.hbm [shape: f32[1,1,64], index: 4, kind: input, shape index: {}]
  %s5 = inlined_call_operand.vmem [shape: f32[16,64], index: 5, kind: output, shape index: {}]
  %s6 = sld [smem:[#allocation0]]
  $region61: #{transformer_forward.13} parent=0
    _
  %s8 = ssub.s32 1, %s6
  %s9 = scalar_select 0, %s8, %s6
  $region1: #{transformer_forward.13} parent=0
    #allocation2 [shape = 'u8[16384]{0}', space=vmem, size = 0x4000, scoped, tag = 'input window, operand 3, single buffered']
    #allocation3 [shape = 's32[2]{0}', space=sflag, size = 0x8, scoped, tag = 'scoped memory for transformer_forward.13']
    #allocation4 [shape = 'u8[512]{0}', space=vmem, size = 0x400, scoped, tag = 'input window, operand 4, single buffered']
    #allocation5 [shape = 's32[1]{0}', space=sflag, size = 0x4, scoped, tag = 'scoped memory for transformer_forward.13']
    %10 = vsyncpa [#allocation3], 0
    %11 = vsyncpa [#allocation5], 0
    loop: start=0, step=1, limit=4
    $region2: #{transformer_forward.13} parent=1 // loop_pre_header
      _
    $region3: #{transformer_forward.13} parent=1 // loop_header
      %s13 = sphi 0, %s17
      %p14 = scmp.ge.s32.totalorder %s13, 4
      %s20 = sphi 0, %s39
      %s21 = sphi 0, %s35
      %s22 = sphi 0, %s31
      %s23 = sphi 0, %s20
      %s24 = sphi 0, %s21
      %s25 = sphi 0, %s22
      %s26 = sphi 0, %s23
      %s27 = sphi 0, %s24
      %s28 = sphi 0, %s25
      %s42 = sphi 0, %s44
      %s45 = sphi 0, %s42
      %s46 = sphi 0, %s45
      %s62 = sphi 0, %s46
      %s66 = sphi 0, %s66
      %s68 = sphi 0, %s66
      %s69 = sphi 0, %s68
      %s83 = sphi 0, %s69
      %s87 = sphi 0, %s87
      %s89 = sphi 0, %s87
      %s90 = sphi 0, %s89
      %s104 = sphi 0, %s90
      %s112 = sphi 0, %s114
      %s115 = sphi 0, %s112
      %s116 = sphi 0, %s115
      %s132 = sphi 0, %s116
      %s140 = sphi 0, %s142
      %s143 = sphi 0, %s140
      %s144 = sphi 0, %s143
      %s160 = sphi 0, %s144
      %s168 = sphi 0, %s170
      %s171 = sphi 0, %s168
      %s172 = sphi 0, %s171
      %s188 = sphi 0, %s172
    $region4: #{transformer_forward.13} parent=1 // loop_header_branch
      %16 = sbr.rel (%p14) target = $region8
    $region5: #{transformer_forward.13} parent=1 // loop_body
      %s18 = ssub.s32 %s13, 1
      %s19 = ssub.s32 %s13, 2
      %s29 = sadd.s32 1, %s22
      %p30 = scmp.ge.s32.totalorder %s29, 1
      %s31 = scalar_select %p30, 0, %s29
      %s32 = sadd.s32 1, %s21
      %s33 = scalar_select %p30, %s32, %s21
      %p34 = scmp.ge.s32.totalorder %s33, 1
      %s35 = scalar_select %p34, 0, %s33
      %s36 = sadd.s32 1, %s20
      %s37 = scalar_select %p34, %s36, %s20
      %p38 = scmp.ge.s32.totalorder %s37, 2
      %s39 = scalar_select %p38, 0, %s37
      %s40 = ssub.s32 %s20, %s39
      %p41 = scmp.eq.s32.totalorder %s40, 0
      %s43 = sadd.s32 %s42, 1
      %s44 = scalar_select %p41, %s42, %s43
      %p47 = pneg %p41
      %p48 = scmp.eq.s32.totalorder %s13, 1
      %p49 = por %p47, %p48
      %p50 = scmp.ne.s32.totalorder %s42, %s45
      %p51 = scmp.eq.s32.totalorder %s13, 0
      %p52 = por %p50, %p51
      %p53 = scmp.ne.s32.totalorder %s42, %s45
      %p54 = scmp.eq.s32.totalorder %s18, 1
      %p55 = por %p53, %p54
      %p56 = scmp.ne.s32.totalorder %s45, %s46
      %p57 = scmp.eq.s32.totalorder %s18, 0
      %p58 = por %p56, %p57
      %p59 = scmp.ne.s32.totalorder %s45, %s46
      %p60 = scmp.eq.s32.totalorder %s19, 1
      %p61 = por %p59, %p60
      %p63 = scmp.ne.s32.totalorder %s46, %s62
      %p64 = scmp.eq.s32.totalorder %s19, 0
      %p65 = por %p63, %p64
      %s67 = sadd.s32 %s66, 1
      %p70 = scmp.eq.s32.totalorder %s13, 1
      %p71 = scmp.ne.s32.totalorder %s66, %s68
      %p72 = scmp.eq.s32.totalorder %s13, 0
      %p73 = por %p71, %p72
      %p74 = scmp.ne.s32.totalorder %s66, %s68
      %p75 = scmp.eq.s32.totalorder %s18, 1
      %p76 = por %p74, %p75
      %p77 = scmp.ne.s32.totalorder %s68, %s69
      %p78 = scmp.eq.s32.totalorder %s18, 0
      %p79 = por %p77, %p78
      %p80 = scmp.ne.s32.totalorder %s68, %s69
      %p81 = scmp.eq.s32.totalorder %s19, 1
      %p82 = por %p80, %p81
      %p84 = scmp.ne.s32.totalorder %s69, %s83
      %p85 = scmp.eq.s32.totalorder %s19, 0
      %p86 = por %p84, %p85
      %s88 = sadd.s32 %s87, 1
      %p91 = scmp.eq.s32.totalorder %s13, 1
      %p92 = scmp.ne.s32.totalorder %s87, %s89
      %p93 = scmp.eq.s32.totalorder %s13, 0
      %p94 = por %p92, %p93
      %p95 = scmp.ne.s32.totalorder %s87, %s89
      %p96 = scmp.eq.s32.totalorder %s18, 1
      %p97 = por %p95, %p96
      %p98 = scmp.ne.s32.totalorder %s89, %s90
      %p99 = scmp.eq.s32.totalorder %s18, 0
      %p100 = por %p98, %p99
      %p101 = scmp.ne.s32.totalorder %s89, %s90
      %p102 = scmp.eq.s32.totalorder %s19, 1
      %p103 = por %p101, %p102
      %p105 = scmp.ne.s32.totalorder %s90, %s104
      %p106 = scmp.eq.s32.totalorder %s19, 0
      %p107 = por %p105, %p106
      %s108 = ssub.s32 %s21, %s35
      %s109 = ssub.s32 %s22, %s31
      %s110 = sor.u32 %s108, %s109
      %p111 = scmp.eq.s32.totalorder %s110, 0
      %s113 = sadd.s32 %s112, 1
      %s114 = scalar_select %p111, %s112, %s113
      %p117 = pneg %p111
      %p118 = scmp.eq.s32.totalorder %s13, 1
      %p119 = por %p117, %p118
      %p120 = scmp.ne.s32.totalorder %s112, %s115
      %p121 = scmp.eq.s32.totalorder %s13, 0
      %p122 = por %p120, %p121
      %p123 = scmp.ne.s32.totalorder %s112, %s115
      %p124 = scmp.eq.s32.totalorder %s18, 1
      %p125 = por %p123, %p124
      %p126 = scmp.ne.s32.totalorder %s115, %s116
      %p127 = scmp.eq.s32.totalorder %s18, 0
      %p128 = por %p126, %p127
      %p129 = scmp.ne.s32.totalorder %s115, %s116
      %p130 = scmp.eq.s32.totalorder %s19, 1
      %p131 = por %p129, %p130
      %p133 = scmp.ne.s32.totalorder %s116, %s132
      %p134 = scmp.eq.s32.totalorder %s19, 0
      %p135 = por %p133, %p134
      %s136 = ssub.s32 %s21, %s35
      %s137 = ssub.s32 %s22, %s31
      %s138 = sor.u32 %s136, %s137
      %p139 = scmp.eq.s32.totalorder %s138, 0
      %s141 = sadd.s32 %s140, 1
      %s142 = scalar_select %p139, %s140, %s141
      %p145 = pneg %p139
      %p146 = scmp.eq.s32.totalorder %s13, 1
      %p147 = por %p145, %p146
      %p148 = scmp.ne.s32.totalorder %s140, %s143
      %p149 = scmp.eq.s32.totalorder %s13, 0
      %p150 = por %p148, %p149
      %p151 = scmp.ne.s32.totalorder %s140, %s143
      %p152 = scmp.eq.s32.totalorder %s18, 1
      %p153 = por %p151, %p152
      %p154 = scmp.ne.s32.totalorder %s143, %s144
      %p155 = scmp.eq.s32.totalorder %s18, 0
      %p156 = por %p154, %p155
      %p157 = scmp.ne.s32.totalorder %s143, %s144
      %p158 = scmp.eq.s32.totalorder %s19, 1
      %p159 = por %p157, %p158
      %p161 = scmp.ne.s32.totalorder %s144, %s160
      %p162 = scmp.eq.s32.totalorder %s19, 0
      %p163 = por %p161, %p162
      %s164 = ssub.s32 %s20, %s39
      %s165 = ssub.s32 %s22, %s31
      %s166 = sor.u32 %s164, %s165
      %p167 = scmp.eq.s32.totalorder %s166, 0
      %s169 = sadd.s32 %s168, 1
      %s170 = scalar_select %p167, %s168, %s169
      %p173 = pneg %p167
      %p174 = scmp.eq.s32.totalorder %s13, 1
      %p175 = por %p173, %p174
      %p176 = scmp.ne.s32.totalorder %s168, %s171
      %p177 = scmp.eq.s32.totalorder %s13, 0
      %p178 = por %p176, %p177
      %p179 = scmp.ne.s32.totalorder %s168, %s171
      %p180 = scmp.eq.s32.totalorder %s18, 1
      %p181 = por %p179, %p180
      %p182 = scmp.ne.s32.totalorder %s171, %s172
      %p183 = scmp.eq.s32.totalorder %s18, 0
      %p184 = por %p182, %p183
      %p185 = scmp.ne.s32.totalorder %s171, %s172
      %p186 = scmp.eq.s32.totalorder %s19, 1
      %p187 = por %p185, %p186
      %p189 = scmp.ne.s32.totalorder %s172, %s188
      %p190 = scmp.eq.s32.totalorder %s19, 0
      %p191 = por %p189, %p190
      %p192 = scmp.le.s32.totalorder 1, %s13
      %p193 = scmp.lt.s32.totalorder %s13, 3
      %p194 = pnand %p192, %p193
      %p195 = pneg %p194
      // Predicated region
      $region9: #{transformer_forward.13} parent=5 // pred_check
        _
      $region10: #{transformer_forward.13} parent=5 // pred_check_branch
        %197 = sbr.rel (%p194) target = $region12
      $region11: #{transformer_forward.13} parent=5 // pred_region
        %s198 = ssub.s32 %s13, 1
        // Predicated region
        $region13: #{transformer_forward.13} parent=11 // pred_check
          %p199 = pneg %p79
        $region14: #{transformer_forward.13} parent=11 // pred_check_branch
          %201 = sbr.rel (%p199) target = $region16
        $region15: #{transformer_forward.13} parent=11 // pred_region
          _
        $region16: #{transformer_forward.13} parent=11 // pred_fallthru
          _
        // Predicated region
        $region17: #{transformer_forward.13} parent=11 // pred_check
          %p202 = pneg %p100
        $region18: #{transformer_forward.13} parent=11 // pred_check_branch
          %204 = sbr.rel (%p202) target = $region20
        $region19: #{transformer_forward.13} parent=11 // pred_region
          _
        $region20: #{transformer_forward.13} parent=11 // pred_fallthru
          _
        // Predicated region
        $region21: #{transformer_forward.13} parent=11 // pred_check
          %p205 = pneg %p128
        $region22: #{transformer_forward.13} parent=11 // pred_check_branch
          %207 = sbr.rel (%p205) target = $region24
        $region23: #{transformer_forward.13} parent=11 // pred_region
          %209 = vsyncadd [#allocation3], 0
          %s210 = smul.addr %s24, 4
          %s211 = sadd.s32 %s25, %s210
          %s212 = smul.addr %s211, 8
          %s213 = scalar_lea.hbm %s3, %s212
          %s214 = sshll.u32 %s213, 4
          %s215 = int_to_ptr.hbm [resolvable:$true] %s214
          %s216 = sshll.u32 [#allocation2], 4
          %s217 = int_to_ptr.vmem [resolvable:$true] %s216
          %222 = dma.hbm_to_vmem [thread:$0]  %s215, 512, %s217, [#allocation3], 128, 128, 8
        $region24: #{transformer_forward.13} parent=11 // pred_fallthru
          _
        // Predicated region
        $region25: #{transformer_forward.13} parent=11 // pred_check
          %p223 = pneg %p156
        $region26: #{transformer_forward.13} parent=11 // pred_check_branch
          %225 = sbr.rel (%p223) target = $region28
        $region27: #{transformer_forward.13} parent=11 // pred_region
          %227 = vsyncadd [#allocation5], 0
          %s228 = sadd.s32 %s25, %s24
          %s229 = scalar_lea.hbm %s4, %s228
          %s231 = sshll.u32 %s229, 4
          %s232 = int_to_ptr.hbm [resolvable:$true] %s231
          %s233 = sshll.u32 [#allocation4], 4
          %s234 = int_to_ptr.vmem [resolvable:$true] %s233
          %236 = dma.hbm_to_vmem [thread:$0]  %s232, 16, %s234, [#allocation5]
        $region28: #{transformer_forward.13} parent=11 // pred_fallthru
          _
      $region12: #{transformer_forward.13} parent=5 // pred_fallthru
        _
      %p237 = scmp.lt.s32.totalorder %s13, 2
      // Predicated region
      $region29: #{transformer_forward.13} parent=5 // pred_check
        %p238 = pneg %p237
      $region30: #{transformer_forward.13} parent=5 // pred_check_branch
        %240 = sbr.rel (%p238) target = $region32
      $region31: #{transformer_forward.13} parent=5 // pred_region
        // Predicated region
        $region33: #{transformer_forward.13} parent=31 // pred_check
          %p241 = pneg %p52
        $region34: #{transformer_forward.13} parent=31 // pred_check_branch
          %243 = sbr.rel (%p241) target = $region36
        $region35: #{transformer_forward.13} parent=31 // pred_region
          %p244 = scmp.lt.s32.totalorder %s20, 1
          %s245 = scalar_select %p244, %s20, 1
          %s246 = smul.addr %s245, 8
          %s247 = scalar_lea.vmem %s0, %s246
        $region36: #{transformer_forward.13} parent=31 // pred_fallthru
          _
      $region32: #{transformer_forward.13} parent=5 // pred_fallthru
        _
      %p248 = scmp.le.s32.totalorder 1, %s13
      %p249 = scmp.lt.s32.totalorder %s13, 3
      %p250 = pnand %p248, %p249
      %p251 = pneg %p250
      // Predicated region
      $region37: #{transformer_forward.13} parent=5 // pred_check
        _
      $region38: #{transformer_forward.13} parent=5 // pred_check_branch
        %253 = sbr.rel (%p250) target = $region40
      $region39: #{transformer_forward.13} parent=5 // pred_region
        %s254 = ssub.s32 %s13, 1
        // Predicated region
        $region41: #{transformer_forward.13} parent=39 // pred_check
          %p255 = pneg %p128
        $region42: #{transformer_forward.13} parent=39 // pred_check_branch
          %257 = sbr.rel (%p255) target = $region44
        $region43: #{transformer_forward.13} parent=39 // pred_region
          %259 = dma.done [#allocation3], 512
        $region44: #{transformer_forward.13} parent=39 // pred_fallthru
          _
        // Predicated region
        $region45: #{transformer_forward.13} parent=39 // pred_check
          %p260 = pneg %p156
        $region46: #{transformer_forward.13} parent=39 // pred_check_branch
          %262 = sbr.rel (%p260) target = $region48
        $region47: #{transformer_forward.13} parent=39 // pred_region
          %264 = dma.done [#allocation5], 16
        $region48: #{transformer_forward.13} parent=39 // pred_fallthru
          _
        %p265 = scmp.lt.s32.totalorder %s23, 1
        %s266 = scalar_select %p265, %s23, 1
        %s267 = smul.addr %s266, 8
        %s268 = scalar_lea.vmem %s0, %s267
        %p269 = pneg %p58
        %p270 = pneg %p55
        %p271 = pneg %p79
        %p272 = pneg %p76
        %p273 = pneg %p100
        %p274 = pneg %p97
        %p275 = pneg %p128
        %p276 = pneg %p125
        %p277 = pneg %p156
        %p278 = pneg %p153
        %p279 = pneg %p184
        %p280 = pneg %p181
        %p281 = scmp.lt.s32.totalorder %s23, 1
        %s282 = scalar_select %p281, %s23, 1
        %p283 = scmp.lt.s32.totalorder %s25, 0
        %s284 = scalar_select %p283, %s25, 0
        %s285 = sadd.s32 %s284, %s282
        %s286 = smul.addr %s285, 8
        %s287 = scalar_lea.vmem %s5, %s286
        %p288 = scmp.lt.s32.totalorder %s23, 1
        %s289 = scalar_select %p288, %s23, 1
        %s290 = smul.addr %s289, 8
        %s291 = scalar_lea.vmem %s0, %s290
        %p292 = scmp.lt.s32.totalorder %s23, 1
        %s293 = scalar_select %p292, %s23, 1
        %p294 = scmp.lt.s32.totalorder %s25, 0
        %s295 = scalar_select %p294, %s25, 0
        %s296 = sadd.s32 %s295, %s293
        %s297 = smul.addr %s296, 8
        %s298 = scalar_lea.vmem %s5, %s297
        %v299 = vld [vmem:[%s291] sm:$0xff]
        %vm300 = vcmask 261120
        %v301 = vsel %vm300, %v299, 0.0
        %302 = vadd.xlane.f32.xlu0 %v301
        %v303 = vpop.xlane.xlu0 %302
        %v304 = vrcp.pop 32.0
        %v305 = vmul.f32 32.0, %v304
        %v306 = vsub.f32 1.0, %v305
        %v307 = vmul.f32 %v304, %v306
        %v308 = vadd.f32 %v304, %v307
        %vm309 = vweird.f32 %v304
        %v310 = vsel %vm309, %v304, %v308
        %v311 = vmul.f32 %v303, %v310
        %v312 = vsub.f32 %v299, %v311
        %v313 = vmul.f32 %v312, %v312
        %v314 = vsel %vm300, %v313, 0.0
        %315 = vadd.xlane.f32.xlu0 %v314
        %v316 = vpop.xlane.xlu0 %315
        %v317 = vmul.f32 %v316, %v310
        %v318 = vadd.f32 %v317, 1e-05
        %v319 = vrsqrt.pop %v318
        %v320 = vmul.f32 %v319, %v318
        %v321 = vmul.f32 %v320, %v319
        %v322 = vmul.f32 0.5, %v321
        %v323 = vsub.f32 1.5, %v322
        %v324 = vmul.f32 %v319, %v323
        %vm325 = vweird.f32 %v318
        %vm326 = vweird.f32 %v319
        %vm327 = vmor %vm325, %vm326
        %v328 = vsel %vm327, %v319, %v324
        %v329 = vmul.f32 %v312, %v328
        %v330 = vld [vmem:[%s1] sm:$0x1]
        %v332 = vperm.slane %v330, 0
        %v334 = vmul.f32 %v329, %v332
        %v335 = vld [vmem:[%s2] sm:$0x1]
        %v337 = vperm.slane %v335, 0
        %v339 = vadd.f32 %v334, %v337
        %v340 = vld [vmem:[#allocation2] sm:$0xff]
        %v341 = vld [vmem:[#allocation2 + $0x8] sm:$0xff]
        %v342 = vld [vmem:[#allocation2 + $0x10] sm:$0xff]
        %v343 = vld [vmem:[#allocation2 + $0x18] sm:$0xff]
        %v344 = vld [vmem:[#allocation4] sm:$0x1]
        %v346 = vperm.slane %v344, 0
        %v349 = vsel %vm300, %v339, 0
        %351 = vmatpush.msra.mxu0 0.0
        %352 = vmatpush.msra.mxu0 0.0
        %353 = vmatpush.msra.mxu0 0.0
        %354 = vmatpush.msra.mxu0 0.0
        %355 = vmatpush.msra.mxu0 0.0
        %356 = vmatpush.msra.mxu0 0.0
        %357 = vmatpush.msra.mxu0 0.0
        %358 = vmatpush.msra.mxu0 0.0
        %359 = vmatpush.msra.mxu0 0.0
        %360 = vmatpush.msra.mxu0 0.0
        %361 = vmatpush.msra.mxu0 0.0
        %362 = vmatpush.msra.mxu0 0.0
        %363 = vmatpush.msra.mxu0 %v343
        %364 = vmatpush.msra.mxu0 %v342
        %365 = vmatpush.msra.mxu0 %v341
        %366 = vmatpush.msra.mxu0 %v340
        %367 = vmatmul.f32.gmra.mxu0 %v349
        %v368 = vpop.f32.mrf.mxu0
        %v369 = vadd.f32 %v346, %v368
        %370 = vdwg.mxu0
        %v371 = vmax.f32 %v369, 0.0
        %vm372 = vcmask 523264
        %373 = vst.msk [vmem:[%s298] sm:$0xff] %vm372, %v371
        %p374 = scmp.lt.s32.totalorder %s23, 1
        %s375 = scalar_select %p374, %s23, 1
        %p376 = scmp.lt.s32.totalorder %s25, 0
        %s377 = scalar_select %p376, %s25, 0
        %s378 = sadd.s32 %s377, %s375
        %s379 = smul.addr %s378, 8
        %s380 = scalar_lea.vmem %s5, %s379
        // Predicated region
        $region49: #{transformer_forward.13} parent=39 // pred_check
          %p381 = pneg %p181
        $region50: #{transformer_forward.13} parent=39 // pred_check_branch
          %383 = sbr.rel (%p381) target = $region52
        $region51: #{transformer_forward.13} parent=39 // pred_region
          _
        $region52: #{transformer_forward.13} parent=39 // pred_fallthru
          _
      $region40: #{transformer_forward.13} parent=5 // pred_fallthru
        _
      %p384 = scmp.le.s32.totalorder 2, %s13
      // Predicated region
      $region53: #{transformer_forward.13} parent=5 // pred_check
        %p385 = pneg %p384
      $region54: #{transformer_forward.13} parent=5 // pred_check_branch
        %387 = sbr.rel (%p385) target = $region56
      $region55: #{transformer_forward.13} parent=5 // pred_region
        %s388 = ssub.s32 %s13, 2
        // Predicated region
        $region57: #{transformer_forward.13} parent=55 // pred_check
          %p389 = pneg %p187
        $region58: #{transformer_forward.13} parent=55 // pred_check_branch
          %391 = sbr.rel (%p389) target = $region60
        $region59: #{transformer_forward.13} parent=55 // pred_region
          %p392 = scmp.lt.s32.totalorder %s26, 1
          %s393 = scalar_select %p392, %s26, 1
          %p394 = scmp.lt.s32.totalorder %s28, 0
          %s395 = scalar_select %p394, %s28, 0
          %s396 = sadd.s32 %s395, %s393
          %s397 = smul.addr %s396, 8
          %s398 = scalar_lea.vmem %s5, %s397
        $region60: #{transformer_forward.13} parent=55 // pred_fallthru
          _
      $region56: #{transformer_forward.13} parent=5 // pred_fallthru
        _
    $region6: #{transformer_forward.13} parent=1 // loop_footer
      %s17 = sadd.s32 1, %s13
    $region7: #{transformer_forward.13} parent=1 // loop_footer_branch
      %12 = sbr.rel target = $region3
    $region8: #{transformer_forward.13} parent=1 // loop_exit
      _
    %399 = vsyncpa [#allocation3], 1
    %s400 = scalar_lea.sflag [#allocation3], 1
    %401 = vsyncpa %s400, 1
    %402 = vsyncpa [#allocation5], 1

// kernel: transformer_forward.10
$region0: #{transformer_forward.10}
  #allocation0 [shape = 'u32[]', space=smem, size = 0x4, offset = 0x4, fixed_abs, tag = 'smem constant byte address 0x4 - core index']
  #allocation1 [shape = 'u32[72,128]{1,0:T(1,128)}', space=vmem, size = 0x9000, scoped, tag = 'internal scratch']
  %s0 = inlined_call_operand.hbm [shape: f32[16,32], index: 0, kind: input, shape index: {}]
  %s1 = inlined_call_operand.hbm [shape: f32[1,32], index: 1, kind: input, shape index: {}]
  %s2 = inlined_call_operand.hbm [shape: f32[1,32], index: 2, kind: input, shape index: {}]
  %s3 = inlined_call_operand.hbm [shape: f32[3,32,32], index: 3, kind: input, shape index: {}]
  %s4 = inlined_call_operand.hbm [shape: f32[3,1,32], index: 4, kind: input, shape index: {}]
  %s5 = inlined_call_operand.vmem [shape: f32[3,16,32], index: 5, kind: output, shape index: {}]
  %s6 = sld [smem:[#allocation0]]
  $region73: #{transformer_forward.10} parent=0
    _
  %s8 = ssub.s32 1, %s6
  %s9 = scalar_select 0, %s8, %s6
  $region1: #{transformer_forward.10} parent=0
    #allocation2 [shape = 'u8[8192]{0}', space=vmem, size = 0x2000, scoped, tag = 'input window, operand 0']
    #allocation3 [shape = 's32[2]{0}', space=sflag, size = 0x8, scoped, tag = 'scoped memory for transformer_forward.10']
    #allocation4 [shape = 'u8[512]{0}', space=vmem, size = 0x400, scoped, tag = 'input window, operand 1, single buffered']
    #allocation5 [shape = 's32[1]{0}', space=sflag, size = 0x4, scoped, tag = 'scoped memory for transformer_forward.10']
    #allocation6 [shape = 'u8[512]{0}', space=vmem, size = 0x400, scoped, tag = 'input window, operand 2, single buffered']
    #allocation7 [shape = 'u8[32768]{0}', space=vmem, size = 0x8000, scoped, tag = 'input window, operand 3']
    #allocation8 [shape = 's32[2]{0}', space=sflag, size = 0x8, scoped, tag = 'scoped memory for transformer_forward.10']
    #allocation9 [shape = 'u8[1024]{0}', space=vmem, size = 0x400, scoped, tag = 'input window, operand 4']
    %10 = vsyncpa [#allocation3], 0
    %s11 = scalar_lea.sflag [#allocation3], 1
    %12 = vsyncpa %s11, 0
    %13 = vsyncpa [#allocation5], 0
    %14 = vsyncpa [#allocation8], 0
    %s15 = scalar_lea.sflag [#allocation8], 1
    %16 = vsyncpa %s15, 0
    loop: start=0, step=1, limit=8
    $region2: #{transformer_forward.10} parent=1 // loop_pre_header
      _
    $region3: #{transformer_forward.10} parent=1 // loop_header
      %s18 = sphi 0, %s22
      %p19 = scmp.ge.s32.totalorder %s18, 8
      %s25 = sphi 0, %s44
      %s26 = sphi 0, %s40
      %s27 = sphi 0, %s36
      %s28 = sphi 0, %s25
      %s29 = sphi 0, %s26
      %s30 = sphi 0, %s27
      %s31 = sphi 0, %s28
      %s32 = sphi 0, %s29
      %s33 = sphi 0, %s30
      %s47 = sphi 0, %s49
      %s50 = sphi 0, %s47
      %s51 = sphi 0, %s50
      %s67 = sphi 0, %s51
      %s71 = sphi 0, %s71
      %s73 = sphi 0, %s71
      %s74 = sphi 0, %s73
      %s88 = sphi 0, %s74
      %s92 = sphi 0, %s92
      %s94 = sphi 0, %s92
      %s95 = sphi 0, %s94
      %s109 = sphi 0, %s95
      %s117 = sphi 0, %s119
      %s120 = sphi 0, %s117
      %s121 = sphi 0, %s120
      %s137 = sphi 0, %s121
      %s145 = sphi 0, %s147
      %s148 = sphi 0, %s145
      %s149 = sphi 0, %s148
      %s165 = sphi 0, %s149
      %s175 = sphi 0, %s177
      %s178 = sphi 0, %s175
      %s179 = sphi 0, %s178
      %s195 = sphi 0, %s179
    $region4: #{transformer_forward.10} parent=1 // loop_header_branch
      %21 = sbr.rel (%p19) target = $region8
    $region5: #{transformer_forward.10} parent=1 // loop_body
      %s23 = ssub.s32 %s18, 1
      %s24 = ssub.s32 %s18, 2
      %s34 = sadd.s32 1, %s27
      %p35 = scmp.ge.s32.totalorder %s34, 1
      %s36 = scalar_select %p35, 0, %s34
      %s37 = sadd.s32 1, %s26
      %s38 = scalar_select %p35, %s37, %s26
      %p39 = scmp.ge.s32.totalorder %s38, 3
      %s40 = scalar_select %p39, 0, %s38
      %s41 = sadd.s32 1, %s25
      %s42 = scalar_select %p39, %s41, %s25
      %p43 = scmp.ge.s32.totalorder %s42, 2
      %s44 = scalar_select %p43, 0, %s42
      %s45 = ssub.s32 %s25, %s44
      %p46 = scmp.eq.s32.totalorder %s45, 0
      %s48 = sadd.s32 %s47, 1
      %s49 = scalar_select %p46, %s47, %s48
      %p52 = pneg %p46
      %p53 = scmp.eq.s32.totalorder %s18, 5
      %p54 = por %p52, %p53
      %p55 = scmp.ne.s32.totalorder %s47, %s50
      %p56 = scmp.eq.s32.totalorder %s18, 0
      %p57 = por %p55, %p56
      %p58 = scmp.ne.s32.totalorder %s47, %s50
      %p59 = scmp.eq.s32.totalorder %s23, 5
      %p60 = por %p58, %p59
      %p61 = scmp.ne.s32.totalorder %s50, %s51
      %p62 = scmp.eq.s32.totalorder %s23, 0
      %p63 = por %p61, %p62
      %p64 = scmp.ne.s32.totalorder %s50, %s51
      %p65 = scmp.eq.s32.totalorder %s24, 5
      %p66 = por %p64, %p65
      %p68 = scmp.ne.s32.totalorder %s51, %s67
      %p69 = scmp.eq.s32.totalorder %s24, 0
      %p70 = por %p68, %p69
      %s72 = sadd.s32 %s71, 1
      %p75 = scmp.eq.s32.totalorder %s18, 5
      %p76 = scmp.ne.s32.totalorder %s71, %s73
      %p77 = scmp.eq.s32.totalorder %s18, 0
      %p78 = por %p76, %p77
      %p79 = scmp.ne.s32.totalorder %s71, %s73
      %p80 = scmp.eq.s32.totalorder %s23, 5
      %p81 = por %p79, %p80
      %p82 = scmp.ne.s32.totalorder %s73, %s74
      %p83 = scmp.eq.s32.totalorder %s23, 0
      %p84 = por %p82, %p83
      %p85 = scmp.ne.s32.totalorder %s73, %s74
      %p86 = scmp.eq.s32.totalorder %s24, 5
      %p87 = por %p85, %p86
      %p89 = scmp.ne.s32.totalorder %s74, %s88
      %p90 = scmp.eq.s32.totalorder %s24, 0
      %p91 = por %p89, %p90
      %s93 = sadd.s32 %s92, 1
      %p96 = scmp.eq.s32.totalorder %s18, 5
      %p97 = scmp.ne.s32.totalorder %s92, %s94
      %p98 = scmp.eq.s32.totalorder %s18, 0
      %p99 = por %p97, %p98
      %p100 = scmp.ne.s32.totalorder %s92, %s94
      %p101 = scmp.eq.s32.totalorder %s23, 5
      %p102 = por %p100, %p101
      %p103 = scmp.ne.s32.totalorder %s94, %s95
      %p104 = scmp.eq.s32.totalorder %s23, 0
      %p105 = por %p103, %p104
      %p106 = scmp.ne.s32.totalorder %s94, %s95
      %p107 = scmp.eq.s32.totalorder %s24, 5
      %p108 = por %p106, %p107
      %p110 = scmp.ne.s32.totalorder %s95, %s109
      %p111 = scmp.eq.s32.totalorder %s24, 0
      %p112 = por %p110, %p111
      %s113 = ssub.s32 %s26, %s40
      %s114 = ssub.s32 %s27, %s36
      %s115 = sor.u32 %s113, %s114
      %p116 = scmp.eq.s32.totalorder %s115, 0
      %s118 = sadd.s32 %s117, 1
      %s119 = scalar_select %p116, %s117, %s118
      %p122 = pneg %p116
      %p123 = scmp.eq.s32.totalorder %s18, 5
      %p124 = por %p122, %p123
      %p125 = scmp.ne.s32.totalorder %s117, %s120
      %p126 = scmp.eq.s32.totalorder %s18, 0
      %p127 = por %p125, %p126
      %p128 = scmp.ne.s32.totalorder %s117, %s120
      %p129 = scmp.eq.s32.totalorder %s23, 5
      %p130 = por %p128, %p129
      %p131 = scmp.ne.s32.totalorder %s120, %s121
      %p132 = scmp.eq.s32.totalorder %s23, 0
      %p133 = por %p131, %p132
      %p134 = scmp.ne.s32.totalorder %s120, %s121
      %p135 = scmp.eq.s32.totalorder %s24, 5
      %p136 = por %p134, %p135
      %p138 = scmp.ne.s32.totalorder %s121, %s137
      %p139 = scmp.eq.s32.totalorder %s24, 0
      %p140 = por %p138, %p139
      %s141 = ssub.s32 %s26, %s40
      %s142 = ssub.s32 %s27, %s36
      %s143 = sor.u32 %s141, %s142
      %p144 = scmp.eq.s32.totalorder %s143, 0
      %s146 = sadd.s32 %s145, 1
      %s147 = scalar_select %p144, %s145, %s146
      %p150 = pneg %p144
      %p151 = scmp.eq.s32.totalorder %s18, 5
      %p152 = por %p150, %p151
      %p153 = scmp.ne.s32.totalorder %s145, %s148
      %p154 = scmp.eq.s32.totalorder %s18, 0
      %p155 = por %p153, %p154
      %p156 = scmp.ne.s32.totalorder %s145, %s148
      %p157 = scmp.eq.s32.totalorder %s23, 5
      %p158 = por %p156, %p157
      %p159 = scmp.ne.s32.totalorder %s148, %s149
      %p160 = scmp.eq.s32.totalorder %s23, 0
      %p161 = por %p159, %p160
      %p162 = scmp.ne.s32.totalorder %s148, %s149
      %p163 = scmp.eq.s32.totalorder %s24, 5
      %p164 = por %p162, %p163
      %p166 = scmp.ne.s32.totalorder %s149, %s165
      %p167 = scmp.eq.s32.totalorder %s24, 0
      %p168 = por %p166, %p167
      %s169 = ssub.s32 %s26, %s40
      %s170 = ssub.s32 %s25, %s44
      %s171 = sor.u32 %s169, %s170
      %s172 = ssub.s32 %s27, %s36
      %s173 = sor.u32 %s171, %s172
      %p174 = scmp.eq.s32.totalorder %s173, 0
      %s176 = sadd.s32 %s175, 1
      %s177 = scalar_select %p174, %s175, %s176
      %p180 = pneg %p174
      %p181 = scmp.eq.s32.totalorder %s18, 5
      %p182 = por %p180, %p181
      %p183 = scmp.ne.s32.totalorder %s175, %s178
      %p184 = scmp.eq.s32.totalorder %s18, 0
      %p185 = por %p183, %p184
      %p186 = scmp.ne.s32.totalorder %s175, %s178
      %p187 = scmp.eq.s32.totalorder %s23, 5
      %p188 = por %p186, %p187
      %p189 = scmp.ne.s32.totalorder %s178, %s179
      %p190 = scmp.eq.s32.totalorder %s23, 0
      %p191 = por %p189, %p190
      %p192 = scmp.ne.s32.totalorder %s178, %s179
      %p193 = scmp.eq.s32.totalorder %s24, 5
      %p194 = por %p192, %p193
      %p196 = scmp.ne.s32.totalorder %s179, %s195
      %p197 = scmp.eq.s32.totalorder %s24, 0
      %p198 = por %p196, %p197
      %p199 = scmp.le.s32.totalorder 1, %s18
      %p200 = scmp.lt.s32.totalorder %s18, 7
      %p201 = pnand %p199, %p200
      %p202 = pneg %p201
      // Predicated region
      $region9: #{transformer_forward.10} parent=5 // pred_check
        _
      $region10: #{transformer_forward.10} parent=5 // pred_check_branch
        %204 = sbr.rel (%p201) target = $region12
      $region11: #{transformer_forward.10} parent=5 // pred_region
        %s205 = ssub.s32 %s18, 1
        // Predicated region
        $region13: #{transformer_forward.10} parent=11 // pred_check
          %p206 = pneg %p84
        $region14: #{transformer_forward.10} parent=11 // pred_check_branch
          %208 = sbr.rel (%p206) target = $region16
        $region15: #{transformer_forward.10} parent=11 // pred_region
          %210 = vsyncadd [#allocation5], 0
          %s212 = sshll.u32 %s1, 4
          %s213 = int_to_ptr.hbm [resolvable:$true] %s212
          %s214 = sshll.u32 [#allocation4], 4
          %s215 = int_to_ptr.vmem [resolvable:$true] %s214
          %217 = dma.hbm_to_vmem [thread:$0]  %s213, 16, %s215, [#allocation5]
        $region16: #{transformer_forward.10} parent=11 // pred_fallthru
          _
        // Predicated region
        $region17: #{transformer_forward.10} parent=11 // pred_check
          %p218 = pneg %p105
        $region18: #{transformer_forward.10} parent=11 // pred_check_branch
          %220 = sbr.rel (%p218) target = $region20
        $region19: #{transformer_forward.10} parent=11 // pred_region
          %222 = vsyncadd [#allocation5], 0
          %s224 = sshll.u32 %s2, 4
          %s225 = int_to_ptr.hbm [resolvable:$true] %s224
          %s226 = sshll.u32 [#allocation6], 4
          %s227 = int_to_ptr.vmem [resolvable:$true] %s226
          %229 = dma.hbm_to_vmem [thread:$0]  %s225, 16, %s227, [#allocation5]
        $region20: #{transformer_forward.10} parent=11 // pred_fallthru
          _
      $region12: #{transformer_forward.10} parent=5 // pred_fallthru
        _
      %p230 = scmp.lt.s32.totalorder %s18, 6
      // Predicated region
      $region21: #{transformer_forward.10} parent=5 // pred_check
        %p231 = pneg %p230
      $region22: #{transformer_forward.10} parent=5 // pred_check_branch
        %233 = sbr.rel (%p231) target = $region24
      $region23: #{transformer_forward.10} parent=5 // pred_region
        // Predicated region
        $region25: #{transformer_forward.10} parent=23 // pred_check
          %p234 = pneg %p57
        $region26: #{transformer_forward.10} parent=23 // pred_check_branch
          %236 = sbr.rel (%p234) target = $region28
        $region27: #{transformer_forward.10} parent=23 // pred_region
          %s237 = sand.u32 %s47, 1
          %s238 = scalar_lea.sflag [#allocation3], %s237
          %s239 = sand.u32 %s47, 1
          %s240 = smul.addr %s239, 8
          %s241 = scalar_lea.vmem [#allocation2], %s240
          %243 = vsyncadd %s238, 0
          %s244 = smul.addr %s25, 8
          %s245 = scalar_lea.hbm %s0, %s244
          %s247 = sshll.u32 %s245, 4
          %s248 = int_to_ptr.hbm [resolvable:$true] %s247
          %s249 = sshll.u32 %s241, 4
          %s250 = int_to_ptr.vmem [resolvable:$true] %s249
          %252 = dma.hbm_to_vmem [thread:$0]  %s248, 128, %s250, %s238
        $region28: #{transformer_forward.10} parent=23 // pred_fallthru
          _
        // Predicated region
        $region29: #{transformer_forward.10} parent=23 // pred_check
          %p253 = pneg %p127
        $region30: #{transformer_forward.10} parent=23 // pred_check_branch
          %255 = sbr.rel (%p253) target = $region32
        $region31: #{transformer_forward.10} parent=23 // pred_region
          %s256 = sand.u32 %s18, 1
          %s257 = scalar_lea.sflag [#allocation8], %s256
          %s258 = sand.u32 %s117, 1
          %s259 = smul.addr %s258, 32
          %s260 = scalar_lea.vmem [#allocation7], %s259
          %262 = vsyncadd %s257, 0
          %s263 = smul.addr %s26, 4
          %s264 = sadd.s32 %s27, %s263
          %s265 = smul.addr %s264, 8
          %s266 = scalar_lea.hbm %s3, %s265
          %s267 = sshll.u32 %s266, 4
          %s268 = int_to_ptr.hbm [resolvable:$true] %s267
          %s269 = sshll.u32 %s260, 4
          %s270 = int_to_ptr.vmem [resolvable:$true] %s269
          %275 = dma.hbm_to_vmem [thread:$0]  %s268, 512, %s270, %s257, 128, 128, 8
        $region32: #{transformer_forward.10} parent=23 // pred_fallthru
          _
        // Predicated region
        $region33: #{transformer_forward.10} parent=23 // pred_check
          %p276 = pneg %p155
        $region34: #{transformer_forward.10} parent=23 // pred_check_branch
          %278 = sbr.rel (%p276) target = $region36
        $region35: #{transformer_forward.10} parent=23 // pred_region
          %s279 = sand.u32 %s18, 1
          %s280 = scalar_lea.sflag [#allocation8], %s279
          %s281 = sand.u32 %s145, 1
          %s282 = scalar_lea.vmem [#allocation9], %s281
          %284 = vsyncadd %s280, 0
          %s285 = sadd.s32 %s27, %s26
          %s286 = scalar_lea.hbm %s4, %s285
          %s288 = sshll.u32 %s286, 4
          %s289 = int_to_ptr.hbm [resolvable:$true] %s288
          %s290 = sshll.u32 %s282, 4
          %s291 = int_to_ptr.vmem [resolvable:$true] %s290
          %293 = dma.hbm_to_vmem [thread:$0]  %s289, 16, %s291, %s280
        $region36: #{transformer_forward.10} parent=23 // pred_fallthru
          _
      $region24: #{transformer_forward.10} parent=5 // pred_fallthru
        _
      %p294 = scmp.le.s32.totalorder 1, %s18
      %p295 = scmp.lt.s32.totalorder %s18, 7
      %p296 = pnand %p294, %p295
      %p297 = pneg %p296
      // Predicated region
      $region37: #{transformer_forward.10} parent=5 // pred_check
        _
      $region38: #{transformer_forward.10} parent=5 // pred_check_branch
        %299 = sbr.rel (%p296) target = $region40
      $region39: #{transformer_forward.10} parent=5 // pred_region
        %s300 = ssub.s32 %s18, 1
        %s301 = sand.u32 %s50, 1
        %s302 = scalar_lea.sflag [#allocation3], %s301
        %s303 = sand.u32 %s50, 1
        %s304 = smul.addr %s303, 8
        %s305 = scalar_lea.vmem [#allocation2], %s304
        // Predicated region
        $region41: #{transformer_forward.10} parent=39 // pred_check
          %p306 = pneg %p63
        $region42: #{transformer_forward.10} parent=39 // pred_check_branch
          %308 = sbr.rel (%p306) target = $region44
        $region43: #{transformer_forward.10} parent=39 // pred_region
          %310 = dma.done %s302, 128
        $region44: #{transformer_forward.10} parent=39 // pred_fallthru
          _
        // Predicated region
        $region45: #{transformer_forward.10} parent=39 // pred_check
          %p311 = pneg %p84
        $region46: #{transformer_forward.10} parent=39 // pred_check_branch
          %313 = sbr.rel (%p311) target = $region48
        $region47: #{transformer_forward.10} parent=39 // pred_region
          %315 = dma.done [#allocation5], 16
        $region48: #{transformer_forward.10} parent=39 // pred_fallthru
          _
        // Predicated region
        $region49: #{transformer_forward.10} parent=39 // pred_check
          %p316 = pneg %p105
        $region50: #{transformer_forward.10} parent=39 // pred_check_branch
          %318 = sbr.rel (%p316) target = $region52
        $region51: #{transformer_forward.10} parent=39 // pred_region
          %320 = dma.done [#allocation5], 16
        $region52: #{transformer_forward.10} parent=39 // pred_fallthru
          _
        %s321 = sand.u32 %s23, 1
        %s322 = scalar_lea.sflag [#allocation8], %s321
        %s323 = sand.u32 %s120, 1
        %s324 = smul.addr %s323, 32
        %s325 = scalar_lea.vmem [#allocation7], %s324
        // Predicated region
        $region53: #{transformer_forward.10} parent=39 // pred_check
          %p326 = pneg %p133
        $region54: #{transformer_forward.10} parent=39 // pred_check_branch
          %328 = sbr.rel (%p326) target = $region56
        $region55: #{transformer_forward.10} parent=39 // pred_region
          %330 = dma.done %s322, 512
        $region56: #{transformer_forward.10} parent=39 // pred_fallthru
          _
        %s331 = sand.u32 %s23, 1
        %s332 = scalar_lea.sflag [#allocation8], %s331
        %s333 = sand.u32 %s148, 1
        %s334 = scalar_lea.vmem [#allocation9], %s333
        // Predicated region
        $region57: #{transformer_forward.10} parent=39 // pred_check
          %p335 = pneg %p161
        $region58: #{transformer_forward.10} parent=39 // pred_check_branch
          %337 = sbr.rel (%p335) target = $region60
        $region59: #{transformer_forward.10} parent=39 // pred_region
          %339 = dma.done %s332, 16
        $region60: #{transformer_forward.10} parent=39 // pred_fallthru
          _
        %s340 = sand.u32 %s50, 1
        %s341 = scalar_lea.sflag [#allocation3], %s340
        %s342 = sand.u32 %s50, 1
        %s343 = smul.addr %s342, 8
        %s344 = scalar_lea.vmem [#allocation2], %s343
        %p345 = pneg %p63
        %p346 = pneg %p60
        %p347 = pneg %p84
        %p348 = pneg %p81
        %p349 = pneg %p105
        %p350 = pneg %p102
        %s351 = sand.u32 %s23, 1
        %s352 = scalar_lea.sflag [#allocation8], %s351
        %s353 = sand.u32 %s120, 1
        %s354 = smul.addr %s353, 32
        %s355 = scalar_lea.vmem [#allocation7], %s354
        %p356 = pneg %p133
        %p357 = pneg %p130
        %s358 = sand.u32 %s23, 1
        %s359 = scalar_lea.sflag [#allocation8], %s358
        %s360 = sand.u32 %s148, 1
        %s361 = scalar_lea.vmem [#allocation9], %s360
        %p362 = pneg %p161
        %p363 = pneg %p158
        %p364 = pneg %p191
        %p365 = pneg %p188
        %p366 = scmp.lt.s32.totalorder %s29, 2
        %s367 = scalar_select %p366, %s29, 2
        %p368 = scmp.lt.s32.totalorder %s28, 1
        %s369 = scalar_select %p368, %s28, 1
        %p370 = scmp.lt.s32.totalorder %s30, 0
        %s371 = scalar_select %p370, %s30, 0
        %s372 = sadd.s32 %s371, %s369
        %s373 = smul.addr %s367, 2
        %s374 = sadd.s32 %s372, %s373
        %s375 = smul.addr %s374, 8
        %s376 = scalar_lea.vmem %s5, %s375
        %p377 = scmp.lt.s32.totalorder %s29, 2
        %s378 = scalar_select %p377, %s29, 2
        %p379 = scmp.lt.s32.totalorder %s28, 1
        %s380 = scalar_select %p379, %s28, 1
        %p381 = scmp.lt.s32.totalorder %s30, 0
        %s382 = scalar_select %p381, %s30, 0
        %s383 = sadd.s32 %s382, %s380
        %s384 = smul.addr %s378, 2
        %s385 = sadd.s32 %s383, %s384
        %s386 = smul.addr %s385, 8
        %s387 = scalar_lea.vmem %s5, %s386
        %v388 = vld [vmem:[%s305] sm:$0xff]
        %vm389 = vcmask 261120
        %v390 = vsel %vm389, %v388, 0.0
        %391 = vadd.xlane.f32.xlu0 %v390
        %v392 = vpop.xlane.xlu0 %391
        %v393 = vrcp.pop 32.0
        %v394 = vmul.f32 32.0, %v393
        %v395 = vsub.f32 1.0, %v394
        %v396 = vmul.f32 %v393, %v395
        %v397 = vadd.f32 %v393, %v396
        %vm398 = vweird.f32 %v393
        %v399 = vsel %vm398, %v393, %v397
        %v400 = vmul.f32 %v392, %v399
        %v401 = vsub.f32 %v388, %v400
        %v402 = vmul.f32 %v401, %v401
        %v403 = vsel %vm389, %v402, 0.0
        %404 = vadd.xlane.f32.xlu0 %v403
        %v405 = vpop.xlane.xlu0 %404
        %v406 = vmul.f32 %v405, %v399
        %v407 = vadd.f32 %v406, 1e-05
        %v408 = vrsqrt.pop %v407
        %v409 = vmul.f32 %v408, %v407
        %v410 = vmul.f32 %v409, %v408
        %v411 = vmul.f32 0.5, %v410
        %v412 = vsub.f32 1.5, %v411
        %v413 = vmul.f32 %v408, %v412
        %vm414 = vweird.f32 %v407
        %vm415 = vweird.f32 %v408
        %vm416 = vmor %vm414, %vm415
        %v417 = vsel %vm416, %v408, %v413
        %v418 = vmul.f32 %v401, %v417
        %v419 = vld [vmem:[#allocation4] sm:$0x1]
        %v421 = vperm.slane %v419, 0
        %v423 = vmul.f32 %v418, %v421
        %v424 = vld [vmem:[#allocation6] sm:$0x1]
        %v426 = vperm.slane %v424, 0
        %v428 = vadd.f32 %v423, %v426
        %v429 = vld [vmem:[%s325] sm:$0xff]
        %v430 = vld [vmem:[%s325 + $0x8] sm:$0xff]
        %v431 = vld [vmem:[%s325 + $0x10] sm:$0xff]
        %v432 = vld [vmem:[%s325 + $0x18] sm:$0xff]
        %v433 = vld [vmem:[%s334] sm:$0x1]
        %v435 = vperm.slane %v433, 0
        %v438 = vsel %vm389, %v428, 0
        %440 = vmatpush.msra.mxu0 0.0
        %441 = vmatpush.msra.mxu0 0.0
        %442 = vmatpush.msra.mxu0 0.0
        %443 = vmatpush.msra.mxu0 0.0
        %444 = vmatpush.msra.mxu0 0.0
        %445 = vmatpush.msra.mxu0 0.0
        %446 = vmatpush.msra.mxu0 0.0
        %447 = vmatpush.msra.mxu0 0.0
        %448 = vmatpush.msra.mxu0 0.0
        %449 = vmatpush.msra.mxu0 0.0
        %450 = vmatpush.msra.mxu0 0.0
        %451 = vmatpush.msra.mxu0 0.0
        %452 = vmatpush.msra.mxu0 %v432
        %453 = vmatpush.msra.mxu0 %v431
        %454 = vmatpush.msra.mxu0 %v430
        %455 = vmatpush.msra.mxu0 %v429
        %456 = vmatmul.f32.gmra.mxu0 %v438
        %v457 = vpop.f32.mrf.mxu0
        %v458 = vadd.f32 %v435, %v457
        %459 = vdwg.mxu0
        %460 = vst.msk [vmem:[%s387] sm:$0xff] %vm389, %v458
        %p461 = scmp.lt.s32.totalorder %s29, 2
        %s462 = scalar_select %p461, %s29, 2
        %p463 = scmp.lt.s32.totalorder %s28, 1
        %s464 = scalar_select %p463, %s28, 1
        %p465 = scmp.lt.s32.totalorder %s30, 0
        %s466 = scalar_select %p465, %s30, 0
        %s467 = sadd.s32 %s466, %s464
        %s468 = smul.addr %s462, 2
        %s469 = sadd.s32 %s467, %s468
        %s470 = smul.addr %s469, 8
        %s471 = scalar_lea.vmem %s5, %s470
        // Predicated region
        $region61: #{transformer_forward.10} parent=39 // pred_check
          %p472 = pneg %p188
        $region62: #{transformer_forward.10} parent=39 // pred_check_branch
          %474 = sbr.rel (%p472) target = $region64
        $region63: #{transformer_forward.10} parent=39 // pred_region
          _
        $region64: #{transformer_forward.10} parent=39 // pred_fallthru
          _
      $region40: #{transformer_forward.10} parent=5 // pred_fallthru
        _
      %p475 = scmp.le.s32.totalorder 2, %s18
      // Predicated region
      $region65: #{transformer_forward.10} parent=5 // pred_check
        %p476 = pneg %p475
      $region66: #{transformer_forward.10} parent=5 // pred_check_branch
        %478 = sbr.rel (%p476) target = $region68
      $region67: #{transformer_forward.10} parent=5 // pred_region
        %s479 = ssub.s32 %s18, 2
        // Predicated region
        $region69: #{transformer_forward.10} parent=67 // pred_check
          %p480 = pneg %p194
        $region70: #{transformer_forward.10} parent=67 // pred_check_branch
          %482 = sbr.rel (%p480) target = $region72
        $region71: #{transformer_forward.10} parent=67 // pred_region
          %p483 = scmp.lt.s32.totalorder %s32, 2
          %s484 = scalar_select %p483, %s32, 2
          %p485 = scmp.lt.s32.totalorder %s31, 1
          %s486 = scalar_select %p485, %s31, 1
          %p487 = scmp.lt.s32.totalorder %s33, 0
          %s488 = scalar_select %p487, %s33, 0
          %s489 = sadd.s32 %s488, %s486
          %s490 = smul.addr %s484, 2
          %s491 = sadd.s32 %s489, %s490
          %s492 = smul.addr %s491, 8
          %s493 = scalar_lea.vmem %s5, %s492
        $region72: #{transformer_forward.10} parent=67 // pred_fallthru
          _
      $region68: #{transformer_forward.10} parent=5 // pred_fallthru
        _
    $region6: #{transformer_forward.10} parent=1 // loop_footer
      %s22 = sadd.s32 1, %s18
    $region7: #{transformer_forward.10} parent=1 // loop_footer_branch
      %17 = sbr.rel target = $region3
    $region8: #{transformer_forward.10} parent=1 // loop_exit
      _
    %494 = vsyncpa [#allocation3], 1
    %s495 = scalar_lea.sflag [#allocation3], 1
    %496 = vsyncpa %s495, 1
    %497 = vsyncpa [#allocation5], 1
    %498 = vsyncpa [#allocation8], 1
    %s499 = scalar_lea.sflag [#allocation8], 1
    %500 = vsyncpa %s499, 1

// kernel: transformer_forward.12
$region0: #{transformer_forward.12}
  #allocation0 [shape = 'u32[]', space=smem, size = 0x4, offset = 0x4, fixed_abs, tag = 'smem constant byte address 0x4 - core index']
  #allocation1 [shape = 'u32[72,128]{1,0:T(1,128)}', space=vmem, size = 0x9000, scoped, tag = 'internal scratch']
  #allocation2 [shape = 'f32[8,32]{1,0:T(8,128)}', space=vmem, size = 0x1000, scoped, tag = 'scratch operand']
  %s0 = inlined_call_operand.vmem [shape: f32[16,32], index: 0, kind: input, shape index: {}]
  %s1 = inlined_call_operand.hbm [shape: f32[32,32], index: 1, kind: input, shape index: {}]
  %s2 = inlined_call_operand.vmem [shape: f32[1,32], index: 2, kind: input, shape index: {}]
  %s3 = inlined_call_operand.hbm [shape: f32[16,32], index: 3, kind: input, shape index: {}]
  %s4 = inlined_call_operand.vmem [shape: f32[16,32], index: 4, kind: output, shape index: {}]
  %s5 = sld [smem:[#allocation0]]
  $region65: #{transformer_forward.12} parent=0
    _
  %s7 = ssub.s32 1, %s5
  %s8 = scalar_select 0, %s7, %s5
  $region1: #{transformer_forward.12} parent=0
    #allocation3 [shape = 'u8[16384]{0}', space=vmem, size = 0x4000, scoped, tag = 'input window, operand 1, single buffered']
    #allocation4 [shape = 's32[2]{0}', space=sflag, size = 0x8, scoped, tag = 'scoped memory for transformer_forward.12']
    #allocation5 [shape = 'u8[8192]{0}', space=vmem, size = 0x2000, scoped, tag = 'input window, operand 3']
    #allocation6 [shape = 's32[2]{0}', space=sflag, size = 0x8, scoped, tag = 'scoped memory for transformer_forward.12']
    %9 = vsyncpa [#allocation4], 0
    %10 = vsyncpa [#allocation6], 0
    %s11 = scalar_lea.sflag [#allocation6], 1
    %12 = vsyncpa %s11, 0
    loop: start=0, step=1, limit=4
    $region2: #{transformer_forward.12} parent=1 // loop_pre_header
      _
    $region3: #{transformer_forward.12} parent=1 // loop_header
      %s14 = sphi 0, %s18
      %p15 = scmp.ge.s32.totalorder %s14, 4
      %s21 = sphi 0, %s40
      %s22 = sphi 0, %s36
      %s23 = sphi 0, %s32
      %s24 = sphi 0, %s21
      %s25 = sphi 0, %s22
      %s26 = sphi 0, %s23
      %s27 = sphi 0, %s24
      %s28 = sphi 0, %s25
      %s29 = sphi 0, %s26
      %s45 = sphi 0, %s47
      %s48 = sphi 0, %s45
      %s49 = sphi 0, %s48
      %s65 = sphi 0, %s49
      %s73 = sphi 0, %s75
      %s76 = sphi 0, %s73
      %s77 = sphi 0, %s76
      %s93 = sphi 0, %s77
      %s99 = sphi 0, %s101
      %s102 = sphi 0, %s99
      %s103 = sphi 0, %s102
      %s119 = sphi 0, %s103
      %s127 = sphi 0, %s129
      %s130 = sphi 0, %s127
      %s131 = sphi 0, %s130
      %s147 = sphi 0, %s131
      %s155 = sphi 0, %s157
      %s158 = sphi 0, %s155
      %s159 = sphi 0, %s158
      %s175 = sphi 0, %s159
    $region4: #{transformer_forward.12} parent=1 // loop_header_branch
      %17 = sbr.rel (%p15) target = $region8
    $region5: #{transformer_forward.12} parent=1 // loop_body
      %s19 = ssub.s32 %s14, 1
      %s20 = ssub.s32 %s14, 2
      %s30 = sadd.s32 1, %s23
      %p31 = scmp.ge.s32.totalorder %s30, 1
      %s32 = scalar_select %p31, 0, %s30
      %s33 = sadd.s32 1, %s22
      %s34 = scalar_select %p31, %s33, %s22
      %p35 = scmp.ge.s32.totalorder %s34, 1
      %s36 = scalar_select %p35, 0, %s34
      %s37 = sadd.s32 1, %s21
      %s38 = scalar_select %p35, %s37, %s21
      %p39 = scmp.ge.s32.totalorder %s38, 2
      %s40 = scalar_select %p39, 0, %s38
      %s41 = ssub.s32 %s21, %s40
      %s42 = ssub.s32 %s23, %s32
      %s43 = sor.u32 %s41, %s42
      %p44 = scmp.eq.s32.totalorder %s43, 0
      %s46 = sadd.s32 %s45, 1
      %s47 = scalar_select %p44, %s45, %s46
      %p50 = pneg %p44
      %p51 = scmp.eq.s32.totalorder %s14, 1
      %p52 = por %p50, %p51
      %p53 = scmp.ne.s32.totalorder %s45, %s48
      %p54 = scmp.eq.s32.totalorder %s14, 0
      %p55 = por %p53, %p54
      %p56 = scmp.ne.s32.totalorder %s45, %s48
      %p57 = scmp.eq.s32.totalorder %s19, 1
      %p58 = por %p56, %p57
      %p59 = scmp.ne.s32.totalorder %s48, %s49
      %p60 = scmp.eq.s32.totalorder %s19, 0
      %p61 = por %p59, %p60
      %p62 = scmp.ne.s32.totalorder %s48, %s49
      %p63 = scmp.eq.s32.totalorder %s20, 1
      %p64 = por %p62, %p63
      %p66 = scmp.ne.s32.totalorder %s49, %s65
      %p67 = scmp.eq.s32.totalorder %s20, 0
      %p68 = por %p66, %p67
      %s69 = ssub.s32 %s23, %s32
      %s70 = ssub.s32 %s22, %s36
      %s71 = sor.u32 %s69, %s70
      %p72 = scmp.eq.s32.totalorder %s71, 0
      %s74 = sadd.s32 %s73, 1
      %s75 = scalar_select %p72, %s73, %s74
      %p78 = pneg %p72
      %p79 = scmp.eq.s32.totalorder %s14, 1
      %p80 = por %p78, %p79
      %p81 = scmp.ne.s32.totalorder %s73, %s76
      %p82 = scmp.eq.s32.totalorder %s14, 0
      %p83 = por %p81, %p82
      %p84 = scmp.ne.s32.totalorder %s73, %s76
      %p85 = scmp.eq.s32.totalorder %s19, 1
      %p86 = por %p84, %p85
      %p87 = scmp.ne.s32.totalorder %s76, %s77
      %p88 = scmp.eq.s32.totalorder %s19, 0
      %p89 = por %p87, %p88
      %p90 = scmp.ne.s32.totalorder %s76, %s77
      %p91 = scmp.eq.s32.totalorder %s20, 1
      %p92 = por %p90, %p91
      %p94 = scmp.ne.s32.totalorder %s77, %s93
      %p95 = scmp.eq.s32.totalorder %s20, 0
      %p96 = por %p94, %p95
      %s97 = ssub.s32 %s22, %s36
      %p98 = scmp.eq.s32.totalorder %s97, 0
      %s100 = sadd.s32 %s99, 1
      %s101 = scalar_select %p98, %s99, %s100
      %p104 = pneg %p98
      %p105 = scmp.eq.s32.totalorder %s14, 1
      %p106 = por %p104, %p105
      %p107 = scmp.ne.s32.totalorder %s99, %s102
      %p108 = scmp.eq.s32.totalorder %s14, 0
      %p109 = por %p107, %p108
      %p110 = scmp.ne.s32.totalorder %s99, %s102
      %p111 = scmp.eq.s32.totalorder %s19, 1
      %p112 = por %p110, %p111
      %p113 = scmp.ne.s32.totalorder %s102, %s103
      %p114 = scmp.eq.s32.totalorder %s19, 0
      %p115 = por %p113, %p114
      %p116 = scmp.ne.s32.totalorder %s102, %s103
      %p117 = scmp.eq.s32.totalorder %s20, 1
      %p118 = por %p116, %p117
      %p120 = scmp.ne.s32.totalorder %s103, %s119
      %p121 = scmp.eq.s32.totalorder %s20, 0
      %p122 = por %p120, %p121
      %s123 = ssub.s32 %s21, %s40
      %s124 = ssub.s32 %s22, %s36
      %s125 = sor.u32 %s123, %s124
      %p126 = scmp.eq.s32.totalorder %s125, 0
      %s128 = sadd.s32 %s127, 1
      %s129 = scalar_select %p126, %s127, %s128
      %p132 = pneg %p126
      %p133 = scmp.eq.s32.totalorder %s14, 1
      %p134 = por %p132, %p133
      %p135 = scmp.ne.s32.totalorder %s127, %s130
      %p136 = scmp.eq.s32.totalorder %s14, 0
      %p137 = por %p135, %p136
      %p138 = scmp.ne.s32.totalorder %s127, %s130
      %p139 = scmp.eq.s32.totalorder %s19, 1
      %p140 = por %p138, %p139
      %p141 = scmp.ne.s32.totalorder %s130, %s131
      %p142 = scmp.eq.s32.totalorder %s19, 0
      %p143 = por %p141, %p142
      %p144 = scmp.ne.s32.totalorder %s130, %s131
      %p145 = scmp.eq.s32.totalorder %s20, 1
      %p146 = por %p144, %p145
      %p148 = scmp.ne.s32.totalorder %s131, %s147
      %p149 = scmp.eq.s32.totalorder %s20, 0
      %p150 = por %p148, %p149
      %s151 = ssub.s32 %s21, %s40
      %s152 = ssub.s32 %s22, %s36
      %s153 = sor.u32 %s151, %s152
      %p154 = scmp.eq.s32.totalorder %s153, 0
      %s156 = sadd.s32 %s155, 1
      %s157 = scalar_select %p154, %s155, %s156
      %p160 = pneg %p154
      %p161 = scmp.eq.s32.totalorder %s14, 1
      %p162 = por %p160, %p161
      %p163 = scmp.ne.s32.totalorder %s155, %s158
      %p164 = scmp.eq.s32.totalorder %s14, 0
      %p165 = por %p163, %p164
      %p166 = scmp.ne.s32.totalorder %s155, %s158
      %p167 = scmp.eq.s32.totalorder %s19, 1
      %p168 = por %p166, %p167
      %p169 = scmp.ne.s32.totalorder %s158, %s159
      %p170 = scmp.eq.s32.totalorder %s19, 0
      %p171 = por %p169, %p170
      %p172 = scmp.ne.s32.totalorder %s158, %s159
      %p173 = scmp.eq.s32.totalorder %s20, 1
      %p174 = por %p172, %p173
      %p176 = scmp.ne.s32.totalorder %s159, %s175
      %p177 = scmp.eq.s32.totalorder %s20, 0
      %p178 = por %p176, %p177
      %p179 = scmp.le.s32.totalorder 1, %s14
      %p180 = scmp.lt.s32.totalorder %s14, 3
      %p181 = pnand %p179, %p180
      %p182 = pneg %p181
      // Predicated region
      $region9: #{transformer_forward.12} parent=5 // pred_check
        _
      $region10: #{transformer_forward.12} parent=5 // pred_check_branch
        %184 = sbr.rel (%p181) target = $region12
      $region11: #{transformer_forward.12} parent=5 // pred_region
        %s185 = ssub.s32 %s14, 1
        // Predicated region
        $region13: #{transformer_forward.12} parent=11 // pred_check
          %p186 = pneg %p89
        $region14: #{transformer_forward.12} parent=11 // pred_check_branch
          %188 = sbr.rel (%p186) target = $region16
        $region15: #{transformer_forward.12} parent=11 // pred_region
          %s189 = smul.u32 4, %s26
          %191 = vsyncadd [#allocation4], 0
          %s192 = sadd.s32 %s25, %s189
          %s193 = smul.addr %s192, 8
          %s194 = scalar_lea.hbm %s1, %s193
          %s195 = sshll.u32 %s194, 4
          %s196 = int_to_ptr.hbm [resolvable:$true] %s195
          %s197 = sshll.u32 [#allocation3], 4
          %s198 = int_to_ptr.vmem [resolvable:$true] %s197
          %203 = dma.hbm_to_vmem [thread:$0]  %s196, 512, %s198, [#allocation4], 128, 128, 8
        $region16: #{transformer_forward.12} parent=11 // pred_fallthru
          _
        // Predicated region
        $region17: #{transformer_forward.12} parent=11 // pred_check
          %p204 = pneg %p115
        $region18: #{transformer_forward.12} parent=11 // pred_check_branch
          %206 = sbr.rel (%p204) target = $region20
        $region19: #{transformer_forward.12} parent=11 // pred_region
          %p207 = scmp.lt.s32.totalorder %s25, 0
          %s208 = scalar_select %p207, %s25, 0
          %s209 = scalar_lea.vmem %s2, %s208
        $region20: #{transformer_forward.12} parent=11 // pred_fallthru
          _
      $region12: #{transformer_forward.12} parent=5 // pred_fallthru
        _
      %p210 = scmp.lt.s32.totalorder %s14, 2
      // Predicated region
      $region21: #{transformer_forward.12} parent=5 // pred_check
        %p211 = pneg %p210
      $region22: #{transformer_forward.12} parent=5 // pred_check_branch
        %213 = sbr.rel (%p211) target = $region24
      $region23: #{transformer_forward.12} parent=5 // pred_region
        // Predicated region
        $region25: #{transformer_forward.12} parent=23 // pred_check
          %p214 = pneg %p55
        $region26: #{transformer_forward.12} parent=23 // pred_check_branch
          %216 = sbr.rel (%p214) target = $region28
        $region27: #{transformer_forward.12} parent=23 // pred_region
          %p217 = scmp.lt.s32.totalorder %s21, 1
          %s218 = scalar_select %p217, %s21, 1
          %p219 = scmp.lt.s32.totalorder %s23, 0
          %s220 = scalar_select %p219, %s23, 0
          %s221 = sadd.s32 %s220, %s218
          %s222 = smul.addr %s221, 8
          %s223 = scalar_lea.vmem %s0, %s222
        $region28: #{transformer_forward.12} parent=23 // pred_fallthru
          _
        // Predicated region
        $region29: #{transformer_forward.12} parent=23 // pred_check
          %p224 = pneg %p137
        $region30: #{transformer_forward.12} parent=23 // pred_check_branch
          %226 = sbr.rel (%p224) target = $region32
        $region31: #{transformer_forward.12} parent=23 // pred_region
          %s227 = sand.u32 %s127, 1
          %s228 = scalar_lea.sflag [#allocation6], %s227
          %s229 = sand.u32 %s127, 1
          %s230 = smul.addr %s229, 8
          %s231 = scalar_lea.vmem [#allocation5], %s230
          %233 = vsyncadd %s228, 0
          %s234 = sadd.s32 %s22, %s21
          %s235 = smul.addr %s234, 8
          %s236 = scalar_lea.hbm %s3, %s235
          %s238 = sshll.u32 %s236, 4
          %s239 = int_to_ptr.hbm [resolvable:$true] %s238
          %s240 = sshll.u32 %s231, 4
          %s241 = int_to_ptr.vmem [resolvable:$true] %s240
          %243 = dma.hbm_to_vmem [thread:$0]  %s239, 128, %s241, %s228
        $region32: #{transformer_forward.12} parent=23 // pred_fallthru
          _
      $region24: #{transformer_forward.12} parent=5 // pred_fallthru
        _
      %p244 = scmp.le.s32.totalorder 1, %s14
      %p245 = scmp.lt.s32.totalorder %s14, 3
      %p246 = pnand %p244, %p245
      %p247 = pneg %p246
      // Predicated region
      $region33: #{transformer_forward.12} parent=5 // pred_check
        _
      $region34: #{transformer_forward.12} parent=5 // pred_check_branch
        %249 = sbr.rel (%p246) target = $region36
      $region35: #{transformer_forward.12} parent=5 // pred_region
        %s250 = ssub.s32 %s14, 1
        // Predicated region
        $region37: #{transformer_forward.12} parent=35 // pred_check
          %p251 = pneg %p89
        $region38: #{transformer_forward.12} parent=35 // pred_check_branch
          %253 = sbr.rel (%p251) target = $region40
        $region39: #{transformer_forward.12} parent=35 // pred_region
          %255 = dma.done [#allocation4], 512
        $region40: #{transformer_forward.12} parent=35 // pred_fallthru
          _
        %s256 = sand.u32 %s130, 1
        %s257 = scalar_lea.sflag [#allocation6], %s256
        %s258 = sand.u32 %s130, 1
        %s259 = smul.addr %s258, 8
        %s260 = scalar_lea.vmem [#allocation5], %s259
        // Predicated region
        $region41: #{transformer_forward.12} parent=35 // pred_check
          %p261 = pneg %p143
        $region42: #{transformer_forward.12} parent=35 // pred_check_branch
          %263 = sbr.rel (%p261) target = $region44
        $region43: #{transformer_forward.12} parent=35 // pred_region
          %265 = dma.done %s257, 128
        $region44: #{transformer_forward.12} parent=35 // pred_fallthru
          _
        %p266 = scmp.lt.s32.totalorder %s24, 1
        %s267 = scalar_select %p266, %s24, 1
        %p268 = scmp.lt.s32.totalorder %s26, 0
        %s269 = scalar_select %p268, %s26, 0
        %s270 = sadd.s32 %s269, %s267
        %s271 = smul.addr %s270, 8
        %s272 = scalar_lea.vmem %s0, %s271
        %p273 = pneg %p61
        %p274 = pneg %p58
        %p275 = pneg %p89
        %p276 = pneg %p86
        %p277 = scmp.lt.s32.totalorder %s25, 0
        %s278 = scalar_select %p277, %s25, 0
        %s279 = scalar_lea.vmem %s2, %s278
        %p280 = pneg %p115
        %p281 = pneg %p112
        %s282 = sand.u32 %s130, 1
        %s283 = scalar_lea.sflag [#allocation6], %s282
        %s284 = sand.u32 %s130, 1
        %s285 = smul.addr %s284, 8
        %s286 = scalar_lea.vmem [#allocation5], %s285
        %p287 = pneg %p143
        %p288 = pneg %p140
        %p289 = pneg %p171
        %p290 = pneg %p168
        %p291 = scmp.lt.s32.totalorder %s24, 1
        %s292 = scalar_select %p291, %s24, 1
        %p293 = scmp.lt.s32.totalorder %s25, 0
        %s294 = scalar_select %p293, %s25, 0
        %s295 = sadd.s32 %s294, %s292
        %s296 = smul.addr %s295, 8
        %s297 = scalar_lea.vmem %s4, %s296
        %p298 = scmp.lt.s32.totalorder %s24, 1
        %s299 = scalar_select %p298, %s24, 1
        %p300 = scmp.lt.s32.totalorder %s26, 0
        %s301 = scalar_select %p300, %s26, 0
        %s302 = sadd.s32 %s301, %s299
        %s303 = smul.addr %s302, 8
        %s304 = scalar_lea.vmem %s0, %s303
        %s305 = smul.u32 4, %s26
        %p306 = scmp.lt.s32.totalorder %s25, 0
        %s307 = scalar_select %p306, %s25, 0
        %s308 = scalar_lea.vmem %s2, %s307
        %p309 = scmp.lt.s32.totalorder %s24, 1
        %s310 = scalar_select %p309, %s24, 1
        %p311 = scmp.lt.s32.totalorder %s25, 0
        %s312 = scalar_select %p311, %s25, 0
        %s313 = sadd.s32 %s312, %s310
        %s314 = smul.addr %s313, 8
        %s315 = scalar_lea.vmem %s4, %s314
        %p316 = scmp.eq.s32.totalorder %s26, 0
        // Predicated region
        $region45: #{transformer_forward.12} parent=35 // pred_check
          %p317 = pneg %p316
        $region46: #{transformer_forward.12} parent=35 // pred_check_branch
          %319 = sbr.rel (%p317) target = $region48
        $region47: #{transformer_forward.12} parent=35 // pred_region
          %vm320 = vcmask 261120
          %321 = vst.msk [vmem:[#allocation2] sm:$0xff] %vm320, 0.0
        $region48: #{transformer_forward.12} parent=35 // pred_fallthru
          _
        %v322 = vld [vmem:[#allocation2] sm:$0xff]
        %v323 = vld [vmem:[%s304] sm:$0xff]
        %v324 = vld [vmem:[#allocation3] sm:$0xff]
        %v325 = vld [vmem:[#allocation3 + $0x8] sm:$0xff]
        %v326 = vld [vmem:[#allocation3 + $0x10] sm:$0xff]
        %v327 = vld [vmem:[#allocation3 + $0x18] sm:$0xff]
        %vm328 = vcmask 261120
        %v330 = vsel %vm328, %v323, 0
        %332 = vmatpush.msra.mxu0 0.0
        %333 = vmatpush.msra.mxu0 0.0
        %334 = vmatpush.msra.mxu0 0.0
        %335 = vmatpush.msra.mxu0 0.0
        %336 = vmatpush.msra.mxu0 0.0
        %337 = vmatpush.msra.mxu0 0.0
        %338 = vmatpush.msra.mxu0 0.0
        %339 = vmatpush.msra.mxu0 0.0
        %340 = vmatpush.msra.mxu0 0.0
        %341 = vmatpush.msra.mxu0 0.0
        %342 = vmatpush.msra.mxu0 0.0
        %343 = vmatpush.msra.mxu0 0.0
        %344 = vmatpush.msra.mxu0 %v327
        %345 = vmatpush.msra.mxu0 %v326
        %346 = vmatpush.msra.mxu0 %v325
        %347 = vmatpush.msra.mxu0 %v324
        %348 = vmatmul.f32.gmra.mxu0 %v330
        %v349 = vpop.f32.mrf.mxu0
        %v350 = vadd.f32 0.0, %v349
        %351 = vdwg.mxu0
        %v352 = vadd.f32 %v322, %v350
        %353 = vst.msk [vmem:[#allocation2] sm:$0xff] %vm328, %v352
        // Predicated region
        $region49: #{transformer_forward.12} parent=35 // pred_check
          %p354 = pneg %p316
        $region50: #{transformer_forward.12} parent=35 // pred_check_branch
          %356 = sbr.rel (%p354) target = $region52
        $region51: #{transformer_forward.12} parent=35 // pred_region
          %v357 = vld [vmem:[#allocation2] sm:$0xff]
          %v358 = vld [vmem:[%s308] sm:$0x1]
          %v360 = vperm.slane %v358, 0
          %v362 = vadd.f32 %v357, %v360
          %v363 = vld [vmem:[%s260] sm:$0xff]
          %v364 = vadd.f32 %v362, %v363
          %365 = vst.msk [vmem:[%s315] sm:$0xff] %vm328, %v364
        $region52: #{transformer_forward.12} parent=35 // pred_fallthru
          _
        %p366 = scmp.lt.s32.totalorder %s24, 1
        %s367 = scalar_select %p366, %s24, 1
        %p368 = scmp.lt.s32.totalorder %s25, 0
        %s369 = scalar_select %p368, %s25, 0
        %s370 = sadd.s32 %s369, %s367
        %s371 = smul.addr %s370, 8
        %s372 = scalar_lea.vmem %s4, %s371
        // Predicated region
        $region53: #{transformer_forward.12} parent=35 // pred_check
          %p373 = pneg %p168
        $region54: #{transformer_forward.12} parent=35 // pred_check_branch
          %375 = sbr.rel (%p373) target = $region56
        $region55: #{transformer_forward.12} parent=35 // pred_region
          _
        $region56: #{transformer_forward.12} parent=35 // pred_fallthru
          _
      $region36: #{transformer_forward.12} parent=5 // pred_fallthru
        _
      %p376 = scmp.le.s32.totalorder 2, %s14
      // Predicated region
      $region57: #{transformer_forward.12} parent=5 // pred_check
        %p377 = pneg %p376
      $region58: #{transformer_forward.12} parent=5 // pred_check_branch
        %379 = sbr.rel (%p377) target = $region60
      $region59: #{transformer_forward.12} parent=5 // pred_region
        %s380 = ssub.s32 %s14, 2
        // Predicated region
        $region61: #{transformer_forward.12} parent=59 // pred_check
          %p381 = pneg %p174
        $region62: #{transformer_forward.12} parent=59 // pred_check_branch
          %383 = sbr.rel (%p381) target = $region64
        $region63: #{transformer_forward.12} parent=59 // pred_region
          %p384 = scmp.lt.s32.totalorder %s27, 1
          %s385 = scalar_select %p384, %s27, 1
          %p386 = scmp.lt.s32.totalorder %s28, 0
          %s387 = scalar_select %p386, %s28, 0
          %s388 = sadd.s32 %s387, %s385
          %s389 = smul.addr %s388, 8
          %s390 = scalar_lea.vmem %s4, %s389
        $region64: #{transformer_forward.12} parent=59 // pred_fallthru
          _
      $region60: #{transformer_forward.12} parent=5 // pred_fallthru
        _
    $region6: #{transformer_forward.12} parent=1 // loop_footer
      %s18 = sadd.s32 1, %s14
    $region7: #{transformer_forward.12} parent=1 // loop_footer_branch
      %13 = sbr.rel target = $region3
    $region8: #{transformer_forward.12} parent=1 // loop_exit
      _
    %391 = vsyncpa [#allocation4], 1
    %s392 = scalar_lea.sflag [#allocation4], 1
    %393 = vsyncpa %s392, 1
    %394 = vsyncpa [#allocation6], 1
    %s395 = scalar_lea.sflag [#allocation6], 1
    %396 = vsyncpa %s395, 1

// kernel: transformer_forward.11
$region0: #{transformer_forward.11}
  #allocation0 [shape = 'u32[]', space=smem, size = 0x4, offset = 0x4, fixed_abs, tag = 'smem constant byte address 0x4 - core index']
  #allocation1 [shape = 'u32[72,128]{1,0:T(1,128)}', space=vmem, size = 0x9000, scoped, tag = 'internal scratch']
  #allocation2 [shape = 'f32[4,8,1]{2,1,0:T(8,128)}', space=vmem, size = 0x4000, scoped, tag = 'scratch operand']
  #allocation3 [shape = 'f32[4,8,1]{2,1,0:T(8,128)}', space=vmem, size = 0x4000, scoped, tag = 'scratch operand']
  #allocation4 [shape = 'f32[4,8,8]{2,1,0:T(8,128)}', space=vmem, size = 0x4000, scoped, tag = 'scratch operand']
  %s0 = inlined_call_operand.vmem [shape: f32[3,2,8,32], index: 0, kind: input, shape index: {}, may-alias: {0,1,2}]
  %s1 = inlined_call_operand.vmem [shape: f32[3,2,8,32], index: 1, kind: input, shape index: {}, may-alias: {0,1,2}]
  %s2 = inlined_call_operand.vmem [shape: f32[3,2,8,32], index: 2, kind: input, shape index: {}, may-alias: {0,1,2}]
  %s3 = inlined_call_operand.vmem [shape: f32[1,1,8,8], index: 3, kind: input, shape index: {}]
  %s4 = inlined_call_operand.vmem [shape: f32[2,8,32], index: 4, kind: output, shape index: {}]
  %s5 = sld [smem:[#allocation0]]
  $region57: #{transformer_forward.11} parent=0
    _
  %s7 = ssub.s32 1, %s5
  %s8 = scalar_select 0, %s7, %s5
  loop: start=0, step=1, limit=4
  $region2: #{transformer_forward.11} parent=0 // loop_pre_header
    _
  $region3: #{transformer_forward.11} parent=0 // loop_header
    %s10 = sphi 0, %s14
    %p11 = scmp.ge.s32.totalorder %s10, 4
    %s17 = sphi 0, %s36
    %s18 = sphi 0, %s32
    %s19 = sphi 0, %s28
    %s20 = sphi 0, %s17
    %s21 = sphi 0, %s18
    %s22 = sphi 0, %s19
    %s23 = sphi 0, %s20
    %s24 = sphi 0, %s21
    %s25 = sphi 0, %s22
    %s41 = sphi 0, %s43
    %s44 = sphi 0, %s41
    %s45 = sphi 0, %s44
    %s61 = sphi 0, %s45
    %s69 = sphi 0, %s71
    %s72 = sphi 0, %s69
    %s73 = sphi 0, %s72
    %s89 = sphi 0, %s73
    %s97 = sphi 0, %s99
    %s100 = sphi 0, %s97
    %s101 = sphi 0, %s100
    %s117 = sphi 0, %s101
    %s125 = sphi 0, %s127
    %s128 = sphi 0, %s125
    %s129 = sphi 0, %s128
    %s145 = sphi 0, %s129
    %s153 = sphi 0, %s155
    %s156 = sphi 0, %s153
    %s157 = sphi 0, %s156
    %s173 = sphi 0, %s157
  $region4: #{transformer_forward.11} parent=0 // loop_header_branch
    %13 = sbr.rel (%p11) target = $region8
  $region5: #{transformer_forward.11} parent=0 // loop_body
    %s15 = ssub.s32 %s10, 1
    %s16 = ssub.s32 %s10, 2
    %s26 = sadd.s32 1, %s19
    %p27 = scmp.ge.s32.totalorder %s26, 1
    %s28 = scalar_select %p27, 0, %s26
    %s29 = sadd.s32 1, %s18
    %s30 = scalar_select %p27, %s29, %s18
    %p31 = scmp.ge.s32.totalorder %s30, 1
    %s32 = scalar_select %p31, 0, %s30
    %s33 = sadd.s32 1, %s17
    %s34 = scalar_select %p31, %s33, %s17
    %p35 = scmp.ge.s32.totalorder %s34, 2
    %s36 = scalar_select %p35, 0, %s34
    %s37 = ssub.s32 %s17, %s36
    %s38 = ssub.s32 %s18, %s32
    %s39 = sor.u32 %s37, %s38
    %p40 = scmp.eq.s32.totalorder %s39, 0
    %s42 = sadd.s32 %s41, 1
    %s43 = scalar_select %p40, %s41, %s42
    %p46 = pneg %p40
    %p47 = scmp.eq.s32.totalorder %s10, 1
    %p48 = por %p46, %p47
    %p49 = scmp.ne.s32.totalorder %s41, %s44
    %p50 = scmp.eq.s32.totalorder %s10, 0
    %p51 = por %p49, %p50
    %p52 = scmp.ne.s32.totalorder %s41, %s44
    %p53 = scmp.eq.s32.totalorder %s15, 1
    %p54 = por %p52, %p53
    %p55 = scmp.ne.s32.totalorder %s44, %s45
    %p56 = scmp.eq.s32.totalorder %s15, 0
    %p57 = por %p55, %p56
    %p58 = scmp.ne.s32.totalorder %s44, %s45
    %p59 = scmp.eq.s32.totalorder %s16, 1
    %p60 = por %p58, %p59
    %p62 = scmp.ne.s32.totalorder %s45, %s61
    %p63 = scmp.eq.s32.totalorder %s16, 0
    %p64 = por %p62, %p63
    %s65 = ssub.s32 %s17, %s36
    %s66 = ssub.s32 %s19, %s28
    %s67 = sor.u32 %s65, %s66
    %p68 = scmp.eq.s32.totalorder %s67, 0
    %s70 = sadd.s32 %s69, 1
    %s71 = scalar_select %p68, %s69, %s70
    %p74 = pneg %p68
    %p75 = scmp.eq.s32.totalorder %s10, 1
    %p76 = por %p74, %p75
    %p77 = scmp.ne.s32.totalorder %s69, %s72
    %p78 = scmp.eq.s32.totalorder %s10, 0
    %p79 = por %p77, %p78
    %p80 = scmp.ne.s32.totalorder %s69, %s72
    %p81 = scmp.eq.s32.totalorder %s15, 1
    %p82 = por %p80, %p81
    %p83 = scmp.ne.s32.totalorder %s72, %s73
    %p84 = scmp.eq.s32.totalorder %s15, 0
    %p85 = por %p83, %p84
    %p86 = scmp.ne.s32.totalorder %s72, %s73
    %p87 = scmp.eq.s32.totalorder %s16, 1
    %p88 = por %p86, %p87
    %p90 = scmp.ne.s32.totalorder %s73, %s89
    %p91 = scmp.eq.s32.totalorder %s16, 0
    %p92 = por %p90, %p91
    %s93 = ssub.s32 %s17, %s36
    %s94 = ssub.s32 %s19, %s28
    %s95 = sor.u32 %s93, %s94
    %p96 = scmp.eq.s32.totalorder %s95, 0
    %s98 = sadd.s32 %s97, 1
    %s99 = scalar_select %p96, %s97, %s98
    %p102 = pneg %p96
    %p103 = scmp.eq.s32.totalorder %s10, 1
    %p104 = por %p102, %p103
    %p105 = scmp.ne.s32.totalorder %s97, %s100
    %p106 = scmp.eq.s32.totalorder %s10, 0
    %p107 = por %p105, %p106
    %p108 = scmp.ne.s32.totalorder %s97, %s100
    %p109 = scmp.eq.s32.totalorder %s15, 1
    %p110 = por %p108, %p109
    %p111 = scmp.ne.s32.totalorder %s100, %s101
    %p112 = scmp.eq.s32.totalorder %s15, 0
    %p113 = por %p111, %p112
    %p114 = scmp.ne.s32.totalorder %s100, %s101
    %p115 = scmp.eq.s32.totalorder %s16, 1
    %p116 = por %p114, %p115
    %p118 = scmp.ne.s32.totalorder %s101, %s117
    %p119 = scmp.eq.s32.totalorder %s16, 0
    %p120 = por %p118, %p119
    %s121 = ssub.s32 %s18, %s32
    %s122 = ssub.s32 %s19, %s28
    %s123 = sor.u32 %s121, %s122
    %p124 = scmp.eq.s32.totalorder %s123, 0
    %s126 = sadd.s32 %s125, 1
    %s127 = scalar_select %p124, %s125, %s126
    %p130 = pneg %p124
    %p131 = scmp.eq.s32.totalorder %s10, 1
    %p132 = por %p130, %p131
    %p133 = scmp.ne.s32.totalorder %s125, %s128
    %p134 = scmp.eq.s32.totalorder %s10, 0
    %p135 = por %p133, %p134
    %p136 = scmp.ne.s32.totalorder %s125, %s128
    %p137 = scmp.eq.s32.totalorder %s15, 1
    %p138 = por %p136, %p137
    %p139 = scmp.ne.s32.totalorder %s128, %s129
    %p140 = scmp.eq.s32.totalorder %s15, 0
    %p141 = por %p139, %p140
    %p142 = scmp.ne.s32.totalorder %s128, %s129
    %p143 = scmp.eq.s32.totalorder %s16, 1
    %p144 = por %p142, %p143
    %p146 = scmp.ne.s32.totalorder %s129, %s145
    %p147 = scmp.eq.s32.totalorder %s16, 0
    %p148 = por %p146, %p147
    %s149 = ssub.s32 %s17, %s36
    %s150 = ssub.s32 %s18, %s32
    %s151 = sor.u32 %s149, %s150
    %p152 = scmp.eq.s32.totalorder %s151, 0
    %s154 = sadd.s32 %s153, 1
    %s155 = scalar_select %p152, %s153, %s154
    %p158 = pneg %p152
    %p159 = scmp.eq.s32.totalorder %s10, 1
    %p160 = por %p158, %p159
    %p161 = scmp.ne.s32.totalorder %s153, %s156
    %p162 = scmp.eq.s32.totalorder %s10, 0
    %p163 = por %p161, %p162
    %p164 = scmp.ne.s32.totalorder %s153, %s156
    %p165 = scmp.eq.s32.totalorder %s15, 1
    %p166 = por %p164, %p165
    %p167 = scmp.ne.s32.totalorder %s156, %s157
    %p168 = scmp.eq.s32.totalorder %s15, 0
    %p169 = por %p167, %p168
    %p170 = scmp.ne.s32.totalorder %s156, %s157
    %p171 = scmp.eq.s32.totalorder %s16, 1
    %p172 = por %p170, %p171
    %p174 = scmp.ne.s32.totalorder %s157, %s173
    %p175 = scmp.eq.s32.totalorder %s16, 0
    %p176 = por %p174, %p175
    %p177 = scmp.le.s32.totalorder 1, %s10
    %p178 = scmp.lt.s32.totalorder %s10, 3
    %p179 = pnand %p177, %p178
    %p180 = pneg %p179
    // Predicated region
    $region9: #{transformer_forward.11} parent=5 // pred_check
      _
    $region10: #{transformer_forward.11} parent=5 // pred_check_branch
      %182 = sbr.rel (%p179) target = $region12
    $region11: #{transformer_forward.11} parent=5 // pred_region
      %s183 = ssub.s32 %s10, 1
      // Predicated region
      $region13: #{transformer_forward.11} parent=11 // pred_check
        %p184 = pneg %p141
      $region14: #{transformer_forward.11} parent=11 // pred_check_branch
        %186 = sbr.rel (%p184) target = $region16
      $region15: #{transformer_forward.11} parent=11 // pred_region
        %p187 = scmp.lt.s32.totalorder %s21, 0
        %s188 = scalar_select %p187, %s21, 0
        %p189 = scmp.lt.s32.totalorder %s22, 0
        %s190 = scalar_select %p189, %s22, 0
        %s191 = sadd.s32 %s190, %s188
        %s192 = smul.addr %s191, 8
        %s193 = scalar_lea.vmem %s3, %s192
      $region16: #{transformer_forward.11} parent=11 // pred_fallthru
        _
    $region12: #{transformer_forward.11} parent=5 // pred_fallthru
      _
    %p194 = scmp.lt.s32.totalorder %s10, 2
    // Predicated region
    $region17: #{transformer_forward.11} parent=5 // pred_check
      %p195 = pneg %p194
    $region18: #{transformer_forward.11} parent=5 // pred_check_branch
      %197 = sbr.rel (%p195) target = $region20
    $region19: #{transformer_forward.11} parent=5 // pred_region
      // Predicated region
      $region21: #{transformer_forward.11} parent=19 // pred_check
        %p198 = pneg %p51
      $region22: #{transformer_forward.11} parent=19 // pred_check_branch
        %200 = sbr.rel (%p198) target = $region24
      $region23: #{transformer_forward.11} parent=19 // pred_region
        %p201 = scmp.lt.s32.totalorder %s17, 1
        %s202 = scalar_select %p201, %s17, 1
        %p203 = scmp.lt.s32.totalorder %s18, 0
        %s204 = scalar_select %p203, %s18, 0
        %s205 = sadd.s32 %s204, %s202
        %s206 = smul.addr %s205, 8
        %s207 = scalar_lea.vmem %s0, %s206
      $region24: #{transformer_forward.11} parent=19 // pred_fallthru
        _
      // Predicated region
      $region25: #{transformer_forward.11} parent=19 // pred_check
        %p208 = pneg %p79
      $region26: #{transformer_forward.11} parent=19 // pred_check_branch
        %210 = sbr.rel (%p208) target = $region28
      $region27: #{transformer_forward.11} parent=19 // pred_region
        %p211 = scmp.lt.s32.totalorder %s17, 1
        %s212 = scalar_select %p211, %s17, 1
        %p213 = scmp.lt.s32.totalorder %s19, 0
        %s214 = scalar_select %p213, %s19, 0
        %s215 = sadd.s32 %s214, %s212
        %s216 = sadd.s32 %s215, 2
        %s217 = smul.addr %s216, 8
        %s218 = scalar_lea.vmem %s1, %s217
      $region28: #{transformer_forward.11} parent=19 // pred_fallthru
        _
      // Predicated region
      $region29: #{transformer_forward.11} parent=19 // pred_check
        %p219 = pneg %p107
      $region30: #{transformer_forward.11} parent=19 // pred_check_branch
        %221 = sbr.rel (%p219) target = $region32
      $region31: #{transformer_forward.11} parent=19 // pred_region
        %p222 = scmp.lt.s32.totalorder %s17, 1
        %s223 = scalar_select %p222, %s17, 1
        %p224 = scmp.lt.s32.totalorder %s19, 0
        %s225 = scalar_select %p224, %s19, 0
        %s226 = sadd.s32 %s225, %s223
        %s227 = sadd.s32 %s226, 4
        %s228 = smul.addr %s227, 8
        %s229 = scalar_lea.vmem %s2, %s228
      $region32: #{transformer_forward.11} parent=19 // pred_fallthru
        _
    $region20: #{transformer_forward.11} parent=5 // pred_fallthru
      _
    %p230 = scmp.le.s32.totalorder 1, %s10
    %p231 = scmp.lt.s32.totalorder %s10, 3
    %p232 = pnand %p230, %p231
    %p233 = pneg %p232
    // Predicated region
    $region33: #{transformer_forward.11} parent=5 // pred_check
      _
    $region34: #{transformer_forward.11} parent=5 // pred_check_branch
      %235 = sbr.rel (%p232) target = $region36
    $region35: #{transformer_forward.11} parent=5 // pred_region
      %s236 = ssub.s32 %s10, 1
      %p237 = scmp.lt.s32.totalorder %s20, 1
      %s238 = scalar_select %p237, %s20, 1
      %p239 = scmp.lt.s32.totalorder %s21, 0
      %s240 = scalar_select %p239, %s21, 0
      %s241 = sadd.s32 %s240, %s238
      %s242 = smul.addr %s241, 8
      %s243 = scalar_lea.vmem %s0, %s242
      %p244 = pneg %p57
      %p245 = pneg %p54
      %p246 = scmp.lt.s32.totalorder %s20, 1
      %s247 = scalar_select %p246, %s20, 1
      %p248 = scmp.lt.s32.totalorder %s22, 0
      %s249 = scalar_select %p248, %s22, 0
      %s250 = sadd.s32 %s249, %s247
      %s251 = sadd.s32 %s250, 2
      %s252 = smul.addr %s251, 8
      %s253 = scalar_lea.vmem %s1, %s252
      %p254 = pneg %p85
      %p255 = pneg %p82
      %p256 = scmp.lt.s32.totalorder %s20, 1
      %s257 = scalar_select %p256, %s20, 1
      %p258 = scmp.lt.s32.totalorder %s22, 0
      %s259 = scalar_select %p258, %s22, 0
      %s260 = sadd.s32 %s259, %s257
      %s261 = sadd.s32 %s260, 4
      %s262 = smul.addr %s261, 8
      %s263 = scalar_lea.vmem %s2, %s262
      %p264 = pneg %p113
      %p265 = pneg %p110
      %p266 = scmp.lt.s32.totalorder %s21, 0
      %s267 = scalar_select %p266, %s21, 0
      %p268 = scmp.lt.s32.totalorder %s22, 0
      %s269 = scalar_select %p268, %s22, 0
      %s270 = sadd.s32 %s269, %s267
      %s271 = smul.addr %s270, 8
      %s272 = scalar_lea.vmem %s3, %s271
      %p273 = pneg %p141
      %p274 = pneg %p138
      %p275 = pneg %p169
      %p276 = pneg %p166
      %p277 = scmp.lt.s32.totalorder %s20, 1
      %s278 = scalar_select %p277, %s20, 1
      %p279 = scmp.lt.s32.totalorder %s21, 0
      %s280 = scalar_select %p279, %s21, 0
      %s281 = sadd.s32 %s280, %s278
      %s282 = smul.addr %s281, 8
      %s283 = scalar_lea.vmem %s4, %s282
      %p284 = scmp.lt.s32.totalorder %s20, 1
      %s285 = scalar_select %p284, %s20, 1
      %p286 = scmp.lt.s32.totalorder %s21, 0
      %s287 = scalar_select %p286, %s21, 0
      %s288 = sadd.s32 %s287, %s285
      %s289 = smul.addr %s288, 8
      %s290 = scalar_lea.vmem %s0, %s289
      %p291 = scmp.lt.s32.totalorder %s20, 1
      %s292 = scalar_select %p291, %s20, 1
      %p293 = scmp.lt.s32.totalorder %s22, 0
      %s294 = scalar_select %p293, %s22, 0
      %s295 = sadd.s32 %s294, %s292
      %s296 = sadd.s32 %s295, 2
      %s297 = smul.addr %s296, 8
      %s298 = scalar_lea.vmem %s1, %s297
      %p299 = scmp.lt.s32.totalorder %s20, 1
      %s300 = scalar_select %p299, %s20, 1
      %p301 = scmp.lt.s32.totalorder %s22, 0
      %s302 = scalar_select %p301, %s22, 0
      %s303 = sadd.s32 %s302, %s300
      %s304 = sadd.s32 %s303, 4
      %s305 = smul.addr %s304, 8
      %s306 = scalar_lea.vmem %s2, %s305
      %p307 = scmp.lt.s32.totalorder %s21, 0
      %s308 = scalar_select %p307, %s21, 0
      %p309 = scmp.lt.s32.totalorder %s22, 0
      %s310 = scalar_select %p309, %s22, 0
      %s311 = sadd.s32 %s310, %s308
      %s312 = smul.addr %s311, 8
      %s313 = scalar_lea.vmem %s3, %s312
      %p314 = scmp.lt.s32.totalorder %s20, 1
      %s315 = scalar_select %p314, %s20, 1
      %p316 = scmp.lt.s32.totalorder %s21, 0
      %s317 = scalar_select %p316, %s21, 0
      %s318 = sadd.s32 %s317, %s315
      %s319 = smul.addr %s318, 8
      %s320 = scalar_lea.vmem %s4, %s319
      %p321 = scmp.eq.s32.totalorder %s22, 0
      // Predicated region
      $region37: #{transformer_forward.11} parent=35 // pred_check
        %p322 = pneg %p321
      $region38: #{transformer_forward.11} parent=35 // pred_check_branch
        %324 = sbr.rel (%p322) target = $region40
      $region39: #{transformer_forward.11} parent=35 // pred_region
        %vm325 = vcmask 7168
        %326 = vst.msk [vmem:[#allocation2] sm:$0xff] %vm325, -inf
        %327 = vst.msk [vmem:[#allocation2 + $0x8] sm:$0xff] %vm325, -inf
        %328 = vst.msk [vmem:[#allocation2 + $0x10] sm:$0xff] %vm325, -inf
        %329 = vst.msk [vmem:[#allocation2 + $0x18] sm:$0xff] %vm325, -inf
        %330 = vst.msk [vmem:[#allocation3] sm:$0xff] %vm325, 0.0
        %331 = vst.msk [vmem:[#allocation3 + $0x8] sm:$0xff] %vm325, 0.0
        %332 = vst.msk [vmem:[#allocation3 + $0x10] sm:$0xff] %vm325, 0.0
        %333 = vst.msk [vmem:[#allocation3 + $0x18] sm:$0xff] %vm325, 0.0
        %vm334 = vcmask 64512
        %335 = vst.msk [vmem:[#allocation4] sm:$0xff] %vm334, 0.0
        %336 = vst.msk [vmem:[#allocation4 + $0x8] sm:$0xff] %vm334, 0.0
        %337 = vst.msk [vmem:[#allocation4 + $0x10] sm:$0xff] %vm334, 0.0
        %338 = vst.msk [vmem:[#allocation4 + $0x18] sm:$0xff] %vm334, 0.0
      $region40: #{transformer_forward.11} parent=35 // pred_fallthru
        _
      %v339 = vld [vmem:[%s290] sm:$0xff]
      %v340 = vld [vmem:[%s298] sm:$0xff]
      %v341 = vld [vmem:[%s306] sm:$0xff]
      %vm342 = vcmask 64512
      %v344 = vsel %vm342, %v339, 0
      %v347 = vsel %vm342, %v340, 0
      %349 = vmatpush.xpose.msra.mxu0 0.0
      %350 = vmatpush.xpose.msra.mxu0 0.0
      %351 = vmatpush.xpose.msra.mxu0 0.0
      %352 = vmatpush.xpose.msra.mxu0 0.0
      %353 = vmatpush.xpose.msra.mxu0 0.0
      %354 = vmatpush.xpose.msra.mxu0 0.0
      %355 = vmatpush.xpose.msra.mxu0 0.0
      %356 = vmatpush.xpose.msra.mxu0 0.0
      %357 = vmatpush.xpose.msra.mxu0 0.0
      %358 = vmatpush.xpose.msra.mxu0 0.0
      %359 = vmatpush.xpose.msra.mxu0 0.0
      %360 = vmatpush.xpose.msra.mxu0 0.0
      %361 = vmatpush.xpose.msra.mxu0 0.0
      %362 = vmatpush.xpose.msra.mxu0 0.0
      %363 = vmatpush.xpose.msra.mxu0 0.0
      %364 = vmatpush.xpose.msra.mxu0 %v347
      %365 = vmatmul.f32.gmra.mxu0 %v344
      %v366 = vpop.f32.mrf.mxu0
      %v367 = vadd.f32 0.0, %v366
      %368 = vdwg.mxu0
      %v369 = vld [vmem:[%s313] sm:$0xff]
      %v370 = vmin.f32 %v367, %v369
      %v371 = vld [vmem:[#allocation2] sm:$0xff]
      %v372 = vsel %vm342, %v370, -inf
      %373 = vmax.xlane.f32.xlu0 %v372
      %v374 = vpop.xlane.xlu0 %373
      %v375 = vmax.f32 %v371, %v374
      %v376 = vsub.f32 %v371, %v375
      %v377 = vmul.f32 %v376, 1.442695
      %v378 = vpow.pop %v377
      %380 = vset.pattern.permute.xlu0 0
      %381 = vperm.xlu0 %380, %v375
      %v382 = vpop.permute.xlu0 %381
      %v384 = vsub.f32 %v370, %v382
      %v385 = vmul.f32 %v384, 1.442695
      %v386 = vpow.pop %v385
      %v387 = vld [vmem:[#allocation3] sm:$0xff]
      %v388 = vmul.f32 %v378, %v387
      %v389 = vsel %vm342, %v386, 0.0
      %390 = vadd.xlane.f32.xlu0 %v389
      %v391 = vpop.xlane.xlu0 %390
      %v392 = vadd.f32 %v388, %v391
      %vm393 = vcmask 7168
      %394 = vst.msk [vmem:[#allocation3] sm:$0xff] %vm393, %v392
      %v395 = vld [vmem:[#allocation4] sm:$0xff]
      %397 = vset.pattern.permute.xlu0 0
      %398 = vperm.xlu0 %397, %v378
      %v399 = vpop.permute.xlu0 %398
      %v401 = vmul.f32 %v399, %v395
      %v403 = vsel %vm342, %v386, 0
      %405 = vmatpush.msra.mxu0 0.0
      %406 = vmatpush.msra.mxu0 0.0
      %407 = vmatpush.msra.mxu0 0.0
      %408 = vmatpush.msra.mxu0 0.0
      %409 = vmatpush.msra.mxu0 0.0
      %410 = vmatpush.msra.mxu0 0.0
      %411 = vmatpush.msra.mxu0 0.0
      %412 = vmatpush.msra.mxu0 0.0
      %413 = vmatpush.msra.mxu0 0.0
      %414 = vmatpush.msra.mxu0 0.0
      %415 = vmatpush.msra.mxu0 0.0
      %416 = vmatpush.msra.mxu0 0.0
      %417 = vmatpush.msra.mxu0 0.0
      %418 = vmatpush.msra.mxu0 0.0
      %419 = vmatpush.msra.mxu0 0.0
      %420 = vmatpush.msra.mxu0 %v341
      %421 = vmatmul.f32.gmra.mxu0 %v403
      %v422 = vpop.f32.mrf.mxu0
      %v423 = vadd.f32 0.0, %v422
      %424 = vdwg.mxu0
      %v425 = vadd.f32 %v401, %v423
      %426 = vst.msk [vmem:[#allocation4] sm:$0xff] %vm342, %v425
      %427 = vst.msk [vmem:[#allocation2] sm:$0xff] %vm393, %v375
      %428 = vrot.lane.b32.xlu0 %v339, 120
      %v429 = vpop.permute.xlu0 %428
      %430 = vrot.lane.b32.xlu0 %v340, 120
      %v431 = vpop.permute.xlu0 %430
      %v432 = vsel %vm342, %v429, 0
      %v434 = vsel %vm342, %v431, 0
      %436 = vmatpush.xpose.msra.mxu0 0.0
      %437 = vmatpush.xpose.msra.mxu0 0.0
      %438 = vmatpush.xpose.msra.mxu0 0.0
      %439 = vmatpush.xpose.msra.mxu0 0.0
      %440 = vmatpush.xpose.msra.mxu0 0.0
      %441 = vmatpush.xpose.msra.mxu0 0.0
      %442 = vmatpush.xpose.msra.mxu0 0.0
      %443 = vmatpush.xpose.msra.mxu0 0.0
      %444 = vmatpush.xpose.msra.mxu0 0.0
      %445 = vmatpush.xpose.msra.mxu0 0.0
      %446 = vmatpush.xpose.msra.mxu0 0.0
      %447 = vmatpush.xpose.msra.mxu0 0.0
      %448 = vmatpush.xpose.msra.mxu0 0.0
      %449 = vmatpush.xpose.msra.mxu0 0.0
      %450 = vmatpush.xpose.msra.mxu0 0.0
      %451 = vmatpush.xpose.msra.mxu0 %v434
      %452 = vmatmul.f32.gmra.mxu0 %v432
      %v453 = vpop.f32.mrf.mxu0
      %v454 = vadd.f32 0.0, %v453
      %455 = vdwg.mxu0
      %v456 = vld [vmem:[%s313] sm:$0xff]
      %v457 = vmin.f32 %v454, %v456
      %s458 = scalar_lea.vmem [#allocation2], 8
      %v459 = vld [vmem:[%s458] sm:$0xff]
      %v460 = vsel %vm342, %v457, -inf
      %461 = vmax.xlane.f32.xlu0 %v460
      %v462 = vpop.xlane.xlu0 %461
      %v463 = vmax.f32 %v459, %v462
      %v464 = vsub.f32 %v459, %v463
      %v465 = vmul.f32 %v464, 1.442695
      %v466 = vpow.pop %v465
      %468 = vset.pattern.permute.xlu0 0
      %469 = vperm.xlu0 %468, %v463
      %v470 = vpop.permute.xlu0 %469
      %v472 = vsub.f32 %v457, %v470
      %v473 = vmul.f32 %v472, 1.442695
      %v474 = vpow.pop %v473
      %s475 = scalar_lea.vmem [#allocation3], 8
      %v476 = vld [vmem:[%s475] sm:$0xff]
      %v477 = vmul.f32 %v466, %v476
      %v478 = vsel %vm342, %v474, 0.0
      %479 = vadd.xlane.f32.xlu0 %v478
      %v480 = vpop.xlane.xlu0 %479
      %v481 = vadd.f32 %v477, %v480
      %482 = vst.msk [vmem:[%s475] sm:$0xff] %vm393, %v481
      %s483 = scalar_lea.vmem [#allocation4], 8
      %v484 = vld [vmem:[%s483] sm:$0xff]
      %486 = vset.pattern.permute.xlu0 0
      %487 = vperm.xlu0 %486, %v466
      %v488 = vpop.permute.xlu0 %487
      %v490 = vmul.f32 %v488, %v484
      %492 = vrot.lane.b32.xlu0 %v341, 120
      %v493 = vpop.permute.xlu0 %492
      %v496 = vsel %vm342, %v474, 0
      %498 = vmatpush.msra.mxu0 0.0
      %499 = vmatpush.msra.mxu0 0.0
      %500 = vmatpush.msra.mxu0 0.0
      %501 = vmatpush.msra.mxu0 0.0
      %502 = vmatpush.msra.mxu0 0.0
      %503 = vmatpush.msra.mxu0 0.0
      %504 = vmatpush.msra.mxu0 0.0
      %505 = vmatpush.msra.mxu0 0.0
      %506 = vmatpush.msra.mxu0 0.0
      %507 = vmatpush.msra.mxu0 0.0
      %508 = vmatpush.msra.mxu0 0.0
      %509 = vmatpush.msra.mxu0 0.0
      %510 = vmatpush.msra.mxu0 0.0
      %511 = vmatpush.msra.mxu0 0.0
      %512 = vmatpush.msra.mxu0 0.0
      %513 = vmatpush.msra.mxu0 %v493
      %514 = vmatmul.f32.gmra.mxu0 %v496
      %v515 = vpop.f32.mrf.mxu0
      %v516 = vadd.f32 0.0, %v515
      %517 = vdwg.mxu0
      %v518 = vadd.f32 %v490, %v516
      %519 = vst.msk [vmem:[%s483] sm:$0xff] %vm342, %v518
      %520 = vst.msk [vmem:[%s458] sm:$0xff] %vm393, %v463
      %521 = vrot.lane.b32.xlu0 %v339, 112
      %v522 = vpop.permute.xlu0 %521
      %523 = vrot.lane.b32.xlu0 %v340, 112
      %v524 = vpop.permute.xlu0 %523
      %v525 = vsel %vm342, %v522, 0
      %v527 = vsel %vm342, %v524, 0
      %529 = vmatpush.xpose.msra.mxu0 0.0
      %530 = vmatpush.xpose.msra.mxu0 0.0
      %531 = vmatpush.xpose.msra.mxu0 0.0
      %532 = vmatpush.xpose.msra.mxu0 0.0
      %533 = vmatpush.xpose.msra.mxu0 0.0
      %534 = vmatpush.xpose.msra.mxu0 0.0
      %535 = vmatpush.xpose.msra.mxu0 0.0
      %536 = vmatpush.xpose.msra.mxu0 0.0
      %537 = vmatpush.xpose.msra.mxu0 0.0
      %538 = vmatpush.xpose.msra.mxu0 0.0
      %539 = vmatpush.xpose.msra.mxu0 0.0
      %540 = vmatpush.xpose.msra.mxu0 0.0
      %541 = vmatpush.xpose.msra.mxu0 0.0
      %542 = vmatpush.xpose.msra.mxu0 0.0
      %543 = vmatpush.xpose.msra.mxu0 0.0
      %544 = vmatpush.xpose.msra.mxu0 %v527
      %545 = vmatmul.f32.gmra.mxu0 %v525
      %v546 = vpop.f32.mrf.mxu0
      %v547 = vadd.f32 0.0, %v546
      %548 = vdwg.mxu0
      %v549 = vld [vmem:[%s313] sm:$0xff]
      %v550 = vmin.f32 %v547, %v549
      %s551 = scalar_lea.vmem [#allocation2], 16
      %v552 = vld [vmem:[%s551] sm:$0xff]
      %v553 = vsel %vm342, %v550, -inf
      %554 = vmax.xlane.f32.xlu0 %v553
      %v555 = vpop.xlane.xlu0 %554
      %v556 = vmax.f32 %v552, %v555
      %v557 = vsub.f32 %v552, %v556
      %v558 = vmul.f32 %v557, 1.442695
      %v559 = vpow.pop %v558
      %561 = vset.pattern.permute.xlu0 0
      %562 = vperm.xlu0 %561, %v556
      %v563 = vpop.permute.xlu0 %562
      %v565 = vsub.f32 %v550, %v563
      %v566 = vmul.f32 %v565, 1.442695
      %v567 = vpow.pop %v566
      %s568 = scalar_lea.vmem [#allocation3], 16
      %v569 = vld [vmem:[%s568] sm:$0xff]
      %v570 = vmul.f32 %v559, %v569
      %v571 = vsel %vm342, %v567, 0.0
      %572 = vadd.xlane.f32.xlu0 %v571
      %v573 = vpop.xlane.xlu0 %572
      %v574 = vadd.f32 %v570, %v573
      %575 = vst.msk [vmem:[%s568] sm:$0xff] %vm393, %v574
      %s576 = scalar_lea.vmem [#allocation4], 16
      %v577 = vld [vmem:[%s576] sm:$0xff]
      %579 = vset.pattern.permute.xlu0 0
      %580 = vperm.xlu0 %579, %v559
      %v581 = vpop.permute.xlu0 %580
      %v583 = vmul.f32 %v581, %v577
      %584 = vrot.lane.b32.xlu0 %v341, 112
      %v585 = vpop.permute.xlu0 %584
      %v588 = vsel %vm342, %v567, 0
      %590 = vmatpush.msra.mxu0 0.0
      %591 = vmatpush.msra.mxu0 0.0
      %592 = vmatpush.msra.mxu0 0.0
      %593 = vmatpush.msra.mxu0 0.0
      %594 = vmatpush.msra.mxu0 0.0
      %595 = vmatpush.msra.mxu0 0.0
      %596 = vmatpush.msra.mxu0 0.0
      %597 = vmatpush.msra.mxu0 0.0
      %598 = vmatpush.msra.mxu0 0.0
      %599 = vmatpush.msra.mxu0 0.0
      %600 = vmatpush.msra.mxu0 0.0
      %601 = vmatpush.msra.mxu0 0.0
      %602 = vmatpush.msra.mxu0 0.0
      %603 = vmatpush.msra.mxu0 0.0
      %604 = vmatpush.msra.mxu0 0.0
      %605 = vmatpush.msra.mxu0 %v585
      %606 = vmatmul.f32.gmra.mxu0 %v588
      %v607 = vpop.f32.mrf.mxu0
      %v608 = vadd.f32 0.0, %v607
      %609 = vdwg.mxu0
      %v610 = vadd.f32 %v583, %v608
      %611 = vst.msk [vmem:[%s576] sm:$0xff] %vm342, %v610
      %612 = vst.msk [vmem:[%s551] sm:$0xff] %vm393, %v556
      %613 = vrot.lane.b32.xlu0 %v339, 104
      %v614 = vpop.permute.xlu0 %613
      %615 = vrot.lane.b32.xlu0 %v340, 104
      %v616 = vpop.permute.xlu0 %615
      %v617 = vsel %vm342, %v614, 0
      %v619 = vsel %vm342, %v616, 0
      %621 = vmatpush.xpose.msra.mxu0 0.0
      %622 = vmatpush.xpose.msra.mxu0 0.0
      %623 = vmatpush.xpose.msra.mxu0 0.0
      %624 = vmatpush.xpose.msra.mxu0 0.0
      %625 = vmatpush.xpose.msra.mxu0 0.0
      %626 = vmatpush.xpose.msra.mxu0 0.0
      %627 = vmatpush.xpose.msra.mxu0 0.0
      %628 = vmatpush.xpose.msra.mxu0 0.0
      %629 = vmatpush.xpose.msra.mxu0 0.0
      %630 = vmatpush.xpose.msra.mxu0 0.0
      %631 = vmatpush.xpose.msra.mxu0 0.0
      %632 = vmatpush.xpose.msra.mxu0 0.0
      %633 = vmatpush.xpose.msra.mxu0 0.0
      %634 = vmatpush.xpose.msra.mxu0 0.0
      %635 = vmatpush.xpose.msra.mxu0 0.0
      %636 = vmatpush.xpose.msra.mxu0 %v619
      %637 = vmatmul.f32.gmra.mxu0 %v617
      %v638 = vpop.f32.mrf.mxu0
      %v639 = vadd.f32 0.0, %v638
      %640 = vdwg.mxu0
      %v641 = vld [vmem:[%s313] sm:$0xff]
      %v642 = vmin.f32 %v639, %v641
      %s643 = scalar_lea.vmem [#allocation2], 24
      %v644 = vld [vmem:[%s643] sm:$0xff]
      %v645 = vsel %vm342, %v642, -inf
      %646 = vmax.xlane.f32.xlu0 %v645
      %v647 = vpop.xlane.xlu0 %646
      %v648 = vmax.f32 %v644, %v647
      %v649 = vsub.f32 %v644, %v648
      %v650 = vmul.f32 %v649, 1.442695
      %v651 = vpow.pop %v650
      %653 = vset.pattern.permute.xlu0 0
      %654 = vperm.xlu0 %653, %v648
      %v655 = vpop.permute.xlu0 %654
      %v657 = vsub.f32 %v642, %v655
      %v658 = vmul.f32 %v657, 1.442695
      %v659 = vpow.pop %v658
      %s660 = scalar_lea.vmem [#allocation3], 24
      %v661 = vld [vmem:[%s660] sm:$0xff]
      %v662 = vmul.f32 %v651, %v661
      %v663 = vsel %vm342, %v659, 0.0
      %664 = vadd.xlane.f32.xlu0 %v663
      %v665 = vpop.xlane.xlu0 %664
      %v666 = vadd.f32 %v662, %v665
      %667 = vst.msk [vmem:[%s660] sm:$0xff] %vm393, %v666
      %s668 = scalar_lea.vmem [#allocation4], 24
      %v669 = vld [vmem:[%s668] sm:$0xff]
      %671 = vset.pattern.permute.xlu0 0
      %672 = vperm.xlu0 %671, %v651
      %v673 = vpop.permute.xlu0 %672
      %v675 = vmul.f32 %v673, %v669
      %676 = vrot.lane.b32.xlu0 %v341, 104
      %v677 = vpop.permute.xlu0 %676
      %v680 = vsel %vm342, %v659, 0
      %682 = vmatpush.msra.mxu0 0.0
      %683 = vmatpush.msra.mxu0 0.0
      %684 = vmatpush.msra.mxu0 0.0
      %685 = vmatpush.msra.mxu0 0.0
      %686 = vmatpush.msra.mxu0 0.0
      %687 = vmatpush.msra.mxu0 0.0
      %688 = vmatpush.msra.mxu0 0.0
      %689 = vmatpush.msra.mxu0 0.0
      %690 = vmatpush.msra.mxu0 0.0
      %691 = vmatpush.msra.mxu0 0.0
      %692 = vmatpush.msra.mxu0 0.0
      %693 = vmatpush.msra.mxu0 0.0
      %694 = vmatpush.msra.mxu0 0.0
      %695 = vmatpush.msra.mxu0 0.0
      %696 = vmatpush.msra.mxu0 0.0
      %697 = vmatpush.msra.mxu0 %v677
      %698 = vmatmul.f32.gmra.mxu0 %v680
      %v699 = vpop.f32.mrf.mxu0
      %v700 = vadd.f32 0.0, %v699
      %701 = vdwg.mxu0
      %v702 = vadd.f32 %v675, %v700
      %703 = vst.msk [vmem:[%s668] sm:$0xff] %vm342, %v702
      %704 = vst.msk [vmem:[%s643] sm:$0xff] %vm393, %v648
      // Predicated region
      $region41: #{transformer_forward.11} parent=35 // pred_check
        %p705 = pneg %p321
      $region42: #{transformer_forward.11} parent=35 // pred_check_branch
        %707 = sbr.rel (%p705) target = $region44
      $region43: #{transformer_forward.11} parent=35 // pred_region
        %v708 = vld [vmem:[#allocation3] sm:$0xff]
        %v709 = vrcp.pop %v708
        %v710 = vmul.f32 %v708, %v709
        %v711 = vsub.f32 1.0, %v710
        %v712 = vmul.f32 %v709, %v711
        %v713 = vadd.f32 %v709, %v712
        %vm714 = vweird.f32 %v708
        %vm715 = vweird.f32 %v709
        %vm716 = vmor %vm714, %vm715
        %v717 = vsel %vm716, %v709, %v713
        %v718 = vand.u32 2147483647, %v708
        %vm719 = vcmp.eq.f32.partialorder %v718, 8.507059e+37
        %v720 = vand.u32 %v708, 2147483648
        %v721 = vor.u32 1.1754944e-38, %v720
        %v722 = vsel %vm719, %v721, %v717
        %v723 = vld [vmem:[#allocation4] sm:$0xff]
        %725 = vset.pattern.permute.xlu0 0
        %726 = vperm.xlu0 %725, %v722
        %v727 = vpop.permute.xlu0 %726
        %v729 = vmul.f32 %v723, %v727
        %v730 = vld [vmem:[%s475] sm:$0xff]
        %v731 = vrcp.pop %v730
        %v732 = vmul.f32 %v730, %v731
        %v733 = vsub.f32 1.0, %v732
        %v734 = vmul.f32 %v731, %v733
        %v735 = vadd.f32 %v731, %v734
        %vm736 = vweird.f32 %v730
        %vm737 = vweird.f32 %v731
        %vm738 = vmor %vm736, %vm737
        %v739 = vsel %vm738, %v731, %v735
        %v740 = vand.u32 2147483647, %v730
        %vm741 = vcmp.eq.f32.partialorder %v740, 8.507059e+37
        %v742 = vand.u32 %v730, 2147483648
        %v743 = vor.u32 1.1754944e-38, %v742
        %v744 = vsel %vm741, %v743, %v739
        %v745 = vld [vmem:[%s483] sm:$0xff]
        %747 = vset.pattern.permute.xlu0 0
        %748 = vperm.xlu0 %747, %v744
        %v749 = vpop.permute.xlu0 %748
        %v751 = vmul.f32 %v745, %v749
        %v752 = vld [vmem:[%s568] sm:$0xff]
        %v753 = vrcp.pop %v752
        %v754 = vmul.f32 %v752, %v753
        %v755 = vsub.f32 1.0, %v754
        %v756 = vmul.f32 %v753, %v755
        %v757 = vadd.f32 %v753, %v756
        %vm758 = vweird.f32 %v752
        %vm759 = vweird.f32 %v753
        %vm760 = vmor %vm758, %vm759
        %v761 = vsel %vm760, %v753, %v757
        %v762 = vand.u32 2147483647, %v752
        %vm763 = vcmp.eq.f32.partialorder %v762, 8.507059e+37
        %v764 = vand.u32 %v752, 2147483648
        %v765 = vor.u32 1.1754944e-38, %v764
        %v766 = vsel %vm763, %v765, %v761
        %v767 = vld [vmem:[%s576] sm:$0xff]
        %769 = vset.pattern.permute.xlu0 0
        %770 = vperm.xlu0 %769, %v766
        %v771 = vpop.permute.xlu0 %770
        %v773 = vmul.f32 %v767, %v771
        %v774 = vld [vmem:[%s660] sm:$0xff]
        %v775 = vrcp.pop %v774
        %v776 = vmul.f32 %v774, %v775
        %v777 = vsub.f32 1.0, %v776
        %v778 = vmul.f32 %v775, %v777
        %v779 = vadd.f32 %v775, %v778
        %vm780 = vweird.f32 %v774
        %vm781 = vweird.f32 %v775
        %vm782 = vmor %vm780, %vm781
        %v783 = vsel %vm782, %v775, %v779
        %v784 = vand.u32 2147483647, %v774
        %vm785 = vcmp.eq.f32.partialorder %v784, 8.507059e+37
        %v786 = vand.u32 %v774, 2147483648
        %v787 = vor.u32 1.1754944e-38, %v786
        %v788 = vsel %vm785, %v787, %v783
        %v789 = vld [vmem:[%s668] sm:$0xff]
        %791 = vset.pattern.permute.xlu0 0
        %792 = vperm.xlu0 %791, %v788
        %v793 = vpop.permute.xlu0 %792
        %v795 = vmul.f32 %v789, %v793
        %797 = vrot.lane.b32.xlu0 %v751, 8
        %v798 = vpop.permute.xlu0 %797
        %801 = vrot.lane.b32.xlu0 %v773, 16
        %v802 = vpop.permute.xlu0 %801
        %805 = vrot.lane.b32.xlu0 %v795, 24
        %v806 = vpop.permute.xlu0 %805
        %v808 = vsel %vm342, %v729, %v798
        %vm809 = vcmask 130048
        %v810 = vsel %vm809, %v808, %v802
        %vm811 = vcmask 195584
        %v812 = vsel %vm811, %v810, %v806
        %vm813 = vcmask 261120
        %814 = vst.msk [vmem:[%s320] sm:$0xff] %vm813, %v812
      $region44: #{transformer_forward.11} parent=35 // pred_fallthru
        _
      %p815 = scmp.lt.s32.totalorder %s20, 1
      %s816 = scalar_select %p815, %s20, 1
      %p817 = scmp.lt.s32.totalorder %s21, 0
      %s818 = scalar_select %p817, %s21, 0
      %s819 = sadd.s32 %s818, %s816
      %s820 = smul.addr %s819, 8
      %s821 = scalar_lea.vmem %s4, %s820
      // Predicated region
      $region45: #{transformer_forward.11} parent=35 // pred_check
        %p822 = pneg %p166
      $region46: #{transformer_forward.11} parent=35 // pred_check_branch
        %824 = sbr.rel (%p822) target = $region48
      $region47: #{transformer_forward.11} parent=35 // pred_region
        _
      $region48: #{transformer_forward.11} parent=35 // pred_fallthru
        _
    $region36: #{transformer_forward.11} parent=5 // pred_fallthru
      _
    %p825 = scmp.le.s32.totalorder 2, %s10
    // Predicated region
    $region49: #{transformer_forward.11} parent=5 // pred_check
      %p826 = pneg %p825
    $region50: #{transformer_forward.11} parent=5 // pred_check_branch
      %828 = sbr.rel (%p826) target = $region52
    $region51: #{transformer_forward.11} parent=5 // pred_region
      %s829 = ssub.s32 %s10, 2
      // Predicated region
      $region53: #{transformer_forward.11} parent=51 // pred_check
        %p830 = pneg %p172
      $region54: #{transformer_forward.11} parent=51 // pred_check_branch
        %832 = sbr.rel (%p830) target = $region56
      $region55: #{transformer_forward.11} parent=51 // pred_region
        %p833 = scmp.lt.s32.totalorder %s23, 1
        %s834 = scalar_select %p833, %s23, 1
        %p835 = scmp.lt.s32.totalorder %s24, 0
        %s836 = scalar_select %p835, %s24, 0
        %s837 = sadd.s32 %s836, %s834
        %s838 = smul.addr %s837, 8
        %s839 = scalar_lea.vmem %s4, %s838
      $region56: #{transformer_forward.11} parent=51 // pred_fallthru
        _
    $region52: #{transformer_forward.11} parent=5 // pred_fallthru
      _
  $region6: #{transformer_forward.11} parent=0 // loop_footer
    %s14 = sadd.s32 1, %s10
  $region7: #{transformer_forward.11} parent=0 // loop_footer_branch
    %9 = sbr.rel target = $region3
  $region8: #{transformer_forward.11} parent=0 // loop_exit
    _

// kernel: transformer_forward.17
$region0: #{transformer_forward.17}
  #allocation0 [shape = 'u32[]', space=smem, size = 0x4, offset = 0x4, fixed_abs, tag = 'smem constant byte address 0x4 - core index']
  #allocation1 [shape = 'u32[72,128]{1,0:T(1,128)}', space=vmem, size = 0x9000, scoped, tag = 'internal scratch']
  #allocation2 [shape = 'f32[8,32]{1,0:T(8,128)}', space=vmem, size = 0x1000, scoped, tag = 'scratch operand']
  %s0 = inlined_call_operand.vmem [shape: f32[16,32], index: 0, kind: input, shape index: {}]
  %s1 = inlined_call_operand.vmem [shape: f32[32,32], index: 1, kind: input, shape index: {}]
  %s2 = inlined_call_operand.vmem [shape: f32[1,32], index: 2, kind: input, shape index: {}]
  %s3 = inlined_call_operand.vmem [shape: f32[16,32], index: 3, kind: input, shape index: {}]
  %s4 = inlined_call_operand.vmem [shape: f32[16,32], index: 4, kind: output, shape index: {}]
  %s5 = sld [smem:[#allocation0]]
  $region57: #{transformer_forward.17} parent=0
    _
  %s7 = ssub.s32 1, %s5
  %s8 = scalar_select 0, %s7, %s5
  loop: start=0, step=1, limit=4
  $region2: #{transformer_forward.17} parent=0 // loop_pre_header
    _
  $region3: #{transformer_forward.17} parent=0 // loop_header
    %s10 = sphi 0, %s14
    %p11 = scmp.ge.s32.totalorder %s10, 4
    %s17 = sphi 0, %s36
    %s18 = sphi 0, %s32
    %s19 = sphi 0, %s28
    %s20 = sphi 0, %s17
    %s21 = sphi 0, %s18
    %s22 = sphi 0, %s19
    %s23 = sphi 0, %s20
    %s24 = sphi 0, %s21
    %s25 = sphi 0, %s22
    %s41 = sphi 0, %s43
    %s44 = sphi 0, %s41
    %s45 = sphi 0, %s44
    %s61 = sphi 0, %s45
    %s69 = sphi 0, %s71
    %s72 = sphi 0, %s69
    %s73 = sphi 0, %s72
    %s89 = sphi 0, %s73
    %s95 = sphi 0, %s97
    %s98 = sphi 0, %s95
    %s99 = sphi 0, %s98
    %s115 = sphi 0, %s99
    %s123 = sphi 0, %s125
    %s126 = sphi 0, %s123
    %s127 = sphi 0, %s126
    %s143 = sphi 0, %s127
    %s151 = sphi 0, %s153
    %s154 = sphi 0, %s151
    %s155 = sphi 0, %s154
    %s171 = sphi 0, %s155
  $region4: #{transformer_forward.17} parent=0 // loop_header_branch
    %13 = sbr.rel (%p11) target = $region8
  $region5: #{transformer_forward.17} parent=0 // loop_body
    %s15 = ssub.s32 %s10, 1
    %s16 = ssub.s32 %s10, 2
    %s26 = sadd.s32 1, %s19
    %p27 = scmp.ge.s32.totalorder %s26, 1
    %s28 = scalar_select %p27, 0, %s26
    %s29 = sadd.s32 1, %s18
    %s30 = scalar_select %p27, %s29, %s18
    %p31 = scmp.ge.s32.totalorder %s30, 1
    %s32 = scalar_select %p31, 0, %s30
    %s33 = sadd.s32 1, %s17
    %s34 = scalar_select %p31, %s33, %s17
    %p35 = scmp.ge.s32.totalorder %s34, 2
    %s36 = scalar_select %p35, 0, %s34
    %s37 = ssub.s32 %s17, %s36
    %s38 = ssub.s32 %s19, %s28
    %s39 = sor.u32 %s37, %s38
    %p40 = scmp.eq.s32.totalorder %s39, 0
    %s42 = sadd.s32 %s41, 1
    %s43 = scalar_select %p40, %s41, %s42
    %p46 = pneg %p40
    %p47 = scmp.eq.s32.totalorder %s10, 1
    %p48 = por %p46, %p47
    %p49 = scmp.ne.s32.totalorder %s41, %s44
    %p50 = scmp.eq.s32.totalorder %s10, 0
    %p51 = por %p49, %p50
    %p52 = scmp.ne.s32.totalorder %s41, %s44
    %p53 = scmp.eq.s32.totalorder %s15, 1
    %p54 = por %p52, %p53
    %p55 = scmp.ne.s32.totalorder %s44, %s45
    %p56 = scmp.eq.s32.totalorder %s15, 0
    %p57 = por %p55, %p56
    %p58 = scmp.ne.s32.totalorder %s44, %s45
    %p59 = scmp.eq.s32.totalorder %s16, 1
    %p60 = por %p58, %p59
    %p62 = scmp.ne.s32.totalorder %s45, %s61
    %p63 = scmp.eq.s32.totalorder %s16, 0
    %p64 = por %p62, %p63
    %s65 = ssub.s32 %s19, %s28
    %s66 = ssub.s32 %s18, %s32
    %s67 = sor.u32 %s65, %s66
    %p68 = scmp.eq.s32.totalorder %s67, 0
    %s70 = sadd.s32 %s69, 1
    %s71 = scalar_select %p68, %s69, %s70
    %p74 = pneg %p68
    %p75 = scmp.eq.s32.totalorder %s10, 1
    %p76 = por %p74, %p75
    %p77 = scmp.ne.s32.totalorder %s69, %s72
    %p78 = scmp.eq.s32.totalorder %s10, 0
    %p79 = por %p77, %p78
    %p80 = scmp.ne.s32.totalorder %s69, %s72
    %p81 = scmp.eq.s32.totalorder %s15, 1
    %p82 = por %p80, %p81
    %p83 = scmp.ne.s32.totalorder %s72, %s73
    %p84 = scmp.eq.s32.totalorder %s15, 0
    %p85 = por %p83, %p84
    %p86 = scmp.ne.s32.totalorder %s72, %s73
    %p87 = scmp.eq.s32.totalorder %s16, 1
    %p88 = por %p86, %p87
    %p90 = scmp.ne.s32.totalorder %s73, %s89
    %p91 = scmp.eq.s32.totalorder %s16, 0
    %p92 = por %p90, %p91
    %s93 = ssub.s32 %s18, %s32
    %p94 = scmp.eq.s32.totalorder %s93, 0
    %s96 = sadd.s32 %s95, 1
    %s97 = scalar_select %p94, %s95, %s96
    %p100 = pneg %p94
    %p101 = scmp.eq.s32.totalorder %s10, 1
    %p102 = por %p100, %p101
    %p103 = scmp.ne.s32.totalorder %s95, %s98
    %p104 = scmp.eq.s32.totalorder %s10, 0
    %p105 = por %p103, %p104
    %p106 = scmp.ne.s32.totalorder %s95, %s98
    %p107 = scmp.eq.s32.totalorder %s15, 1
    %p108 = por %p106, %p107
    %p109 = scmp.ne.s32.totalorder %s98, %s99
    %p110 = scmp.eq.s32.totalorder %s15, 0
    %p111 = por %p109, %p110
    %p112 = scmp.ne.s32.totalorder %s98, %s99
    %p113 = scmp.eq.s32.totalorder %s16, 1
    %p114 = por %p112, %p113
    %p116 = scmp.ne.s32.totalorder %s99, %s115
    %p117 = scmp.eq.s32.totalorder %s16, 0
    %p118 = por %p116, %p117
    %s119 = ssub.s32 %s17, %s36
    %s120 = ssub.s32 %s18, %s32
    %s121 = sor.u32 %s119, %s120
    %p122 = scmp.eq.s32.totalorder %s121, 0
    %s124 = sadd.s32 %s123, 1
    %s125 = scalar_select %p122, %s123, %s124
    %p128 = pneg %p122
    %p129 = scmp.eq.s32.totalorder %s10, 1
    %p130 = por %p128, %p129
    %p131 = scmp.ne.s32.totalorder %s123, %s126
    %p132 = scmp.eq.s32.totalorder %s10, 0
    %p133 = por %p131, %p132
    %p134 = scmp.ne.s32.totalorder %s123, %s126
    %p135 = scmp.eq.s32.totalorder %s15, 1
    %p136 = por %p134, %p135
    %p137 = scmp.ne.s32.totalorder %s126, %s127
    %p138 = scmp.eq.s32.totalorder %s15, 0
    %p139 = por %p137, %p138
    %p140 = scmp.ne.s32.totalorder %s126, %s127
    %p141 = scmp.eq.s32.totalorder %s16, 1
    %p142 = por %p140, %p141
    %p144 = scmp.ne.s32.totalorder %s127, %s143
    %p145 = scmp.eq.s32.totalorder %s16, 0
    %p146 = por %p144, %p145
    %s147 = ssub.s32 %s17, %s36
    %s148 = ssub.s32 %s18, %s32
    %s149 = sor.u32 %s147, %s148
    %p150 = scmp.eq.s32.totalorder %s149, 0
    %s152 = sadd.s32 %s151, 1
    %s153 = scalar_select %p150, %s151, %s152
    %p156 = pneg %p150
    %p157 = scmp.eq.s32.totalorder %s10, 1
    %p158 = por %p156, %p157
    %p159 = scmp.ne.s32.totalorder %s151, %s154
    %p160 = scmp.eq.s32.totalorder %s10, 0
    %p161 = por %p159, %p160
    %p162 = scmp.ne.s32.totalorder %s151, %s154
    %p163 = scmp.eq.s32.totalorder %s15, 1
    %p164 = por %p162, %p163
    %p165 = scmp.ne.s32.totalorder %s154, %s155
    %p166 = scmp.eq.s32.totalorder %s15, 0
    %p167 = por %p165, %p166
    %p168 = scmp.ne.s32.totalorder %s154, %s155
    %p169 = scmp.eq.s32.totalorder %s16, 1
    %p170 = por %p168, %p169
    %p172 = scmp.ne.s32.totalorder %s155, %s171
    %p173 = scmp.eq.s32.totalorder %s16, 0
    %p174 = por %p172, %p173
    %p175 = scmp.le.s32.totalorder 1, %s10
    %p176 = scmp.lt.s32.totalorder %s10, 3
    %p177 = pnand %p175, %p176
    %p178 = pneg %p177
    // Predicated region
    $region9: #{transformer_forward.17} parent=5 // pred_check
      _
    $region10: #{transformer_forward.17} parent=5 // pred_check_branch
      %180 = sbr.rel (%p177) target = $region12
    $region11: #{transformer_forward.17} parent=5 // pred_region
      %s181 = ssub.s32 %s10, 1
      // Predicated region
      $region13: #{transformer_forward.17} parent=11 // pred_check
        %p182 = pneg %p85
      $region14: #{transformer_forward.17} parent=11 // pred_check_branch
        %184 = sbr.rel (%p182) target = $region16
      $region15: #{transformer_forward.17} parent=11 // pred_region
        %s185 = smul.u32 4, %s22
        %p186 = scmp.lt.s32.totalorder %s185, 3
        %s187 = scalar_select %p186, %s185, 3
        %p188 = scmp.lt.s32.totalorder %s21, 0
        %s189 = scalar_select %p188, %s21, 0
        %s190 = sadd.s32 %s189, %s187
        %s191 = smul.addr %s190, 8
        %s192 = scalar_lea.vmem %s1, %s191
        %s193 = smul.u32 4, %s22
      $region16: #{transformer_forward.17} parent=11 // pred_fallthru
        _
      // Predicated region
      $region17: #{transformer_forward.17} parent=11 // pred_check
        %p194 = pneg %p111
      $region18: #{transformer_forward.17} parent=11 // pred_check_branch
        %196 = sbr.rel (%p194) target = $region20
      $region19: #{transformer_forward.17} parent=11 // pred_region
        %p197 = scmp.lt.s32.totalorder %s21, 0
        %s198 = scalar_select %p197, %s21, 0
        %s199 = scalar_lea.vmem %s2, %s198
      $region20: #{transformer_forward.17} parent=11 // pred_fallthru
        _
    $region12: #{transformer_forward.17} parent=5 // pred_fallthru
      _
    %p200 = scmp.lt.s32.totalorder %s10, 2
    // Predicated region
    $region21: #{transformer_forward.17} parent=5 // pred_check
      %p201 = pneg %p200
    $region22: #{transformer_forward.17} parent=5 // pred_check_branch
      %203 = sbr.rel (%p201) target = $region24
    $region23: #{transformer_forward.17} parent=5 // pred_region
      // Predicated region
      $region25: #{transformer_forward.17} parent=23 // pred_check
        %p204 = pneg %p51
      $region26: #{transformer_forward.17} parent=23 // pred_check_branch
        %206 = sbr.rel (%p204) target = $region28
      $region27: #{transformer_forward.17} parent=23 // pred_region
        %p207 = scmp.lt.s32.totalorder %s17, 1
        %s208 = scalar_select %p207, %s17, 1
        %p209 = scmp.lt.s32.totalorder %s19, 0
        %s210 = scalar_select %p209, %s19, 0
        %s211 = sadd.s32 %s210, %s208
        %s212 = smul.addr %s211, 8
        %s213 = scalar_lea.vmem %s0, %s212
      $region28: #{transformer_forward.17} parent=23 // pred_fallthru
        _
      // Predicated region
      $region29: #{transformer_forward.17} parent=23 // pred_check
        %p214 = pneg %p133
      $region30: #{transformer_forward.17} parent=23 // pred_check_branch
        %216 = sbr.rel (%p214) target = $region32
      $region31: #{transformer_forward.17} parent=23 // pred_region
        %p217 = scmp.lt.s32.totalorder %s17, 1
        %s218 = scalar_select %p217, %s17, 1
        %p219 = scmp.lt.s32.totalorder %s18, 0
        %s220 = scalar_select %p219, %s18, 0
        %s221 = sadd.s32 %s220, %s218
        %s222 = smul.addr %s221, 8
        %s223 = scalar_lea.vmem %s3, %s222
      $region32: #{transformer_forward.17} parent=23 // pred_fallthru
        _
    $region24: #{transformer_forward.17} parent=5 // pred_fallthru
      _
    %p224 = scmp.le.s32.totalorder 1, %s10
    %p225 = scmp.lt.s32.totalorder %s10, 3
    %p226 = pnand %p224, %p225
    %p227 = pneg %p226
    // Predicated region
    $region33: #{transformer_forward.17} parent=5 // pred_check
      _
    $region34: #{transformer_forward.17} parent=5 // pred_check_branch
      %229 = sbr.rel (%p226) target = $region36
    $region35: #{transformer_forward.17} parent=5 // pred_region
      %s230 = ssub.s32 %s10, 1
      %p231 = scmp.lt.s32.totalorder %s20, 1
      %s232 = scalar_select %p231, %s20, 1
      %p233 = scmp.lt.s32.totalorder %s22, 0
      %s234 = scalar_select %p233, %s22, 0
      %s235 = sadd.s32 %s234, %s232
      %s236 = smul.addr %s235, 8
      %s237 = scalar_lea.vmem %s0, %s236
      %p238 = pneg %p57
      %p239 = pneg %p54
      %s240 = smul.u32 4, %s22
      %p241 = scmp.lt.s32.totalorder %s240, 3
      %s242 = scalar_select %p241, %s240, 3
      %p243 = scmp.lt.s32.totalorder %s21, 0
      %s244 = scalar_select %p243, %s21, 0
      %s245 = sadd.s32 %s244, %s242
      %s246 = smul.addr %s245, 8
      %s247 = scalar_lea.vmem %s1, %s246
      %p248 = pneg %p85
      %p249 = pneg %p82
      %p250 = scmp.lt.s32.totalorder %s21, 0
      %s251 = scalar_select %p250, %s21, 0
      %s252 = scalar_lea.vmem %s2, %s251
      %p253 = pneg %p111
      %p254 = pneg %p108
      %p255 = scmp.lt.s32.totalorder %s20, 1
      %s256 = scalar_select %p255, %s20, 1
      %p257 = scmp.lt.s32.totalorder %s21, 0
      %s258 = scalar_select %p257, %s21, 0
      %s259 = sadd.s32 %s258, %s256
      %s260 = smul.addr %s259, 8
      %s261 = scalar_lea.vmem %s3, %s260
      %p262 = pneg %p139
      %p263 = pneg %p136
      %p264 = pneg %p167
      %p265 = pneg %p164
      %p266 = scmp.lt.s32.totalorder %s20, 1
      %s267 = scalar_select %p266, %s20, 1
      %p268 = scmp.lt.s32.totalorder %s21, 0
      %s269 = scalar_select %p268, %s21, 0
      %s270 = sadd.s32 %s269, %s267
      %s271 = smul.addr %s270, 8
      %s272 = scalar_lea.vmem %s4, %s271
      %p273 = scmp.lt.s32.totalorder %s20, 1
      %s274 = scalar_select %p273, %s20, 1
      %p275 = scmp.lt.s32.totalorder %s22, 0
      %s276 = scalar_select %p275, %s22, 0
      %s277 = sadd.s32 %s276, %s274
      %s278 = smul.addr %s277, 8
      %s279 = scalar_lea.vmem %s0, %s278
      %s280 = smul.u32 4, %s22
      %p281 = scmp.lt.s32.totalorder %s280, 3
      %s282 = scalar_select %p281, %s280, 3
      %p283 = scmp.lt.s32.totalorder %s21, 0
      %s284 = scalar_select %p283, %s21, 0
      %s285 = sadd.s32 %s284, %s282
      %s286 = smul.addr %s285, 8
      %s287 = scalar_lea.vmem %s1, %s286
      %s288 = smul.u32 4, %s22
      %p289 = scmp.lt.s32.totalorder %s21, 0
      %s290 = scalar_select %p289, %s21, 0
      %s291 = scalar_lea.vmem %s2, %s290
      %p292 = scmp.lt.s32.totalorder %s20, 1
      %s293 = scalar_select %p292, %s20, 1
      %p294 = scmp.lt.s32.totalorder %s21, 0
      %s295 = scalar_select %p294, %s21, 0
      %s296 = sadd.s32 %s295, %s293
      %s297 = smul.addr %s296, 8
      %s298 = scalar_lea.vmem %s3, %s297
      %p299 = scmp.lt.s32.totalorder %s20, 1
      %s300 = scalar_select %p299, %s20, 1
      %p301 = scmp.lt.s32.totalorder %s21, 0
      %s302 = scalar_select %p301, %s21, 0
      %s303 = sadd.s32 %s302, %s300
      %s304 = smul.addr %s303, 8
      %s305 = scalar_lea.vmem %s4, %s304
      %p306 = scmp.eq.s32.totalorder %s22, 0
      // Predicated region
      $region37: #{transformer_forward.17} parent=35 // pred_check
        %p307 = pneg %p306
      $region38: #{transformer_forward.17} parent=35 // pred_check_branch
        %309 = sbr.rel (%p307) target = $region40
      $region39: #{transformer_forward.17} parent=35 // pred_region
        %vm310 = vcmask 261120
        %311 = vst.msk [vmem:[#allocation2] sm:$0xff] %vm310, 0.0
      $region40: #{transformer_forward.17} parent=35 // pred_fallthru
        _
      %v312 = vld [vmem:[#allocation2] sm:$0xff]
      %v313 = vld [vmem:[%s279] sm:$0xff]
      %v314 = vld [vmem:[%s287] sm:$0xff]
      %v315 = vld [vmem:[%s287 + $0x8] sm:$0xff]
      %v316 = vld [vmem:[%s287 + $0x10] sm:$0xff]
      %v317 = vld [vmem:[%s287 + $0x18] sm:$0xff]
      %vm318 = vcmask 261120
      %v320 = vsel %vm318, %v313, 0
      %322 = vmatpush.msra.mxu0 0.0
      %323 = vmatpush.msra.mxu0 0.0
      %324 = vmatpush.msra.mxu0 0.0
      %325 = vmatpush.msra.mxu0 0.0
      %326 = vmatpush.msra.mxu0 0.0
      %327 = vmatpush.msra.mxu0 0.0
      %328 = vmatpush.msra.mxu0 0.0
      %329 = vmatpush.msra.mxu0 0.0
      %330 = vmatpush.msra.mxu0 0.0
      %331 = vmatpush.msra.mxu0 0.0
      %332 = vmatpush.msra.mxu0 0.0
      %333 = vmatpush.msra.mxu0 0.0
      %334 = vmatpush.msra.mxu0 %v317
      %335 = vmatpush.msra.mxu0 %v316
      %336 = vmatpush.msra.mxu0 %v315
      %337 = vmatpush.msra.mxu0 %v314
      %338 = vmatmul.f32.gmra.mxu0 %v320
      %v339 = vpop.f32.mrf.mxu0
      %v340 = vadd.f32 0.0, %v339
      %341 = vdwg.mxu0
      %v342 = vadd.f32 %v312, %v340
      %343 = vst.msk [vmem:[#allocation2] sm:$0xff] %vm318, %v342
      // Predicated region
      $region41: #{transformer_forward.17} parent=35 // pred_check
        %p344 = pneg %p306
      $region42: #{transformer_forward.17} parent=35 // pred_check_branch
        %346 = sbr.rel (%p344) target = $region44
      $region43: #{transformer_forward.17} parent=35 // pred_region
        %v347 = vld [vmem:[#allocation2] sm:$0xff]
        %v348 = vld [vmem:[%s291] sm:$0x1]
        %v350 = vperm.slane %v348, 0
        %v352 = vadd.f32 %v347, %v350
        %v353 = vld [vmem:[%s298] sm:$0xff]
        %v354 = vadd.f32 %v352, %v353
        %355 = vst.msk [vmem:[%s305] sm:$0xff] %vm318, %v354
      $region44: #{transformer_forward.17} parent=35 // pred_fallthru
        _
      %p356 = scmp.lt.s32.totalorder %s20, 1
      %s357 = scalar_select %p356, %s20, 1
      %p358 = scmp.lt.s32.totalorder %s21, 0
      %s359 = scalar_select %p358, %s21, 0
      %s360 = sadd.s32 %s359, %s357
      %s361 = smul.addr %s360, 8
      %s362 = scalar_lea.vmem %s4, %s361
      // Predicated region
      $region45: #{transformer_forward.17} parent=35 // pred_check
        %p363 = pneg %p164
      $region46: #{transformer_forward.17} parent=35 // pred_check_branch
        %365 = sbr.rel (%p363) target = $region48
      $region47: #{transformer_forward.17} parent=35 // pred_region
        _
      $region48: #{transformer_forward.17} parent=35 // pred_fallthru
        _
    $region36: #{transformer_forward.17} parent=5 // pred_fallthru
      _
    %p366 = scmp.le.s32.totalorder 2, %s10
    // Predicated region
    $region49: #{transformer_forward.17} parent=5 // pred_check
      %p367 = pneg %p366
    $region50: #{transformer_forward.17} parent=5 // pred_check_branch
      %369 = sbr.rel (%p367) target = $region52
    $region51: #{transformer_forward.17} parent=5 // pred_region
      %s370 = ssub.s32 %s10, 2
      // Predicated region
      $region53: #{transformer_forward.17} parent=51 // pred_check
        %p371 = pneg %p170
      $region54: #{transformer_forward.17} parent=51 // pred_check_branch
        %373 = sbr.rel (%p371) target = $region56
      $region55: #{transformer_forward.17} parent=51 // pred_region
        %p374 = scmp.lt.s32.totalorder %s23, 1
        %s375 = scalar_select %p374, %s23, 1
        %p376 = scmp.lt.s32.totalorder %s24, 0
        %s377 = scalar_select %p376, %s24, 0
        %s378 = sadd.s32 %s377, %s375
        %s379 = smul.addr %s378, 8
        %s380 = scalar_lea.vmem %s4, %s379
      $region56: #{transformer_forward.17} parent=51 // pred_fallthru
        _
    $region52: #{transformer_forward.17} parent=5 // pred_fallthru
      _
  $region6: #{transformer_forward.17} parent=0 // loop_footer
    %s14 = sadd.s32 1, %s10
  $region7: #{transformer_forward.17} parent=0 // loop_footer_branch
    %9 = sbr.rel target = $region3
  $region8: #{transformer_forward.17} parent=0 // loop_exit
    _

// kernel: transformer_forward.14
$region0: #{transformer_forward.14}
  #allocation0 [shape = 'u32[]', space=smem, size = 0x4, offset = 0x4, fixed_abs, tag = 'smem constant byte address 0x4 - core index']
  #allocation1 [shape = 'u32[72,128]{1,0:T(1,128)}', space=vmem, size = 0x9000, scoped, tag = 'internal scratch']
  #allocation2 [shape = 'f32[8,32]{1,0:T(8,128)}', space=vmem, size = 0x1000, scoped, tag = 'scratch operand']
  %s0 = inlined_call_operand.vmem [shape: f32[16,64], index: 0, kind: input, shape index: {}]
  %s1 = inlined_call_operand.vmem [shape: f32[64,32], index: 1, kind: input, shape index: {}]
  %s2 = inlined_call_operand.vmem [shape: f32[1,32], index: 2, kind: input, shape index: {}]
  %s3 = inlined_call_operand.vmem [shape: f32[16,32], index: 3, kind: input, shape index: {}]
  %s4 = inlined_call_operand.vmem [shape: f32[16,32], index: 4, kind: output, shape index: {}]
  %s5 = sld [smem:[#allocation0]]
  $region57: #{transformer_forward.14} parent=0
    _
  %s7 = ssub.s32 1, %s5
  %s8 = scalar_select 0, %s7, %s5
  loop: start=0, step=1, limit=4
  $region2: #{transformer_forward.14} parent=0 // loop_pre_header
    _
  $region3: #{transformer_forward.14} parent=0 // loop_header
    %s10 = sphi 0, %s14
    %p11 = scmp.ge.s32.totalorder %s10, 4
    %s17 = sphi 0, %s36
    %s18 = sphi 0, %s32
    %s19 = sphi 0, %s28
    %s20 = sphi 0, %s17
    %s21 = sphi 0, %s18
    %s22 = sphi 0, %s19
    %s23 = sphi 0, %s20
    %s24 = sphi 0, %s21
    %s25 = sphi 0, %s22
    %s41 = sphi 0, %s43
    %s44 = sphi 0, %s41
    %s45 = sphi 0, %s44
    %s61 = sphi 0, %s45
    %s69 = sphi 0, %s71
    %s72 = sphi 0, %s69
    %s73 = sphi 0, %s72
    %s89 = sphi 0, %s73
    %s95 = sphi 0, %s97
    %s98 = sphi 0, %s95
    %s99 = sphi 0, %s98
    %s115 = sphi 0, %s99
    %s123 = sphi 0, %s125
    %s126 = sphi 0, %s123
    %s127 = sphi 0, %s126
    %s143 = sphi 0, %s127
    %s151 = sphi 0, %s153
    %s154 = sphi 0, %s151
    %s155 = sphi 0, %s154
    %s171 = sphi 0, %s155
  $region4: #{transformer_forward.14} parent=0 // loop_header_branch
    %13 = sbr.rel (%p11) target = $region8
  $region5: #{transformer_forward.14} parent=0 // loop_body
    %s15 = ssub.s32 %s10, 1
    %s16 = ssub.s32 %s10, 2
    %s26 = sadd.s32 1, %s19
    %p27 = scmp.ge.s32.totalorder %s26, 1
    %s28 = scalar_select %p27, 0, %s26
    %s29 = sadd.s32 1, %s18
    %s30 = scalar_select %p27, %s29, %s18
    %p31 = scmp.ge.s32.totalorder %s30, 1
    %s32 = scalar_select %p31, 0, %s30
    %s33 = sadd.s32 1, %s17
    %s34 = scalar_select %p31, %s33, %s17
    %p35 = scmp.ge.s32.totalorder %s34, 2
    %s36 = scalar_select %p35, 0, %s34
    %s37 = ssub.s32 %s17, %s36
    %s38 = ssub.s32 %s19, %s28
    %s39 = sor.u32 %s37, %s38
    %p40 = scmp.eq.s32.totalorder %s39, 0
    %s42 = sadd.s32 %s41, 1
    %s43 = scalar_select %p40, %s41, %s42
    %p46 = pneg %p40
    %p47 = scmp.eq.s32.totalorder %s10, 1
    %p48 = por %p46, %p47
    %p49 = scmp.ne.s32.totalorder %s41, %s44
    %p50 = scmp.eq.s32.totalorder %s10, 0
    %p51 = por %p49, %p50
    %p52 = scmp.ne.s32.totalorder %s41, %s44
    %p53 = scmp.eq.s32.totalorder %s15, 1
    %p54 = por %p52, %p53
    %p55 = scmp.ne.s32.totalorder %s44, %s45
    %p56 = scmp.eq.s32.totalorder %s15, 0
    %p57 = por %p55, %p56
    %p58 = scmp.ne.s32.totalorder %s44, %s45
    %p59 = scmp.eq.s32.totalorder %s16, 1
    %p60 = por %p58, %p59
    %p62 = scmp.ne.s32.totalorder %s45, %s61
    %p63 = scmp.eq.s32.totalorder %s16, 0
    %p64 = por %p62, %p63
    %s65 = ssub.s32 %s19, %s28
    %s66 = ssub.s32 %s18, %s32
    %s67 = sor.u32 %s65, %s66
    %p68 = scmp.eq.s32.totalorder %s67, 0
    %s70 = sadd.s32 %s69, 1
    %s71 = scalar_select %p68, %s69, %s70
    %p74 = pneg %p68
    %p75 = scmp.eq.s32.totalorder %s10, 1
    %p76 = por %p74, %p75
    %p77 = scmp.ne.s32.totalorder %s69, %s72
    %p78 = scmp.eq.s32.totalorder %s10, 0
    %p79 = por %p77, %p78
    %p80 = scmp.ne.s32.totalorder %s69, %s72
    %p81 = scmp.eq.s32.totalorder %s15, 1
    %p82 = por %p80, %p81
    %p83 = scmp.ne.s32.totalorder %s72, %s73
    %p84 = scmp.eq.s32.totalorder %s15, 0
    %p85 = por %p83, %p84
    %p86 = scmp.ne.s32.totalorder %s72, %s73
    %p87 = scmp.eq.s32.totalorder %s16, 1
    %p88 = por %p86, %p87
    %p90 = scmp.ne.s32.totalorder %s73, %s89
    %p91 = scmp.eq.s32.totalorder %s16, 0
    %p92 = por %p90, %p91
    %s93 = ssub.s32 %s18, %s32
    %p94 = scmp.eq.s32.totalorder %s93, 0
    %s96 = sadd.s32 %s95, 1
    %s97 = scalar_select %p94, %s95, %s96
    %p100 = pneg %p94
    %p101 = scmp.eq.s32.totalorder %s10, 1
    %p102 = por %p100, %p101
    %p103 = scmp.ne.s32.totalorder %s95, %s98
    %p104 = scmp.eq.s32.totalorder %s10, 0
    %p105 = por %p103, %p104
    %p106 = scmp.ne.s32.totalorder %s95, %s98
    %p107 = scmp.eq.s32.totalorder %s15, 1
    %p108 = por %p106, %p107
    %p109 = scmp.ne.s32.totalorder %s98, %s99
    %p110 = scmp.eq.s32.totalorder %s15, 0
    %p111 = por %p109, %p110
    %p112 = scmp.ne.s32.totalorder %s98, %s99
    %p113 = scmp.eq.s32.totalorder %s16, 1
    %p114 = por %p112, %p113
    %p116 = scmp.ne.s32.totalorder %s99, %s115
    %p117 = scmp.eq.s32.totalorder %s16, 0
    %p118 = por %p116, %p117
    %s119 = ssub.s32 %s17, %s36
    %s120 = ssub.s32 %s18, %s32
    %s121 = sor.u32 %s119, %s120
    %p122 = scmp.eq.s32.totalorder %s121, 0
    %s124 = sadd.s32 %s123, 1
    %s125 = scalar_select %p122, %s123, %s124
    %p128 = pneg %p122
    %p129 = scmp.eq.s32.totalorder %s10, 1
    %p130 = por %p128, %p129
    %p131 = scmp.ne.s32.totalorder %s123, %s126
    %p132 = scmp.eq.s32.totalorder %s10, 0
    %p133 = por %p131, %p132
    %p134 = scmp.ne.s32.totalorder %s123, %s126
    %p135 = scmp.eq.s32.totalorder %s15, 1
    %p136 = por %p134, %p135
    %p137 = scmp.ne.s32.totalorder %s126, %s127
    %p138 = scmp.eq.s32.totalorder %s15, 0
    %p139 = por %p137, %p138
    %p140 = scmp.ne.s32.totalorder %s126, %s127
    %p141 = scmp.eq.s32.totalorder %s16, 1
    %p142 = por %p140, %p141
    %p144 = scmp.ne.s32.totalorder %s127, %s143
    %p145 = scmp.eq.s32.totalorder %s16, 0
    %p146 = por %p144, %p145
    %s147 = ssub.s32 %s17, %s36
    %s148 = ssub.s32 %s18, %s32
    %s149 = sor.u32 %s147, %s148
    %p150 = scmp.eq.s32.totalorder %s149, 0
    %s152 = sadd.s32 %s151, 1
    %s153 = scalar_select %p150, %s151, %s152
    %p156 = pneg %p150
    %p157 = scmp.eq.s32.totalorder %s10, 1
    %p158 = por %p156, %p157
    %p159 = scmp.ne.s32.totalorder %s151, %s154
    %p160 = scmp.eq.s32.totalorder %s10, 0
    %p161 = por %p159, %p160
    %p162 = scmp.ne.s32.totalorder %s151, %s154
    %p163 = scmp.eq.s32.totalorder %s15, 1
    %p164 = por %p162, %p163
    %p165 = scmp.ne.s32.totalorder %s154, %s155
    %p166 = scmp.eq.s32.totalorder %s15, 0
    %p167 = por %p165, %p166
    %p168 = scmp.ne.s32.totalorder %s154, %s155
    %p169 = scmp.eq.s32.totalorder %s16, 1
    %p170 = por %p168, %p169
    %p172 = scmp.ne.s32.totalorder %s155, %s171
    %p173 = scmp.eq.s32.totalorder %s16, 0
    %p174 = por %p172, %p173
    %p175 = scmp.le.s32.totalorder 1, %s10
    %p176 = scmp.lt.s32.totalorder %s10, 3
    %p177 = pnand %p175, %p176
    %p178 = pneg %p177
    // Predicated region
    $region9: #{transformer_forward.14} parent=5 // pred_check
      _
    $region10: #{transformer_forward.14} parent=5 // pred_check_branch
      %180 = sbr.rel (%p177) target = $region12
    $region11: #{transformer_forward.14} parent=5 // pred_region
      %s181 = ssub.s32 %s10, 1
      // Predicated region
      $region13: #{transformer_forward.14} parent=11 // pred_check
        %p182 = pneg %p85
      $region14: #{transformer_forward.14} parent=11 // pred_check_branch
        %184 = sbr.rel (%p182) target = $region16
      $region15: #{transformer_forward.14} parent=11 // pred_region
        %s185 = smul.u32 8, %s22
        %p186 = scmp.lt.s32.totalorder %s185, 7
        %s187 = scalar_select %p186, %s185, 7
        %p188 = scmp.lt.s32.totalorder %s21, 0
        %s189 = scalar_select %p188, %s21, 0
        %s190 = sadd.s32 %s189, %s187
        %s191 = smul.addr %s190, 8
        %s192 = scalar_lea.vmem %s1, %s191
        %s193 = smul.u32 8, %s22
      $region16: #{transformer_forward.14} parent=11 // pred_fallthru
        _
      // Predicated region
      $region17: #{transformer_forward.14} parent=11 // pred_check
        %p194 = pneg %p111
      $region18: #{transformer_forward.14} parent=11 // pred_check_branch
        %196 = sbr.rel (%p194) target = $region20
      $region19: #{transformer_forward.14} parent=11 // pred_region
        %p197 = scmp.lt.s32.totalorder %s21, 0
        %s198 = scalar_select %p197, %s21, 0
        %s199 = scalar_lea.vmem %s2, %s198
      $region20: #{transformer_forward.14} parent=11 // pred_fallthru
        _
    $region12: #{transformer_forward.14} parent=5 // pred_fallthru
      _
    %p200 = scmp.lt.s32.totalorder %s10, 2
    // Predicated region
    $region21: #{transformer_forward.14} parent=5 // pred_check
      %p201 = pneg %p200
    $region22: #{transformer_forward.14} parent=5 // pred_check_branch
      %203 = sbr.rel (%p201) target = $region24
    $region23: #{transformer_forward.14} parent=5 // pred_region
      // Predicated region
      $region25: #{transformer_forward.14} parent=23 // pred_check
        %p204 = pneg %p51
      $region26: #{transformer_forward.14} parent=23 // pred_check_branch
        %206 = sbr.rel (%p204) target = $region28
      $region27: #{transformer_forward.14} parent=23 // pred_region
        %p207 = scmp.lt.s32.totalorder %s17, 1
        %s208 = scalar_select %p207, %s17, 1
        %p209 = scmp.lt.s32.totalorder %s19, 0
        %s210 = scalar_select %p209, %s19, 0
        %s211 = sadd.s32 %s210, %s208
        %s212 = smul.addr %s211, 8
        %s213 = scalar_lea.vmem %s0, %s212
      $region28: #{transformer_forward.14} parent=23 // pred_fallthru
        _
      // Predicated region
      $region29: #{transformer_forward.14} parent=23 // pred_check
        %p214 = pneg %p133
      $region30: #{transformer_forward.14} parent=23 // pred_check_branch
        %216 = sbr.rel (%p214) target = $region32
      $region31: #{transformer_forward.14} parent=23 // pred_region
        %p217 = scmp.lt.s32.totalorder %s17, 1
        %s218 = scalar_select %p217, %s17, 1
        %p219 = scmp.lt.s32.totalorder %s18, 0
        %s220 = scalar_select %p219, %s18, 0
        %s221 = sadd.s32 %s220, %s218
        %s222 = smul.addr %s221, 8
        %s223 = scalar_lea.vmem %s3, %s222
      $region32: #{transformer_forward.14} parent=23 // pred_fallthru
        _
    $region24: #{transformer_forward.14} parent=5 // pred_fallthru
      _
    %p224 = scmp.le.s32.totalorder 1, %s10
    %p225 = scmp.lt.s32.totalorder %s10, 3
    %p226 = pnand %p224, %p225
    %p227 = pneg %p226
    // Predicated region
    $region33: #{transformer_forward.14} parent=5 // pred_check
      _
    $region34: #{transformer_forward.14} parent=5 // pred_check_branch
      %229 = sbr.rel (%p226) target = $region36
    $region35: #{transformer_forward.14} parent=5 // pred_region
      %s230 = ssub.s32 %s10, 1
      %p231 = scmp.lt.s32.totalorder %s20, 1
      %s232 = scalar_select %p231, %s20, 1
      %p233 = scmp.lt.s32.totalorder %s22, 0
      %s234 = scalar_select %p233, %s22, 0
      %s235 = sadd.s32 %s234, %s232
      %s236 = smul.addr %s235, 8
      %s237 = scalar_lea.vmem %s0, %s236
      %p238 = pneg %p57
      %p239 = pneg %p54
      %s240 = smul.u32 8, %s22
      %p241 = scmp.lt.s32.totalorder %s240, 7
      %s242 = scalar_select %p241, %s240, 7
      %p243 = scmp.lt.s32.totalorder %s21, 0
      %s244 = scalar_select %p243, %s21, 0
      %s245 = sadd.s32 %s244, %s242
      %s246 = smul.addr %s245, 8
      %s247 = scalar_lea.vmem %s1, %s246
      %p248 = pneg %p85
      %p249 = pneg %p82
      %p250 = scmp.lt.s32.totalorder %s21, 0
      %s251 = scalar_select %p250, %s21, 0
      %s252 = scalar_lea.vmem %s2, %s251
      %p253 = pneg %p111
      %p254 = pneg %p108
      %p255 = scmp.lt.s32.totalorder %s20, 1
      %s256 = scalar_select %p255, %s20, 1
      %p257 = scmp.lt.s32.totalorder %s21, 0
      %s258 = scalar_select %p257, %s21, 0
      %s259 = sadd.s32 %s258, %s256
      %s260 = smul.addr %s259, 8
      %s261 = scalar_lea.vmem %s3, %s260
      %p262 = pneg %p139
      %p263 = pneg %p136
      %p264 = pneg %p167
      %p265 = pneg %p164
      %p266 = scmp.lt.s32.totalorder %s20, 1
      %s267 = scalar_select %p266, %s20, 1
      %p268 = scmp.lt.s32.totalorder %s21, 0
      %s269 = scalar_select %p268, %s21, 0
      %s270 = sadd.s32 %s269, %s267
      %s271 = smul.addr %s270, 8
      %s272 = scalar_lea.vmem %s4, %s271
      %p273 = scmp.lt.s32.totalorder %s20, 1
      %s274 = scalar_select %p273, %s20, 1
      %p275 = scmp.lt.s32.totalorder %s22, 0
      %s276 = scalar_select %p275, %s22, 0
      %s277 = sadd.s32 %s276, %s274
      %s278 = smul.addr %s277, 8
      %s279 = scalar_lea.vmem %s0, %s278
      %s280 = smul.u32 8, %s22
      %p281 = scmp.lt.s32.totalorder %s280, 7
      %s282 = scalar_select %p281, %s280, 7
      %p283 = scmp.lt.s32.totalorder %s21, 0
      %s284 = scalar_select %p283, %s21, 0
      %s285 = sadd.s32 %s284, %s282
      %s286 = smul.addr %s285, 8
      %s287 = scalar_lea.vmem %s1, %s286
      %s288 = smul.u32 8, %s22
      %p289 = scmp.lt.s32.totalorder %s21, 0
      %s290 = scalar_select %p289, %s21, 0
      %s291 = scalar_lea.vmem %s2, %s290
      %p292 = scmp.lt.s32.totalorder %s20, 1
      %s293 = scalar_select %p292, %s20, 1
      %p294 = scmp.lt.s32.totalorder %s21, 0
      %s295 = scalar_select %p294, %s21, 0
      %s296 = sadd.s32 %s295, %s293
      %s297 = smul.addr %s296, 8
      %s298 = scalar_lea.vmem %s3, %s297
      %p299 = scmp.lt.s32.totalorder %s20, 1
      %s300 = scalar_select %p299, %s20, 1
      %p301 = scmp.lt.s32.totalorder %s21, 0
      %s302 = scalar_select %p301, %s21, 0
      %s303 = sadd.s32 %s302, %s300
      %s304 = smul.addr %s303, 8
      %s305 = scalar_lea.vmem %s4, %s304
      %p306 = scmp.eq.s32.totalorder %s22, 0
      // Predicated region
      $region37: #{transformer_forward.14} parent=35 // pred_check
        %p307 = pneg %p306
      $region38: #{transformer_forward.14} parent=35 // pred_check_branch
        %309 = sbr.rel (%p307) target = $region40
      $region39: #{transformer_forward.14} parent=35 // pred_region
        %vm310 = vcmask 261120
        %311 = vst.msk [vmem:[#allocation2] sm:$0xff] %vm310, 0.0
      $region40: #{transformer_forward.14} parent=35 // pred_fallthru
        _
      %v312 = vld [vmem:[#allocation2] sm:$0xff]
      %v313 = vld [vmem:[%s279] sm:$0xff]
      %v314 = vld [vmem:[%s287] sm:$0xff]
      %v315 = vld [vmem:[%s287 + $0x8] sm:$0xff]
      %v316 = vld [vmem:[%s287 + $0x10] sm:$0xff]
      %v317 = vld [vmem:[%s287 + $0x18] sm:$0xff]
      %v318 = vld [vmem:[%s287 + $0x20] sm:$0xff]
      %v319 = vld [vmem:[%s287 + $0x28] sm:$0xff]
      %v320 = vld [vmem:[%s287 + $0x30] sm:$0xff]
      %v321 = vld [vmem:[%s287 + $0x38] sm:$0xff]
      %vm322 = vcmask 523264
      %v324 = vsel %vm322, %v313, 0
      %326 = vmatpush.msra.mxu0 0.0
      %327 = vmatpush.msra.mxu0 0.0
      %328 = vmatpush.msra.mxu0 0.0
      %329 = vmatpush.msra.mxu0 0.0
      %330 = vmatpush.msra.mxu0 0.0
      %331 = vmatpush.msra.mxu0 0.0
      %332 = vmatpush.msra.mxu0 0.0
      %333 = vmatpush.msra.mxu0 0.0
      %334 = vmatpush.msra.mxu0 %v321
      %335 = vmatpush.msra.mxu0 %v320
      %336 = vmatpush.msra.mxu0 %v319
      %337 = vmatpush.msra.mxu0 %v318
      %338 = vmatpush.msra.mxu0 %v317
      %339 = vmatpush.msra.mxu0 %v316
      %340 = vmatpush.msra.mxu0 %v315
      %341 = vmatpush.msra.mxu0 %v314
      %342 = vmatmul.f32.gmra.mxu0 %v324
      %v343 = vpop.f32.mrf.mxu0
      %v344 = vadd.f32 0.0, %v343
      %345 = vdwg.mxu0
      %v346 = vadd.f32 %v312, %v344
      %vm347 = vcmask 261120
      %348 = vst.msk [vmem:[#allocation2] sm:$0xff] %vm347, %v346
      // Predicated region
      $region41: #{transformer_forward.14} parent=35 // pred_check
        %p349 = pneg %p306
      $region42: #{transformer_forward.14} parent=35 // pred_check_branch
        %351 = sbr.rel (%p349) target = $region44
      $region43: #{transformer_forward.14} parent=35 // pred_region
        %v352 = vld [vmem:[#allocation2] sm:$0xff]
        %v353 = vld [vmem:[%s291] sm:$0x1]
        %v355 = vperm.slane %v353, 0
        %v357 = vadd.f32 %v352, %v355
        %v358 = vld [vmem:[%s298] sm:$0xff]
        %v359 = vadd.f32 %v357, %v358
        %360 = vst.msk [vmem:[%s305] sm:$0xff] %vm347, %v359
      $region44: #{transformer_forward.14} parent=35 // pred_fallthru
        _
      %p361 = scmp.lt.s32.totalorder %s20, 1
      %s362 = scalar_select %p361, %s20, 1
      %p363 = scmp.lt.s32.totalorder %s21, 0
      %s364 = scalar_select %p363, %s21, 0
      %s365 = sadd.s32 %s364, %s362
      %s366 = smul.addr %s365, 8
      %s367 = scalar_lea.vmem %s4, %s366
      // Predicated region
      $region45: #{transformer_forward.14} parent=35 // pred_check
        %p368 = pneg %p164
      $region46: #{transformer_forward.14} parent=35 // pred_check_branch
        %370 = sbr.rel (%p368) target = $region48
      $region47: #{transformer_forward.14} parent=35 // pred_region
        _
      $region48: #{transformer_forward.14} parent=35 // pred_fallthru
        _
    $region36: #{transformer_forward.14} parent=5 // pred_fallthru
      _
    %p371 = scmp.le.s32.totalorder 2, %s10
    // Predicated region
    $region49: #{transformer_forward.14} parent=5 // pred_check
      %p372 = pneg %p371
    $region50: #{transformer_forward.14} parent=5 // pred_check_branch
      %374 = sbr.rel (%p372) target = $region52
    $region51: #{transformer_forward.14} parent=5 // pred_region
      %s375 = ssub.s32 %s10, 2
      // Predicated region
      $region53: #{transformer_forward.14} parent=51 // pred_check
        %p376 = pneg %p170
      $region54: #{transformer_forward.14} parent=51 // pred_check_branch
        %378 = sbr.rel (%p376) target = $region56
      $region55: #{transformer_forward.14} parent=51 // pred_region
        %p379 = scmp.lt.s32.totalorder %s23, 1
        %s380 = scalar_select %p379, %s23, 1
        %p381 = scmp.lt.s32.totalorder %s24, 0
        %s382 = scalar_select %p381, %s24, 0
        %s383 = sadd.s32 %s382, %s380
        %s384 = smul.addr %s383, 8
        %s385 = scalar_lea.vmem %s4, %s384
      $region56: #{transformer_forward.14} parent=51 // pred_fallthru
        _
    $region52: #{transformer_forward.14} parent=5 // pred_fallthru
      _
  $region6: #{transformer_forward.14} parent=0 // loop_footer
    %s14 = sadd.s32 1, %s10
  $region7: #{transformer_forward.14} parent=0 // loop_footer_branch
    %9 = sbr.rel target = $region3
  $region8: #{transformer_forward.14} parent=0 // loop_exit
    _

// kernel: transformer_forward.15
$region0: #{transformer_forward.15}
  #allocation0 [shape = 'u32[]', space=smem, size = 0x4, offset = 0x4, fixed_abs, tag = 'smem constant byte address 0x4 - core index']
  #allocation1 [shape = 'u32[72,128]{1,0:T(1,128)}', space=vmem, size = 0x9000, scoped, tag = 'internal scratch']
  %s0 = inlined_call_operand.vmem [shape: f32[16,32], index: 0, kind: input, shape index: {}]
  %s1 = inlined_call_operand.vmem [shape: f32[1,32], index: 1, kind: input, shape index: {}]
  %s2 = inlined_call_operand.vmem [shape: f32[1,32], index: 2, kind: input, shape index: {}]
  %s3 = inlined_call_operand.hbm [shape: f32[3,32,32], index: 3, kind: input, shape index: {}]
  %s4 = inlined_call_operand.vmem [shape: f32[3,1,32], index: 4, kind: input, shape index: {}]
  %s5 = inlined_call_operand.vmem [shape: f32[3,16,32], index: 5, kind: output, shape index: {}]
  %s6 = sld [smem:[#allocation0]]
  $region57: #{transformer_forward.15} parent=0
    _
  %s8 = ssub.s32 1, %s6
  %s9 = scalar_select 0, %s8, %s6
  $region1: #{transformer_forward.15} parent=0
    #allocation2 [shape = 'u8[32768]{0}', space=vmem, size = 0x8000, scoped, tag = 'input window, operand 3']
    #allocation3 [shape = 's32[2]{0}', space=sflag, size = 0x8, scoped, tag = 'scoped memory for transformer_forward.15']
    %10 = vsyncpa [#allocation3], 0
    %s11 = scalar_lea.sflag [#allocation3], 1
    %12 = vsyncpa %s11, 0
    loop: start=0, step=1, limit=8
    $region2: #{transformer_forward.15} parent=1 // loop_pre_header
      _
    $region3: #{transformer_forward.15} parent=1 // loop_header
      %s14 = sphi 0, %s18
      %p15 = scmp.ge.s32.totalorder %s14, 8
      %s21 = sphi 0, %s40
      %s22 = sphi 0, %s36
      %s23 = sphi 0, %s32
      %s24 = sphi 0, %s21
      %s25 = sphi 0, %s22
      %s26 = sphi 0, %s23
      %s27 = sphi 0, %s24
      %s28 = sphi 0, %s25
      %s29 = sphi 0, %s26
      %s43 = sphi 0, %s45
      %s46 = sphi 0, %s43
      %s47 = sphi 0, %s46
      %s63 = sphi 0, %s47
      %s67 = sphi 0, %s67
      %s69 = sphi 0, %s67
      %s70 = sphi 0, %s69
      %s84 = sphi 0, %s70
      %s88 = sphi 0, %s88
      %s90 = sphi 0, %s88
      %s91 = sphi 0, %s90
      %s105 = sphi 0, %s91
      %s113 = sphi 0, %s115
      %s116 = sphi 0, %s113
      %s117 = sphi 0, %s116
      %s133 = sphi 0, %s117
      %s141 = sphi 0, %s143
      %s144 = sphi 0, %s141
      %s145 = sphi 0, %s144
      %s161 = sphi 0, %s145
      %s171 = sphi 0, %s173
      %s174 = sphi 0, %s171
      %s175 = sphi 0, %s174
      %s191 = sphi 0, %s175
    $region4: #{transformer_forward.15} parent=1 // loop_header_branch
      %17 = sbr.rel (%p15) target = $region8
    $region5: #{transformer_forward.15} parent=1 // loop_body
      %s19 = ssub.s32 %s14, 1
      %s20 = ssub.s32 %s14, 2
      %s30 = sadd.s32 1, %s23
      %p31 = scmp.ge.s32.totalorder %s30, 1
      %s32 = scalar_select %p31, 0, %s30
      %s33 = sadd.s32 1, %s22
      %s34 = scalar_select %p31, %s33, %s22
      %p35 = scmp.ge.s32.totalorder %s34, 3
      %s36 = scalar_select %p35, 0, %s34
      %s37 = sadd.s32 1, %s21
      %s38 = scalar_select %p35, %s37, %s21
      %p39 = scmp.ge.s32.totalorder %s38, 2
      %s40 = scalar_select %p39, 0, %s38
      %s41 = ssub.s32 %s21, %s40
      %p42 = scmp.eq.s32.totalorder %s41, 0
      %s44 = sadd.s32 %s43, 1
      %s45 = scalar_select %p42, %s43, %s44
      %p48 = pneg %p42
      %p49 = scmp.eq.s32.totalorder %s14, 5
      %p50 = por %p48, %p49
      %p51 = scmp.ne.s32.totalorder %s43, %s46
      %p52 = scmp.eq.s32.totalorder %s14, 0
      %p53 = por %p51, %p52
      %p54 = scmp.ne.s32.totalorder %s43, %s46
      %p55 = scmp.eq.s32.totalorder %s19, 5
      %p56 = por %p54, %p55
      %p57 = scmp.ne.s32.totalorder %s46, %s47
      %p58 = scmp.eq.s32.totalorder %s19, 0
      %p59 = por %p57, %p58
      %p60 = scmp.ne.s32.totalorder %s46, %s47
      %p61 = scmp.eq.s32.totalorder %s20, 5
      %p62 = por %p60, %p61
      %p64 = scmp.ne.s32.totalorder %s47, %s63
      %p65 = scmp.eq.s32.totalorder %s20, 0
      %p66 = por %p64, %p65
      %s68 = sadd.s32 %s67, 1
      %p71 = scmp.eq.s32.totalorder %s14, 5
      %p72 = scmp.ne.s32.totalorder %s67, %s69
      %p73 = scmp.eq.s32.totalorder %s14, 0
      %p74 = por %p72, %p73
      %p75 = scmp.ne.s32.totalorder %s67, %s69
      %p76 = scmp.eq.s32.totalorder %s19, 5
      %p77 = por %p75, %p76
      %p78 = scmp.ne.s32.totalorder %s69, %s70
      %p79 = scmp.eq.s32.totalorder %s19, 0
      %p80 = por %p78, %p79
      %p81 = scmp.ne.s32.totalorder %s69, %s70
      %p82 = scmp.eq.s32.totalorder %s20, 5
      %p83 = por %p81, %p82
      %p85 = scmp.ne.s32.totalorder %s70, %s84
      %p86 = scmp.eq.s32.totalorder %s20, 0
      %p87 = por %p85, %p86
      %s89 = sadd.s32 %s88, 1
      %p92 = scmp.eq.s32.totalorder %s14, 5
      %p93 = scmp.ne.s32.totalorder %s88, %s90
      %p94 = scmp.eq.s32.totalorder %s14, 0
      %p95 = por %p93, %p94
      %p96 = scmp.ne.s32.totalorder %s88, %s90
      %p97 = scmp.eq.s32.totalorder %s19, 5
      %p98 = por %p96, %p97
      %p99 = scmp.ne.s32.totalorder %s90, %s91
      %p100 = scmp.eq.s32.totalorder %s19, 0
      %p101 = por %p99, %p100
      %p102 = scmp.ne.s32.totalorder %s90, %s91
      %p103 = scmp.eq.s32.totalorder %s20, 5
      %p104 = por %p102, %p103
      %p106 = scmp.ne.s32.totalorder %s91, %s105
      %p107 = scmp.eq.s32.totalorder %s20, 0
      %p108 = por %p106, %p107
      %s109 = ssub.s32 %s22, %s36
      %s110 = ssub.s32 %s23, %s32
      %s111 = sor.u32 %s109, %s110
      %p112 = scmp.eq.s32.totalorder %s111, 0
      %s114 = sadd.s32 %s113, 1
      %s115 = scalar_select %p112, %s113, %s114
      %p118 = pneg %p112
      %p119 = scmp.eq.s32.totalorder %s14, 5
      %p120 = por %p118, %p119
      %p121 = scmp.ne.s32.totalorder %s113, %s116
      %p122 = scmp.eq.s32.totalorder %s14, 0
      %p123 = por %p121, %p122
      %p124 = scmp.ne.s32.totalorder %s113, %s116
      %p125 = scmp.eq.s32.totalorder %s19, 5
      %p126 = por %p124, %p125
      %p127 = scmp.ne.s32.totalorder %s116, %s117
      %p128 = scmp.eq.s32.totalorder %s19, 0
      %p129 = por %p127, %p128
      %p130 = scmp.ne.s32.totalorder %s116, %s117
      %p131 = scmp.eq.s32.totalorder %s20, 5
      %p132 = por %p130, %p131
      %p134 = scmp.ne.s32.totalorder %s117, %s133
      %p135 = scmp.eq.s32.totalorder %s20, 0
      %p136 = por %p134, %p135
      %s137 = ssub.s32 %s22, %s36
      %s138 = ssub.s32 %s23, %s32
      %s139 = sor.u32 %s137, %s138
      %p140 = scmp.eq.s32.totalorder %s139, 0
      %s142 = sadd.s32 %s141, 1
      %s143 = scalar_select %p140, %s141, %s142
      %p146 = pneg %p140
      %p147 = scmp.eq.s32.totalorder %s14, 5
      %p148 = por %p146, %p147
      %p149 = scmp.ne.s32.totalorder %s141, %s144
      %p150 = scmp.eq.s32.totalorder %s14, 0
      %p151 = por %p149, %p150
      %p152 = scmp.ne.s32.totalorder %s141, %s144
      %p153 = scmp.eq.s32.totalorder %s19, 5
      %p154 = por %p152, %p153
      %p155 = scmp.ne.s32.totalorder %s144, %s145
      %p156 = scmp.eq.s32.totalorder %s19, 0
      %p157 = por %p155, %p156
      %p158 = scmp.ne.s32.totalorder %s144, %s145
      %p159 = scmp.eq.s32.totalorder %s20, 5
      %p160 = por %p158, %p159
      %p162 = scmp.ne.s32.totalorder %s145, %s161
      %p163 = scmp.eq.s32.totalorder %s20, 0
      %p164 = por %p162, %p163
      %s165 = ssub.s32 %s22, %s36
      %s166 = ssub.s32 %s21, %s40
      %s167 = sor.u32 %s165, %s166
      %s168 = ssub.s32 %s23, %s32
      %s169 = sor.u32 %s167, %s168
      %p170 = scmp.eq.s32.totalorder %s169, 0
      %s172 = sadd.s32 %s171, 1
      %s173 = scalar_select %p170, %s171, %s172
      %p176 = pneg %p170
      %p177 = scmp.eq.s32.totalorder %s14, 5
      %p178 = por %p176, %p177
      %p179 = scmp.ne.s32.totalorder %s171, %s174
      %p180 = scmp.eq.s32.totalorder %s14, 0
      %p181 = por %p179, %p180
      %p182 = scmp.ne.s32.totalorder %s171, %s174
      %p183 = scmp.eq.s32.totalorder %s19, 5
      %p184 = por %p182, %p183
      %p185 = scmp.ne.s32.totalorder %s174, %s175
      %p186 = scmp.eq.s32.totalorder %s19, 0
      %p187 = por %p185, %p186
      %p188 = scmp.ne.s32.totalorder %s174, %s175
      %p189 = scmp.eq.s32.totalorder %s20, 5
      %p190 = por %p188, %p189
      %p192 = scmp.ne.s32.totalorder %s175, %s191
      %p193 = scmp.eq.s32.totalorder %s20, 0
      %p194 = por %p192, %p193
      %p195 = scmp.le.s32.totalorder 1, %s14
      %p196 = scmp.lt.s32.totalorder %s14, 7
      %p197 = pnand %p195, %p196
      %p198 = pneg %p197
      // Predicated region
      $region9: #{transformer_forward.15} parent=5 // pred_check
        _
      $region10: #{transformer_forward.15} parent=5 // pred_check_branch
        %200 = sbr.rel (%p197) target = $region12
      $region11: #{transformer_forward.15} parent=5 // pred_region
        %s201 = ssub.s32 %s14, 1
        // Predicated region
        $region13: #{transformer_forward.15} parent=11 // pred_check
          %p202 = pneg %p80
        $region14: #{transformer_forward.15} parent=11 // pred_check_branch
          %204 = sbr.rel (%p202) target = $region16
        $region15: #{transformer_forward.15} parent=11 // pred_region
          _
        $region16: #{transformer_forward.15} parent=11 // pred_fallthru
          _
        // Predicated region
        $region17: #{transformer_forward.15} parent=11 // pred_check
          %p205 = pneg %p101
        $region18: #{transformer_forward.15} parent=11 // pred_check_branch
          %207 = sbr.rel (%p205) target = $region20
        $region19: #{transformer_forward.15} parent=11 // pred_region
          _
        $region20: #{transformer_forward.15} parent=11 // pred_fallthru
          _
      $region12: #{transformer_forward.15} parent=5 // pred_fallthru
        _
      %p208 = scmp.lt.s32.totalorder %s14, 6
      // Predicated region
      $region21: #{transformer_forward.15} parent=5 // pred_check
        %p209 = pneg %p208
      $region22: #{transformer_forward.15} parent=5 // pred_check_branch
        %211 = sbr.rel (%p209) target = $region24
      $region23: #{transformer_forward.15} parent=5 // pred_region
        // Predicated region
        $region25: #{transformer_forward.15} parent=23 // pred_check
          %p212 = pneg %p53
        $region26: #{transformer_forward.15} parent=23 // pred_check_branch
          %214 = sbr.rel (%p212) target = $region28
        $region27: #{transformer_forward.15} parent=23 // pred_region
          %p215 = scmp.lt.s32.totalorder %s21, 1
          %s216 = scalar_select %p215, %s21, 1
          %s217 = smul.addr %s216, 8
          %s218 = scalar_lea.vmem %s0, %s217
        $region28: #{transformer_forward.15} parent=23 // pred_fallthru
          _
        // Predicated region
        $region29: #{transformer_forward.15} parent=23 // pred_check
          %p219 = pneg %p123
        $region30: #{transformer_forward.15} parent=23 // pred_check_branch
          %221 = sbr.rel (%p219) target = $region32
        $region31: #{transformer_forward.15} parent=23 // pred_region
          %s222 = sand.u32 %s113, 1
          %s223 = scalar_lea.sflag [#allocation3], %s222
          %s224 = sand.u32 %s113, 1
          %s225 = smul.addr %s224, 32
          %s226 = scalar_lea.vmem [#allocation2], %s225
          %228 = vsyncadd %s223, 0
          %s229 = smul.addr %s22, 4
          %s230 = sadd.s32 %s23, %s229
          %s231 = smul.addr %s230, 8
          %s232 = scalar_lea.hbm %s3, %s231
          %s233 = sshll.u32 %s232, 4
          %s234 = int_to_ptr.hbm [resolvable:$true] %s233
          %s235 = sshll.u32 %s226, 4
          %s236 = int_to_ptr.vmem [resolvable:$true] %s235
          %241 = dma.hbm_to_vmem [thread:$0]  %s234, 512, %s236, %s223, 128, 128, 8
        $region32: #{transformer_forward.15} parent=23 // pred_fallthru
          _
        // Predicated region
        $region33: #{transformer_forward.15} parent=23 // pred_check
          %p242 = pneg %p151
        $region34: #{transformer_forward.15} parent=23 // pred_check_branch
          %244 = sbr.rel (%p242) target = $region36
        $region35: #{transformer_forward.15} parent=23 // pred_region
          %p245 = scmp.lt.s32.totalorder %s22, 2
          %s246 = scalar_select %p245, %s22, 2
          %p247 = scmp.lt.s32.totalorder %s23, 0
          %s248 = scalar_select %p247, %s23, 0
          %s249 = sadd.s32 %s248, %s246
          %s250 = scalar_lea.vmem %s4, %s249
        $region36: #{transformer_forward.15} parent=23 // pred_fallthru
          _
      $region24: #{transformer_forward.15} parent=5 // pred_fallthru
        _
      %p251 = scmp.le.s32.totalorder 1, %s14
      %p252 = scmp.lt.s32.totalorder %s14, 7
      %p253 = pnand %p251, %p252
      %p254 = pneg %p253
      // Predicated region
      $region37: #{transformer_forward.15} parent=5 // pred_check
        _
      $region38: #{transformer_forward.15} parent=5 // pred_check_branch
        %256 = sbr.rel (%p253) target = $region40
      $region39: #{transformer_forward.15} parent=5 // pred_region
        %s257 = ssub.s32 %s14, 1
        %s258 = sand.u32 %s116, 1
        %s259 = scalar_lea.sflag [#allocation3], %s258
        %s260 = sand.u32 %s116, 1
        %s261 = smul.addr %s260, 32
        %s262 = scalar_lea.vmem [#allocation2], %s261
        // Predicated region
        $region41: #{transformer_forward.15} parent=39 // pred_check
          %p263 = pneg %p129
        $region42: #{transformer_forward.15} parent=39 // pred_check_branch
          %265 = sbr.rel (%p263) target = $region44
        $region43: #{transformer_forward.15} parent=39 // pred_region
          %267 = dma.done %s259, 512
        $region44: #{transformer_forward.15} parent=39 // pred_fallthru
          _
        %p268 = scmp.lt.s32.totalorder %s24, 1
        %s269 = scalar_select %p268, %s24, 1
        %s270 = smul.addr %s269, 8
        %s271 = scalar_lea.vmem %s0, %s270
        %p272 = pneg %p59
        %p273 = pneg %p56
        %p274 = pneg %p80
        %p275 = pneg %p77
        %p276 = pneg %p101
        %p277 = pneg %p98
        %s278 = sand.u32 %s116, 1
        %s279 = scalar_lea.sflag [#allocation3], %s278
        %s280 = sand.u32 %s116, 1
        %s281 = smul.addr %s280, 32
        %s282 = scalar_lea.vmem [#allocation2], %s281
        %p283 = pneg %p129
        %p284 = pneg %p126
        %p285 = scmp.lt.s32.totalorder %s25, 2
        %s286 = scalar_select %p285, %s25, 2
        %p287 = scmp.lt.s32.totalorder %s26, 0
        %s288 = scalar_select %p287, %s26, 0
        %s289 = sadd.s32 %s288, %s286
        %s290 = scalar_lea.vmem %s4, %s289
        %p291 = pneg %p157
        %p292 = pneg %p154
        %p293 = pneg %p187
        %p294 = pneg %p184
        %p295 = scmp.lt.s32.totalorder %s25, 2
        %s296 = scalar_select %p295, %s25, 2
        %p297 = scmp.lt.s32.totalorder %s24, 1
        %s298 = scalar_select %p297, %s24, 1
        %p299 = scmp.lt.s32.totalorder %s26, 0
        %s300 = scalar_select %p299, %s26, 0
        %s301 = sadd.s32 %s300, %s298
        %s302 = smul.addr %s296, 2
        %s303 = sadd.s32 %s301, %s302
        %s304 = smul.addr %s303, 8
        %s305 = scalar_lea.vmem %s5, %s304
        %p306 = scmp.lt.s32.totalorder %s24, 1
        %s307 = scalar_select %p306, %s24, 1
        %s308 = smul.addr %s307, 8
        %s309 = scalar_lea.vmem %s0, %s308
        %p310 = scmp.lt.s32.totalorder %s25, 2
        %s311 = scalar_select %p310, %s25, 2
        %p312 = scmp.lt.s32.totalorder %s26, 0
        %s313 = scalar_select %p312, %s26, 0
        %s314 = sadd.s32 %s313, %s311
        %s315 = scalar_lea.vmem %s4, %s314
        %p316 = scmp.lt.s32.totalorder %s25, 2
        %s317 = scalar_select %p316, %s25, 2
        %p318 = scmp.lt.s32.totalorder %s24, 1
        %s319 = scalar_select %p318, %s24, 1
        %p320 = scmp.lt.s32.totalorder %s26, 0
        %s321 = scalar_select %p320, %s26, 0
        %s322 = sadd.s32 %s321, %s319
        %s323 = smul.addr %s317, 2
        %s324 = sadd.s32 %s322, %s323
        %s325 = smul.addr %s324, 8
        %s326 = scalar_lea.vmem %s5, %s325
        %v327 = vld [vmem:[%s309] sm:$0xff]
        %vm328 = vcmask 261120
        %v329 = vsel %vm328, %v327, 0.0
        %330 = vadd.xlane.f32.xlu0 %v329
        %v331 = vpop.xlane.xlu0 %330
        %v332 = vrcp.pop 32.0
        %v333 = vmul.f32 32.0, %v332
        %v334 = vsub.f32 1.0, %v333
        %v335 = vmul.f32 %v332, %v334
        %v336 = vadd.f32 %v332, %v335
        %vm337 = vweird.f32 %v332
        %v338 = vsel %vm337, %v332, %v336
        %v339 = vmul.f32 %v331, %v338
        %v340 = vsub.f32 %v327, %v339
        %v341 = vmul.f32 %v340, %v340
        %v342 = vsel %vm328, %v341, 0.0
        %343 = vadd.xlane.f32.xlu0 %v342
        %v344 = vpop.xlane.xlu0 %343
        %v345 = vmul.f32 %v344, %v338
        %v346 = vadd.f32 %v345, 1e-05
        %v347 = vrsqrt.pop %v346
        %v348 = vmul.f32 %v347, %v346
        %v349 = vmul.f32 %v348, %v347
        %v350 = vmul.f32 0.5, %v349
        %v351 = vsub.f32 1.5, %v350
        %v352 = vmul.f32 %v347, %v351
        %vm353 = vweird.f32 %v346
        %vm354 = vweird.f32 %v347
        %vm355 = vmor %vm353, %vm354
        %v356 = vsel %vm355, %v347, %v352
        %v357 = vmul.f32 %v340, %v356
        %v358 = vld [vmem:[%s1] sm:$0x1]
        %v360 = vperm.slane %v358, 0
        %v362 = vmul.f32 %v357, %v360
        %v363 = vld [vmem:[%s2] sm:$0x1]
        %v365 = vperm.slane %v363, 0
        %v367 = vadd.f32 %v362, %v365
        %v368 = vld [vmem:[%s262] sm:$0xff]
        %v369 = vld [vmem:[%s262 + $0x8] sm:$0xff]
        %v370 = vld [vmem:[%s262 + $0x10] sm:$0xff]
        %v371 = vld [vmem:[%s262 + $0x18] sm:$0xff]
        %v372 = vld [vmem:[%s315] sm:$0x1]
        %v374 = vperm.slane %v372, 0
        %v377 = vsel %vm328, %v367, 0
        %379 = vmatpush.msra.mxu0 0.0
        %380 = vmatpush.msra.mxu0 0.0
        %381 = vmatpush.msra.mxu0 0.0
        %382 = vmatpush.msra.mxu0 0.0
        %383 = vmatpush.msra.mxu0 0.0
        %384 = vmatpush.msra.mxu0 0.0
        %385 = vmatpush.msra.mxu0 0.0
        %386 = vmatpush.msra.mxu0 0.0
        %387 = vmatpush.msra.mxu0 0.0
        %388 = vmatpush.msra.mxu0 0.0
        %389 = vmatpush.msra.mxu0 0.0
        %390 = vmatpush.msra.mxu0 0.0
        %391 = vmatpush.msra.mxu0 %v371
        %392 = vmatpush.msra.mxu0 %v370
        %393 = vmatpush.msra.mxu0 %v369
        %394 = vmatpush.msra.mxu0 %v368
        %395 = vmatmul.f32.gmra.mxu0 %v377
        %v396 = vpop.f32.mrf.mxu0
        %v397 = vadd.f32 %v374, %v396
        %398 = vdwg.mxu0
        %399 = vst.msk [vmem:[%s326] sm:$0xff] %vm328, %v397
        %p400 = scmp.lt.s32.totalorder %s25, 2
        %s401 = scalar_select %p400, %s25, 2
        %p402 = scmp.lt.s32.totalorder %s24, 1
        %s403 = scalar_select %p402, %s24, 1
        %p404 = scmp.lt.s32.totalorder %s26, 0
        %s405 = scalar_select %p404, %s26, 0
        %s406 = sadd.s32 %s405, %s403
        %s407 = smul.addr %s401, 2
        %s408 = sadd.s32 %s406, %s407
        %s409 = smul.addr %s408, 8
        %s410 = scalar_lea.vmem %s5, %s409
        // Predicated region
        $region45: #{transformer_forward.15} parent=39 // pred_check
          %p411 = pneg %p184
        $region46: #{transformer_forward.15} parent=39 // pred_check_branch
          %413 = sbr.rel (%p411) target = $region48
        $region47: #{transformer_forward.15} parent=39 // pred_region
          _
        $region48: #{transformer_forward.15} parent=39 // pred_fallthru
          _
      $region40: #{transformer_forward.15} parent=5 // pred_fallthru
        _
      %p414 = scmp.le.s32.totalorder 2, %s14
      // Predicated region
      $region49: #{transformer_forward.15} parent=5 // pred_check
        %p415 = pneg %p414
      $region50: #{transformer_forward.15} parent=5 // pred_check_branch
        %417 = sbr.rel (%p415) target = $region52
      $region51: #{transformer_forward.15} parent=5 // pred_region
        %s418 = ssub.s32 %s14, 2
        // Predicated region
        $region53: #{transformer_forward.15} parent=51 // pred_check
          %p419 = pneg %p190
        $region54: #{transformer_forward.15} parent=51 // pred_check_branch
          %421 = sbr.rel (%p419) target = $region56
        $region55: #{transformer_forward.15} parent=51 // pred_region
          %p422 = scmp.lt.s32.totalorder %s28, 2
          %s423 = scalar_select %p422, %s28, 2
          %p424 = scmp.lt.s32.totalorder %s27, 1
          %s425 = scalar_select %p424, %s27, 1
          %p426 = scmp.lt.s32.totalorder %s29, 0
          %s427 = scalar_select %p426, %s29, 0
          %s428 = sadd.s32 %s427, %s425
          %s429 = smul.addr %s423, 2
          %s430 = sadd.s32 %s428, %s429
          %s431 = smul.addr %s430, 8
          %s432 = scalar_lea.vmem %s5, %s431
        $region56: #{transformer_forward.15} parent=51 // pred_fallthru
          _
      $region52: #{transformer_forward.15} parent=5 // pred_fallthru
        _
    $region6: #{transformer_forward.15} parent=1 // loop_footer
      %s18 = sadd.s32 1, %s14
    $region7: #{transformer_forward.15} parent=1 // loop_footer_branch
      %13 = sbr.rel target = $region3
    $region8: #{transformer_forward.15} parent=1 // loop_exit
      _
    %433 = vsyncpa [#allocation3], 1
    %s434 = scalar_lea.sflag [#allocation3], 1
    %435 = vsyncpa %s434, 1

// kernel: transformer_forward.19
$region0: #{transformer_forward.19}
  #allocation0 [shape = 'u32[]', space=smem, size = 0x4, offset = 0x4, fixed_abs, tag = 'smem constant byte address 0x4 - core index']
  #allocation1 [shape = 'u32[72,128]{1,0:T(1,128)}', space=vmem, size = 0x9000, scoped, tag = 'internal scratch']
  #allocation2 [shape = 'f32[8,32]{1,0:T(8,128)}', space=vmem, size = 0x1000, scoped, tag = 'scratch operand']
  %s0 = inlined_call_operand.vmem [shape: f32[16,64], index: 0, kind: input, shape index: {}]
  %s1 = inlined_call_operand.vmem [shape: f32[64,32], index: 1, kind: input, shape index: {}]
  %s2 = inlined_call_operand.vmem [shape: f32[1,32], index: 2, kind: input, shape index: {}]
  %s3 = inlined_call_operand.vmem [shape: f32[16,32], index: 3, kind: input, shape index: {}]
  %s4 = inlined_call_operand.hbm [shape: f32[16,32], index: 4, kind: output, shape index: {}]
  %s5 = sld [smem:[#allocation0]]
  $region57: #{transformer_forward.19} parent=0
    _
  %s7 = ssub.s32 1, %s5
  %s8 = scalar_select 0, %s7, %s5
  $region1: #{transformer_forward.19} parent=0
    #allocation3 [shape = 'u8[8192]{0}', space=vmem, size = 0x2000, scoped, tag = 'output window, operand 0']
    #allocation4 [shape = 's32[2]{0}', space=sflag, size = 0x8, scoped, tag = 'scoped memory for transformer_forward.19']
    %9 = vsyncpa [#allocation4], 0
    %s10 = scalar_lea.sflag [#allocation4], 1
    %11 = vsyncpa %s10, 0
    loop: start=0, step=1, limit=4
    $region2: #{transformer_forward.19} parent=1 // loop_pre_header
      _
    $region3: #{transformer_forward.19} parent=1 // loop_header
      %s13 = sphi 0, %s17
      %p14 = scmp.ge.s32.totalorder %s13, 4
      %s20 = sphi 0, %s39
      %s21 = sphi 0, %s35
      %s22 = sphi 0, %s31
      %s23 = sphi 0, %s20
      %s24 = sphi 0, %s21
      %s25 = sphi 0, %s22
      %s26 = sphi 0, %s23
      %s27 = sphi 0, %s24
      %s28 = sphi 0, %s25
      %s44 = sphi 0, %s46
      %s47 = sphi 0, %s44
      %s48 = sphi 0, %s47
      %s64 = sphi 0, %s48
      %s72 = sphi 0, %s74
      %s75 = sphi 0, %s72
      %s76 = sphi 0, %s75
      %s92 = sphi 0, %s76
      %s98 = sphi 0, %s100
      %s101 = sphi 0, %s98
      %s102 = sphi 0, %s101
      %s118 = sphi 0, %s102
      %s126 = sphi 0, %s128
      %s129 = sphi 0, %s126
      %s130 = sphi 0, %s129
      %s146 = sphi 0, %s130
      %s154 = sphi 0, %s156
      %s157 = sphi 0, %s154
      %s158 = sphi 0, %s157
      %s174 = sphi 0, %s158
    $region4: #{transformer_forward.19} parent=1 // loop_header_branch
      %16 = sbr.rel (%p14) target = $region8
    $region5: #{transformer_forward.19} parent=1 // loop_body
      %s18 = ssub.s32 %s13, 1
      %s19 = ssub.s32 %s13, 2
      %s29 = sadd.s32 1, %s22
      %p30 = scmp.ge.s32.totalorder %s29, 1
      %s31 = scalar_select %p30, 0, %s29
      %s32 = sadd.s32 1, %s21
      %s33 = scalar_select %p30, %s32, %s21
      %p34 = scmp.ge.s32.totalorder %s33, 1
      %s35 = scalar_select %p34, 0, %s33
      %s36 = sadd.s32 1, %s20
      %s37 = scalar_select %p34, %s36, %s20
      %p38 = scmp.ge.s32.totalorder %s37, 2
      %s39 = scalar_select %p38, 0, %s37
      %s40 = ssub.s32 %s20, %s39
      %s41 = ssub.s32 %s22, %s31
      %s42 = sor.u32 %s40, %s41
      %p43 = scmp.eq.s32.totalorder %s42, 0
      %s45 = sadd.s32 %s44, 1
      %s46 = scalar_select %p43, %s44, %s45
      %p49 = pneg %p43
      %p50 = scmp.eq.s32.totalorder %s13, 1
      %p51 = por %p49, %p50
      %p52 = scmp.ne.s32.totalorder %s44, %s47
      %p53 = scmp.eq.s32.totalorder %s13, 0
      %p54 = por %p52, %p53
      %p55 = scmp.ne.s32.totalorder %s44, %s47
      %p56 = scmp.eq.s32.totalorder %s18, 1
      %p57 = por %p55, %p56
      %p58 = scmp.ne.s32.totalorder %s47, %s48
      %p59 = scmp.eq.s32.totalorder %s18, 0
      %p60 = por %p58, %p59
      %p61 = scmp.ne.s32.totalorder %s47, %s48
      %p62 = scmp.eq.s32.totalorder %s19, 1
      %p63 = por %p61, %p62
      %p65 = scmp.ne.s32.totalorder %s48, %s64
      %p66 = scmp.eq.s32.totalorder %s19, 0
      %p67 = por %p65, %p66
      %s68 = ssub.s32 %s22, %s31
      %s69 = ssub.s32 %s21, %s35
      %s70 = sor.u32 %s68, %s69
      %p71 = scmp.eq.s32.totalorder %s70, 0
      %s73 = sadd.s32 %s72, 1
      %s74 = scalar_select %p71, %s72, %s73
      %p77 = pneg %p71
      %p78 = scmp.eq.s32.totalorder %s13, 1
      %p79 = por %p77, %p78
      %p80 = scmp.ne.s32.totalorder %s72, %s75
      %p81 = scmp.eq.s32.totalorder %s13, 0
      %p82 = por %p80, %p81
      %p83 = scmp.ne.s32.totalorder %s72, %s75
      %p84 = scmp.eq.s32.totalorder %s18, 1
      %p85 = por %p83, %p84
      %p86 = scmp.ne.s32.totalorder %s75, %s76
      %p87 = scmp.eq.s32.totalorder %s18, 0
      %p88 = por %p86, %p87
      %p89 = scmp.ne.s32.totalorder %s75, %s76
      %p90 = scmp.eq.s32.totalorder %s19, 1
      %p91 = por %p89, %p90
      %p93 = scmp.ne.s32.totalorder %s76, %s92
      %p94 = scmp.eq.s32.totalorder %s19, 0
      %p95 = por %p93, %p94
      %s96 = ssub.s32 %s21, %s35
      %p97 = scmp.eq.s32.totalorder %s96, 0
      %s99 = sadd.s32 %s98, 1
      %s100 = scalar_select %p97, %s98, %s99
      %p103 = pneg %p97
      %p104 = scmp.eq.s32.totalorder %s13, 1
      %p105 = por %p103, %p104
      %p106 = scmp.ne.s32.totalorder %s98, %s101
      %p107 = scmp.eq.s32.totalorder %s13, 0
      %p108 = por %p106, %p107
      %p109 = scmp.ne.s32.totalorder %s98, %s101
      %p110 = scmp.eq.s32.totalorder %s18, 1
      %p111 = por %p109, %p110
      %p112 = scmp.ne.s32.totalorder %s101, %s102
      %p113 = scmp.eq.s32.totalorder %s18, 0
      %p114 = por %p112, %p113
      %p115 = scmp.ne.s32.totalorder %s101, %s102
      %p116 = scmp.eq.s32.totalorder %s19, 1
      %p117 = por %p115, %p116
      %p119 = scmp.ne.s32.totalorder %s102, %s118
      %p120 = scmp.eq.s32.totalorder %s19, 0
      %p121 = por %p119, %p120
      %s122 = ssub.s32 %s20, %s39
      %s123 = ssub.s32 %s21, %s35
      %s124 = sor.u32 %s122, %s123
      %p125 = scmp.eq.s32.totalorder %s124, 0
      %s127 = sadd.s32 %s126, 1
      %s128 = scalar_select %p125, %s126, %s127
      %p131 = pneg %p125
      %p132 = scmp.eq.s32.totalorder %s13, 1
      %p133 = por %p131, %p132
      %p134 = scmp.ne.s32.totalorder %s126, %s129
      %p135 = scmp.eq.s32.totalorder %s13, 0
      %p136 = por %p134, %p135
      %p137 = scmp.ne.s32.totalorder %s126, %s129
      %p138 = scmp.eq.s32.totalorder %s18, 1
      %p139 = por %p137, %p138
      %p140 = scmp.ne.s32.totalorder %s129, %s130
      %p141 = scmp.eq.s32.totalorder %s18, 0
      %p142 = por %p140, %p141
      %p143 = scmp.ne.s32.totalorder %s129, %s130
      %p144 = scmp.eq.s32.totalorder %s19, 1
      %p145 = por %p143, %p144
      %p147 = scmp.ne.s32.totalorder %s130, %s146
      %p148 = scmp.eq.s32.totalorder %s19, 0
      %p149 = por %p147, %p148
      %s150 = ssub.s32 %s20, %s39
      %s151 = ssub.s32 %s21, %s35
      %s152 = sor.u32 %s150, %s151
      %p153 = scmp.eq.s32.totalorder %s152, 0
      %s155 = sadd.s32 %s154, 1
      %s156 = scalar_select %p153, %s154, %s155
      %p159 = pneg %p153
      %p160 = scmp.eq.s32.totalorder %s13, 1
      %p161 = por %p159, %p160
      %p162 = scmp.ne.s32.totalorder %s154, %s157
      %p163 = scmp.eq.s32.totalorder %s13, 0
      %p164 = por %p162, %p163
      %p165 = scmp.ne.s32.totalorder %s154, %s157
      %p166 = scmp.eq.s32.totalorder %s18, 1
      %p167 = por %p165, %p166
      %p168 = scmp.ne.s32.totalorder %s157, %s158
      %p169 = scmp.eq.s32.totalorder %s18, 0
      %p170 = por %p168, %p169
      %p171 = scmp.ne.s32.totalorder %s157, %s158
      %p172 = scmp.eq.s32.totalorder %s19, 1
      %p173 = por %p171, %p172
      %p175 = scmp.ne.s32.totalorder %s158, %s174
      %p176 = scmp.eq.s32.totalorder %s19, 0
      %p177 = por %p175, %p176
      %p178 = scmp.le.s32.totalorder 1, %s13
      %p179 = scmp.lt.s32.totalorder %s13, 3
      %p180 = pnand %p178, %p179
      %p181 = pneg %p180
      // Predicated region
      $region9: #{transformer_forward.19} parent=5 // pred_check
        _
      $region10: #{transformer_forward.19} parent=5 // pred_check_branch
        %183 = sbr.rel (%p180) target = $region12
      $region11: #{transformer_forward.19} parent=5 // pred_region
        %s184 = ssub.s32 %s13, 1
        // Predicated region
        $region13: #{transformer_forward.19} parent=11 // pred_check
          %p185 = pneg %p88
        $region14: #{transformer_forward.19} parent=11 // pred_check_branch
          %187 = sbr.rel (%p185) target = $region16
        $region15: #{transformer_forward.19} parent=11 // pred_region
          %s188 = smul.u32 8, %s25
          %p189 = scmp.lt.s32.totalorder %s188, 7
          %s190 = scalar_select %p189, %s188, 7
          %p191 = scmp.lt.s32.totalorder %s24, 0
          %s192 = scalar_select %p191, %s24, 0
          %s193 = sadd.s32 %s192, %s190
          %s194 = smul.addr %s193, 8
          %s195 = scalar_lea.vmem %s1, %s194
          %s196 = smul.u32 8, %s25
        $region16: #{transformer_forward.19} parent=11 // pred_fallthru
          _
        // Predicated region
        $region17: #{transformer_forward.19} parent=11 // pred_check
          %p197 = pneg %p114
        $region18: #{transformer_forward.19} parent=11 // pred_check_branch
          %199 = sbr.rel (%p197) target = $region20
        $region19: #{transformer_forward.19} parent=11 // pred_region
          %p200 = scmp.lt.s32.totalorder %s24, 0
          %s201 = scalar_select %p200, %s24, 0
          %s202 = scalar_lea.vmem %s2, %s201
        $region20: #{transformer_forward.19} parent=11 // pred_fallthru
          _
      $region12: #{transformer_forward.19} parent=5 // pred_fallthru
        _
      %p203 = scmp.lt.s32.totalorder %s13, 2
      // Predicated region
      $region21: #{transformer_forward.19} parent=5 // pred_check
        %p204 = pneg %p203
      $region22: #{transformer_forward.19} parent=5 // pred_check_branch
        %206 = sbr.rel (%p204) target = $region24
      $region23: #{transformer_forward.19} parent=5 // pred_region
        // Predicated region
        $region25: #{transformer_forward.19} parent=23 // pred_check
          %p207 = pneg %p54
        $region26: #{transformer_forward.19} parent=23 // pred_check_branch
          %209 = sbr.rel (%p207) target = $region28
        $region27: #{transformer_forward.19} parent=23 // pred_region
          %p210 = scmp.lt.s32.totalorder %s20, 1
          %s211 = scalar_select %p210, %s20, 1
          %p212 = scmp.lt.s32.totalorder %s22, 0
          %s213 = scalar_select %p212, %s22, 0
          %s214 = sadd.s32 %s213, %s211
          %s215 = smul.addr %s214, 8
          %s216 = scalar_lea.vmem %s0, %s215
        $region28: #{transformer_forward.19} parent=23 // pred_fallthru
          _
        // Predicated region
        $region29: #{transformer_forward.19} parent=23 // pred_check
          %p217 = pneg %p136
        $region30: #{transformer_forward.19} parent=23 // pred_check_branch
          %219 = sbr.rel (%p217) target = $region32
        $region31: #{transformer_forward.19} parent=23 // pred_region
          %p220 = scmp.lt.s32.totalorder %s20, 1
          %s221 = scalar_select %p220, %s20, 1
          %p222 = scmp.lt.s32.totalorder %s21, 0
          %s223 = scalar_select %p222, %s21, 0
          %s224 = sadd.s32 %s223, %s221
          %s225 = smul.addr %s224, 8
          %s226 = scalar_lea.vmem %s3, %s225
        $region32: #{transformer_forward.19} parent=23 // pred_fallthru
          _
      $region24: #{transformer_forward.19} parent=5 // pred_fallthru
        _
      %p227 = scmp.le.s32.totalorder 1, %s13
      %p228 = scmp.lt.s32.totalorder %s13, 3
      %p229 = pnand %p227, %p228
      %p230 = pneg %p229
      // Predicated region
      $region33: #{transformer_forward.19} parent=5 // pred_check
        _
      $region34: #{transformer_forward.19} parent=5 // pred_check_branch
        %232 = sbr.rel (%p229) target = $region36
      $region35: #{transformer_forward.19} parent=5 // pred_region
        %s233 = ssub.s32 %s13, 1
        %p234 = scmp.lt.s32.totalorder %s23, 1
        %s235 = scalar_select %p234, %s23, 1
        %p236 = scmp.lt.s32.totalorder %s25, 0
        %s237 = scalar_select %p236, %s25, 0
        %s238 = sadd.s32 %s237, %s235
        %s239 = smul.addr %s238, 8
        %s240 = scalar_lea.vmem %s0, %s239
        %p241 = pneg %p60
        %p242 = pneg %p57
        %s243 = smul.u32 8, %s25
        %p244 = scmp.lt.s32.totalorder %s243, 7
        %s245 = scalar_select %p244, %s243, 7
        %p246 = scmp.lt.s32.totalorder %s24, 0
        %s247 = scalar_select %p246, %s24, 0
        %s248 = sadd.s32 %s247, %s245
        %s249 = smul.addr %s248, 8
        %s250 = scalar_lea.vmem %s1, %s249
        %p251 = pneg %p88
        %p252 = pneg %p85
        %p253 = scmp.lt.s32.totalorder %s24, 0
        %s254 = scalar_select %p253, %s24, 0
        %s255 = scalar_lea.vmem %s2, %s254
        %p256 = pneg %p114
        %p257 = pneg %p111
        %p258 = scmp.lt.s32.totalorder %s23, 1
        %s259 = scalar_select %p258, %s23, 1
        %p260 = scmp.lt.s32.totalorder %s24, 0
        %s261 = scalar_select %p260, %s24, 0
        %s262 = sadd.s32 %s261, %s259
        %s263 = smul.addr %s262, 8
        %s264 = scalar_lea.vmem %s3, %s263
        %p265 = pneg %p142
        %p266 = pneg %p139
        %p267 = pneg %p170
        %p268 = pneg %p167
        %s269 = sand.u32 %s157, 1
        %s270 = scalar_lea.sflag [#allocation4], %s269
        %s271 = sand.u32 %s157, 1
        %s272 = smul.addr %s271, 8
        %s273 = scalar_lea.vmem [#allocation3], %s272
        %p274 = scmp.lt.s32.totalorder %s23, 1
        %s275 = scalar_select %p274, %s23, 1
        %p276 = scmp.lt.s32.totalorder %s25, 0
        %s277 = scalar_select %p276, %s25, 0
        %s278 = sadd.s32 %s277, %s275
        %s279 = smul.addr %s278, 8
        %s280 = scalar_lea.vmem %s0, %s279
        %s281 = smul.u32 8, %s25
        %p282 = scmp.lt.s32.totalorder %s281, 7
        %s283 = scalar_select %p282, %s281, 7
        %p284 = scmp.lt.s32.totalorder %s24, 0
        %s285 = scalar_select %p284, %s24, 0
        %s286 = sadd.s32 %s285, %s283
        %s287 = smul.addr %s286, 8
        %s288 = scalar_lea.vmem %s1, %s287
        %s289 = smul.u32 8, %s25
        %p290 = scmp.lt.s32.totalorder %s24, 0
        %s291 = scalar_select %p290, %s24, 0
        %s292 = scalar_lea.vmem %s2, %s291
        %p293 = scmp.lt.s32.totalorder %s23, 1
        %s294 = scalar_select %p293, %s23, 1
        %p295 = scmp.lt.s32.totalorder %s24, 0
        %s296 = scalar_select %p295, %s24, 0
        %s297 = sadd.s32 %s296, %s294
        %s298 = smul.addr %s297, 8
        %s299 = scalar_lea.vmem %s3, %s298
        %p300 = scmp.eq.s32.totalorder %s25, 0
        // Predicated region
        $region37: #{transformer_forward.19} parent=35 // pred_check
          %p301 = pneg %p300
        $region38: #{transformer_forward.19} parent=35 // pred_check_branch
          %303 = sbr.rel (%p301) target = $region40
        $region39: #{transformer_forward.19} parent=35 // pred_region
          %vm304 = vcmask 261120
          %305 = vst.msk [vmem:[#allocation2] sm:$0xff] %vm304, 0.0
        $region40: #{transformer_forward.19} parent=35 // pred_fallthru
          _
        %v306 = vld [vmem:[#allocation2] sm:$0xff]
        %v307 = vld [vmem:[%s280] sm:$0xff]
        %v308 = vld [vmem:[%s288] sm:$0xff]
        %v309 = vld [vmem:[%s288 + $0x8] sm:$0xff]
        %v310 = vld [vmem:[%s288 + $0x10] sm:$0xff]
        %v311 = vld [vmem:[%s288 + $0x18] sm:$0xff]
        %v312 = vld [vmem:[%s288 + $0x20] sm:$0xff]
        %v313 = vld [vmem:[%s288 + $0x28] sm:$0xff]
        %v314 = vld [vmem:[%s288 + $0x30] sm:$0xff]
        %v315 = vld [vmem:[%s288 + $0x38] sm:$0xff]
        %vm316 = vcmask 523264
        %v318 = vsel %vm316, %v307, 0
        %320 = vmatpush.msra.mxu0 0.0
        %321 = vmatpush.msra.mxu0 0.0
        %322 = vmatpush.msra.mxu0 0.0
        %323 = vmatpush.msra.mxu0 0.0
        %324 = vmatpush.msra.mxu0 0.0
        %325 = vmatpush.msra.mxu0 0.0
        %326 = vmatpush.msra.mxu0 0.0
        %327 = vmatpush.msra.mxu0 0.0
        %328 = vmatpush.msra.mxu0 %v315
        %329 = vmatpush.msra.mxu0 %v314
        %330 = vmatpush.msra.mxu0 %v313
        %331 = vmatpush.msra.mxu0 %v312
        %332 = vmatpush.msra.mxu0 %v311
        %333 = vmatpush.msra.mxu0 %v310
        %334 = vmatpush.msra.mxu0 %v309
        %335 = vmatpush.msra.mxu0 %v308
        %336 = vmatmul.f32.gmra.mxu0 %v318
        %v337 = vpop.f32.mrf.mxu0
        %v338 = vadd.f32 0.0, %v337
        %339 = vdwg.mxu0
        %v340 = vadd.f32 %v306, %v338
        %vm341 = vcmask 261120
        %342 = vst.msk [vmem:[#allocation2] sm:$0xff] %vm341, %v340
        // Predicated region
        $region41: #{transformer_forward.19} parent=35 // pred_check
          %p343 = pneg %p300
        $region42: #{transformer_forward.19} parent=35 // pred_check_branch
          %345 = sbr.rel (%p343) target = $region44
        $region43: #{transformer_forward.19} parent=35 // pred_region
          %v346 = vld [vmem:[#allocation2] sm:$0xff]
          %v347 = vld [vmem:[%s292] sm:$0x1]
          %v349 = vperm.slane %v347, 0
          %v351 = vadd.f32 %v346, %v349
          %v352 = vld [vmem:[%s299] sm:$0xff]
          %v353 = vadd.f32 %v351, %v352
          %354 = vst.msk [vmem:[%s273] sm:$0xff] %vm341, %v353
        $region44: #{transformer_forward.19} parent=35 // pred_fallthru
          _
        %s355 = sand.u32 %s157, 1
        %s356 = scalar_lea.sflag [#allocation4], %s355
        %s357 = sand.u32 %s157, 1
        %s358 = smul.addr %s357, 8
        %s359 = scalar_lea.vmem [#allocation3], %s358
        // Predicated region
        $region45: #{transformer_forward.19} parent=35 // pred_check
          %p360 = pneg %p167
        $region46: #{transformer_forward.19} parent=35 // pred_check_branch
          %362 = sbr.rel (%p360) target = $region48
        $region47: #{transformer_forward.19} parent=35 // pred_region
          %364 = vsyncadd %s356, 0
          %s365 = sadd.s32 %s24, %s23
          %s366 = smul.addr %s365, 8
          %s367 = scalar_lea.hbm %s4, %s366
          %s369 = sshll.u32 %s359, 4
          %s370 = int_to_ptr.vmem [resolvable:$true] %s369
          %s371 = sshll.u32 %s367, 4
          %s372 = int_to_ptr.hbm [resolvable:$true] %s371
          %374 = dma.vmem_to_hbm [thread:$0]  %s370, 128, %s372, %s356
        $region48: #{transformer_forward.19} parent=35 // pred_fallthru
          _
      $region36: #{transformer_forward.19} parent=5 // pred_fallthru
        _
      %p375 = scmp.le.s32.totalorder 2, %s13
      // Predicated region
      $region49: #{transformer_forward.19} parent=5 // pred_check
        %p376 = pneg %p375
      $region50: #{transformer_forward.19} parent=5 // pred_check_branch
        %378 = sbr.rel (%p376) target = $region52
      $region51: #{transformer_forward.19} parent=5 // pred_region
        %s379 = ssub.s32 %s13, 2
        // Predicated region
        $region53: #{transformer_forward.19} parent=51 // pred_check
          %p380 = pneg %p173
        $region54: #{transformer_forward.19} parent=51 // pred_check_branch
          %382 = sbr.rel (%p380) target = $region56
        $region55: #{transformer_forward.19} parent=51 // pred_region
          %s383 = sand.u32 %s158, 1
          %s384 = scalar_lea.sflag [#allocation4], %s383
          %s385 = sand.u32 %s158, 1
          %s386 = smul.addr %s385, 8
          %s387 = scalar_lea.vmem [#allocation3], %s386
          %389 = dma.done %s384, 128
        $region56: #{transformer_forward.19} parent=51 // pred_fallthru
          _
      $region52: #{transformer_forward.19} parent=5 // pred_fallthru
        _
    $region6: #{transformer_forward.19} parent=1 // loop_footer
      %s17 = sadd.s32 1, %s13
    $region7: #{transformer_forward.19} parent=1 // loop_footer_branch
      %12 = sbr.rel target = $region3
    $region8: #{transformer_forward.19} parent=1 // loop_exit
      _
    %390 = vsyncpa [#allocation4], 1
    %s391 = scalar_lea.sflag [#allocation4], 1
    %392 = vsyncpa %s391, 1

// kernel: transformer_forward.18
$region0: #{transformer_forward.18}
  #allocation0 [shape = 'u32[]', space=smem, size = 0x4, offset = 0x4, fixed_abs, tag = 'smem constant byte address 0x4 - core index']
  #allocation1 [shape = 'u32[72,128]{1,0:T(1,128)}', space=vmem, size = 0x9000, scoped, tag = 'internal scratch']
  %s0 = inlined_call_operand.vmem [shape: f32[16,32], index: 0, kind: input, shape index: {}]
  %s1 = inlined_call_operand.vmem [shape: f32[1,32], index: 1, kind: input, shape index: {}]
  %s2 = inlined_call_operand.vmem [shape: f32[1,32], index: 2, kind: input, shape index: {}]
  %s3 = inlined_call_operand.vmem [shape: f32[1,32,64], index: 3, kind: input, shape index: {}]
  %s4 = inlined_call_operand.hbm [shape: f32[1,1,64], index: 4, kind: input, shape index: {}]
  %s5 = inlined_call_operand.vmem [shape: f32[16,64], index: 5, kind: output, shape index: {}]
  %s6 = sld [smem:[#allocation0]]
  $region57: #{transformer_forward.18} parent=0
    _
  %s8 = ssub.s32 1, %s6
  %s9 = scalar_select 0, %s8, %s6
  $region1: #{transformer_forward.18} parent=0
    #allocation2 [shape = 'u8[512]{0}', space=vmem, size = 0x400, scoped, tag = 'input window, operand 4, single buffered']
    #allocation3 [shape = 's32[2]{0}', space=sflag, size = 0x8, scoped, tag = 'scoped memory for transformer_forward.18']
    %10 = vsyncpa [#allocation3], 0
    loop: start=0, step=1, limit=4
    $region2: #{transformer_forward.18} parent=1 // loop_pre_header
      _
    $region3: #{transformer_forward.18} parent=1 // loop_header
      %s12 = sphi 0, %s16
      %p13 = scmp.ge.s32.totalorder %s12, 4
      %s19 = sphi 0, %s38
      %s20 = sphi 0, %s34
      %s21 = sphi 0, %s30
      %s22 = sphi 0, %s19
      %s23 = sphi 0, %s20
      %s24 = sphi 0, %s21
      %s25 = sphi 0, %s22
      %s26 = sphi 0, %s23
      %s27 = sphi 0, %s24
      %s41 = sphi 0, %s43
      %s44 = sphi 0, %s41
      %s45 = sphi 0, %s44
      %s61 = sphi 0, %s45
      %s65 = sphi 0, %s65
      %s67 = sphi 0, %s65
      %s68 = sphi 0, %s67
      %s82 = sphi 0, %s68
      %s86 = sphi 0, %s86
      %s88 = sphi 0, %s86
      %s89 = sphi 0, %s88
      %s103 = sphi 0, %s89
      %s111 = sphi 0, %s113
      %s114 = sphi 0, %s111
      %s115 = sphi 0, %s114
      %s131 = sphi 0, %s115
      %s139 = sphi 0, %s141
      %s142 = sphi 0, %s139
      %s143 = sphi 0, %s142
      %s159 = sphi 0, %s143
      %s167 = sphi 0, %s169
      %s170 = sphi 0, %s167
      %s171 = sphi 0, %s170
      %s187 = sphi 0, %s171
    $region4: #{transformer_forward.18} parent=1 // loop_header_branch
      %15 = sbr.rel (%p13) target = $region8
    $region5: #{transformer_forward.18} parent=1 // loop_body
      %s17 = ssub.s32 %s12, 1
      %s18 = ssub.s32 %s12, 2
      %s28 = sadd.s32 1, %s21
      %p29 = scmp.ge.s32.totalorder %s28, 1
      %s30 = scalar_select %p29, 0, %s28
      %s31 = sadd.s32 1, %s20
      %s32 = scalar_select %p29, %s31, %s20
      %p33 = scmp.ge.s32.totalorder %s32, 1
      %s34 = scalar_select %p33, 0, %s32
      %s35 = sadd.s32 1, %s19
      %s36 = scalar_select %p33, %s35, %s19
      %p37 = scmp.ge.s32.totalorder %s36, 2
      %s38 = scalar_select %p37, 0, %s36
      %s39 = ssub.s32 %s19, %s38
      %p40 = scmp.eq.s32.totalorder %s39, 0
      %s42 = sadd.s32 %s41, 1
      %s43 = scalar_select %p40, %s41, %s42
      %p46 = pneg %p40
      %p47 = scmp.eq.s32.totalorder %s12, 1
      %p48 = por %p46, %p47
      %p49 = scmp.ne.s32.totalorder %s41, %s44
      %p50 = scmp.eq.s32.totalorder %s12, 0
      %p51 = por %p49, %p50
      %p52 = scmp.ne.s32.totalorder %s41, %s44
      %p53 = scmp.eq.s32.totalorder %s17, 1
      %p54 = por %p52, %p53
      %p55 = scmp.ne.s32.totalorder %s44, %s45
      %p56 = scmp.eq.s32.totalorder %s17, 0
      %p57 = por %p55, %p56
      %p58 = scmp.ne.s32.totalorder %s44, %s45
      %p59 = scmp.eq.s32.totalorder %s18, 1
      %p60 = por %p58, %p59
      %p62 = scmp.ne.s32.totalorder %s45, %s61
      %p63 = scmp.eq.s32.totalorder %s18, 0
      %p64 = por %p62, %p63
      %s66 = sadd.s32 %s65, 1
      %p69 = scmp.eq.s32.totalorder %s12, 1
      %p70 = scmp.ne.s32.totalorder %s65, %s67
      %p71 = scmp.eq.s32.totalorder %s12, 0
      %p72 = por %p70, %p71
      %p73 = scmp.ne.s32.totalorder %s65, %s67
      %p74 = scmp.eq.s32.totalorder %s17, 1
      %p75 = por %p73, %p74
      %p76 = scmp.ne.s32.totalorder %s67, %s68
      %p77 = scmp.eq.s32.totalorder %s17, 0
      %p78 = por %p76, %p77
      %p79 = scmp.ne.s32.totalorder %s67, %s68
      %p80 = scmp.eq.s32.totalorder %s18, 1
      %p81 = por %p79, %p80
      %p83 = scmp.ne.s32.totalorder %s68, %s82
      %p84 = scmp.eq.s32.totalorder %s18, 0
      %p85 = por %p83, %p84
      %s87 = sadd.s32 %s86, 1
      %p90 = scmp.eq.s32.totalorder %s12, 1
      %p91 = scmp.ne.s32.totalorder %s86, %s88
      %p92 = scmp.eq.s32.totalorder %s12, 0
      %p93 = por %p91, %p92
      %p94 = scmp.ne.s32.totalorder %s86, %s88
      %p95 = scmp.eq.s32.totalorder %s17, 1
      %p96 = por %p94, %p95
      %p97 = scmp.ne.s32.totalorder %s88, %s89
      %p98 = scmp.eq.s32.totalorder %s17, 0
      %p99 = por %p97, %p98
      %p100 = scmp.ne.s32.totalorder %s88, %s89
      %p101 = scmp.eq.s32.totalorder %s18, 1
      %p102 = por %p100, %p101
      %p104 = scmp.ne.s32.totalorder %s89, %s103
      %p105 = scmp.eq.s32.totalorder %s18, 0
      %p106 = por %p104, %p105
      %s107 = ssub.s32 %s20, %s34
      %s108 = ssub.s32 %s21, %s30
      %s109 = sor.u32 %s107, %s108
      %p110 = scmp.eq.s32.totalorder %s109, 0
      %s112 = sadd.s32 %s111, 1
      %s113 = scalar_select %p110, %s111, %s112
      %p116 = pneg %p110
      %p117 = scmp.eq.s32.totalorder %s12, 1
      %p118 = por %p116, %p117
      %p119 = scmp.ne.s32.totalorder %s111, %s114
      %p120 = scmp.eq.s32.totalorder %s12, 0
      %p121 = por %p119, %p120
      %p122 = scmp.ne.s32.totalorder %s111, %s114
      %p123 = scmp.eq.s32.totalorder %s17, 1
      %p124 = por %p122, %p123
      %p125 = scmp.ne.s32.totalorder %s114, %s115
      %p126 = scmp.eq.s32.totalorder %s17, 0
      %p127 = por %p125, %p126
      %p128 = scmp.ne.s32.totalorder %s114, %s115
      %p129 = scmp.eq.s32.totalorder %s18, 1
      %p130 = por %p128, %p129
      %p132 = scmp.ne.s32.totalorder %s115, %s131
      %p133 = scmp.eq.s32.totalorder %s18, 0
      %p134 = por %p132, %p133
      %s135 = ssub.s32 %s20, %s34
      %s136 = ssub.s32 %s21, %s30
      %s137 = sor.u32 %s135, %s136
      %p138 = scmp.eq.s32.totalorder %s137, 0
      %s140 = sadd.s32 %s139, 1
      %s141 = scalar_select %p138, %s139, %s140
      %p144 = pneg %p138
      %p145 = scmp.eq.s32.totalorder %s12, 1
      %p146 = por %p144, %p145
      %p147 = scmp.ne.s32.totalorder %s139, %s142
      %p148 = scmp.eq.s32.totalorder %s12, 0
      %p149 = por %p147, %p148
      %p150 = scmp.ne.s32.totalorder %s139, %s142
      %p151 = scmp.eq.s32.totalorder %s17, 1
      %p152 = por %p150, %p151
      %p153 = scmp.ne.s32.totalorder %s142, %s143
      %p154 = scmp.eq.s32.totalorder %s17, 0
      %p155 = por %p153, %p154
      %p156 = scmp.ne.s32.totalorder %s142, %s143
      %p157 = scmp.eq.s32.totalorder %s18, 1
      %p158 = por %p156, %p157
      %p160 = scmp.ne.s32.totalorder %s143, %s159
      %p161 = scmp.eq.s32.totalorder %s18, 0
      %p162 = por %p160, %p161
      %s163 = ssub.s32 %s19, %s38
      %s164 = ssub.s32 %s21, %s30
      %s165 = sor.u32 %s163, %s164
      %p166 = scmp.eq.s32.totalorder %s165, 0
      %s168 = sadd.s32 %s167, 1
      %s169 = scalar_select %p166, %s167, %s168
      %p172 = pneg %p166
      %p173 = scmp.eq.s32.totalorder %s12, 1
      %p174 = por %p172, %p173
      %p175 = scmp.ne.s32.totalorder %s167, %s170
      %p176 = scmp.eq.s32.totalorder %s12, 0
      %p177 = por %p175, %p176
      %p178 = scmp.ne.s32.totalorder %s167, %s170
      %p179 = scmp.eq.s32.totalorder %s17, 1
      %p180 = por %p178, %p179
      %p181 = scmp.ne.s32.totalorder %s170, %s171
      %p182 = scmp.eq.s32.totalorder %s17, 0
      %p183 = por %p181, %p182
      %p184 = scmp.ne.s32.totalorder %s170, %s171
      %p185 = scmp.eq.s32.totalorder %s18, 1
      %p186 = por %p184, %p185
      %p188 = scmp.ne.s32.totalorder %s171, %s187
      %p189 = scmp.eq.s32.totalorder %s18, 0
      %p190 = por %p188, %p189
      %p191 = scmp.le.s32.totalorder 1, %s12
      %p192 = scmp.lt.s32.totalorder %s12, 3
      %p193 = pnand %p191, %p192
      %p194 = pneg %p193
      // Predicated region
      $region9: #{transformer_forward.18} parent=5 // pred_check
        _
      $region10: #{transformer_forward.18} parent=5 // pred_check_branch
        %196 = sbr.rel (%p193) target = $region12
      $region11: #{transformer_forward.18} parent=5 // pred_region
        %s197 = ssub.s32 %s12, 1
        // Predicated region
        $region13: #{transformer_forward.18} parent=11 // pred_check
          %p198 = pneg %p78
        $region14: #{transformer_forward.18} parent=11 // pred_check_branch
          %200 = sbr.rel (%p198) target = $region16
        $region15: #{transformer_forward.18} parent=11 // pred_region
          _
        $region16: #{transformer_forward.18} parent=11 // pred_fallthru
          _
        // Predicated region
        $region17: #{transformer_forward.18} parent=11 // pred_check
          %p201 = pneg %p99
        $region18: #{transformer_forward.18} parent=11 // pred_check_branch
          %203 = sbr.rel (%p201) target = $region20
        $region19: #{transformer_forward.18} parent=11 // pred_region
          _
        $region20: #{transformer_forward.18} parent=11 // pred_fallthru
          _
        // Predicated region
        $region21: #{transformer_forward.18} parent=11 // pred_check
          %p204 = pneg %p127
        $region22: #{transformer_forward.18} parent=11 // pred_check_branch
          %206 = sbr.rel (%p204) target = $region24
        $region23: #{transformer_forward.18} parent=11 // pred_region
          %p207 = scmp.lt.s32.totalorder %s23, 0
          %s208 = scalar_select %p207, %s23, 0
          %p209 = scmp.lt.s32.totalorder %s24, 0
          %s210 = scalar_select %p209, %s24, 0
          %s211 = smul.addr %s208, 4
          %s212 = sadd.s32 %s210, %s211
          %s213 = smul.addr %s212, 8
          %s214 = scalar_lea.vmem %s3, %s213
        $region24: #{transformer_forward.18} parent=11 // pred_fallthru
          _
        // Predicated region
        $region25: #{transformer_forward.18} parent=11 // pred_check
          %p215 = pneg %p155
        $region26: #{transformer_forward.18} parent=11 // pred_check_branch
          %217 = sbr.rel (%p215) target = $region28
        $region27: #{transformer_forward.18} parent=11 // pred_region
          %219 = vsyncadd [#allocation3], 0
          %s220 = sadd.s32 %s24, %s23
          %s221 = scalar_lea.hbm %s4, %s220
          %s223 = sshll.u32 %s221, 4
          %s224 = int_to_ptr.hbm [resolvable:$true] %s223
          %s225 = sshll.u32 [#allocation2], 4
          %s226 = int_to_ptr.vmem [resolvable:$true] %s225
          %228 = dma.hbm_to_vmem [thread:$0]  %s224, 16, %s226, [#allocation3]
        $region28: #{transformer_forward.18} parent=11 // pred_fallthru
          _
      $region12: #{transformer_forward.18} parent=5 // pred_fallthru
        _
      %p229 = scmp.lt.s32.totalorder %s12, 2
      // Predicated region
      $region29: #{transformer_forward.18} parent=5 // pred_check
        %p230 = pneg %p229
      $region30: #{transformer_forward.18} parent=5 // pred_check_branch
        %232 = sbr.rel (%p230) target = $region32
      $region31: #{transformer_forward.18} parent=5 // pred_region
        // Predicated region
        $region33: #{transformer_forward.18} parent=31 // pred_check
          %p233 = pneg %p51
        $region34: #{transformer_forward.18} parent=31 // pred_check_branch
          %235 = sbr.rel (%p233) target = $region36
        $region35: #{transformer_forward.18} parent=31 // pred_region
          %p236 = scmp.lt.s32.totalorder %s19, 1
          %s237 = scalar_select %p236, %s19, 1
          %s238 = smul.addr %s237, 8
          %s239 = scalar_lea.vmem %s0, %s238
        $region36: #{transformer_forward.18} parent=31 // pred_fallthru
          _
      $region32: #{transformer_forward.18} parent=5 // pred_fallthru
        _
      %p240 = scmp.le.s32.totalorder 1, %s12
      %p241 = scmp.lt.s32.totalorder %s12, 3
      %p242 = pnand %p240, %p241
      %p243 = pneg %p242
      // Predicated region
      $region37: #{transformer_forward.18} parent=5 // pred_check
        _
      $region38: #{transformer_forward.18} parent=5 // pred_check_branch
        %245 = sbr.rel (%p242) target = $region40
      $region39: #{transformer_forward.18} parent=5 // pred_region
        %s246 = ssub.s32 %s12, 1
        // Predicated region
        $region41: #{transformer_forward.18} parent=39 // pred_check
          %p247 = pneg %p155
        $region42: #{transformer_forward.18} parent=39 // pred_check_branch
          %249 = sbr.rel (%p247) target = $region44
        $region43: #{transformer_forward.18} parent=39 // pred_region
          %251 = dma.done [#allocation3], 16
        $region44: #{transformer_forward.18} parent=39 // pred_fallthru
          _
        %p252 = scmp.lt.s32.totalorder %s22, 1
        %s253 = scalar_select %p252, %s22, 1
        %s254 = smul.addr %s253, 8
        %s255 = scalar_lea.vmem %s0, %s254
        %p256 = pneg %p57
        %p257 = pneg %p54
        %p258 = pneg %p78
        %p259 = pneg %p75
        %p260 = pneg %p99
        %p261 = pneg %p96
        %p262 = scmp.lt.s32.totalorder %s23, 0
        %s263 = scalar_select %p262, %s23, 0
        %p264 = scmp.lt.s32.totalorder %s24, 0
        %s265 = scalar_select %p264, %s24, 0
        %s266 = smul.addr %s263, 4
        %s267 = sadd.s32 %s265, %s266
        %s268 = smul.addr %s267, 8
        %s269 = scalar_lea.vmem %s3, %s268
        %p270 = pneg %p127
        %p271 = pneg %p124
        %p272 = pneg %p155
        %p273 = pneg %p152
        %p274 = pneg %p183
        %p275 = pneg %p180
        %p276 = scmp.lt.s32.totalorder %s22, 1
        %s277 = scalar_select %p276, %s22, 1
        %p278 = scmp.lt.s32.totalorder %s24, 0
        %s279 = scalar_select %p278, %s24, 0
        %s280 = sadd.s32 %s279, %s277
        %s281 = smul.addr %s280, 8
        %s282 = scalar_lea.vmem %s5, %s281
        %p283 = scmp.lt.s32.totalorder %s22, 1
        %s284 = scalar_select %p283, %s22, 1
        %s285 = smul.addr %s284, 8
        %s286 = scalar_lea.vmem %s0, %s285
        %p287 = scmp.lt.s32.totalorder %s23, 0
        %s288 = scalar_select %p287, %s23, 0
        %p289 = scmp.lt.s32.totalorder %s24, 0
        %s290 = scalar_select %p289, %s24, 0
        %s291 = smul.addr %s288, 4
        %s292 = sadd.s32 %s290, %s291
        %s293 = smul.addr %s292, 8
        %s294 = scalar_lea.vmem %s3, %s293
        %p295 = scmp.lt.s32.totalorder %s22, 1
        %s296 = scalar_select %p295, %s22, 1
        %p297 = scmp.lt.s32.totalorder %s24, 0
        %s298 = scalar_select %p297, %s24, 0
        %s299 = sadd.s32 %s298, %s296
        %s300 = smul.addr %s299, 8
        %s301 = scalar_lea.vmem %s5, %s300
        %v302 = vld [vmem:[%s286] sm:$0xff]
        %vm303 = vcmask 261120
        %v304 = vsel %vm303, %v302, 0.0
        %305 = vadd.xlane.f32.xlu0 %v304
        %v306 = vpop.xlane.xlu0 %305
        %v307 = vrcp.pop 32.0
        %v308 = vmul.f32 32.0, %v307
        %v309 = vsub.f32 1.0, %v308
        %v310 = vmul.f32 %v307, %v309
        %v311 = vadd.f32 %v307, %v310
        %vm312 = vweird.f32 %v307
        %v313 = vsel %vm312, %v307, %v311
        %v314 = vmul.f32 %v306, %v313
        %v315 = vsub.f32 %v302, %v314
        %v316 = vmul.f32 %v315, %v315
        %v317 = vsel %vm303, %v316, 0.0
        %318 = vadd.xlane.f32.xlu0 %v317
        %v319 = vpop.xlane.xlu0 %318
        %v320 = vmul.f32 %v319, %v313
        %v321 = vadd.f32 %v320, 1e-05
        %v322 = vrsqrt.pop %v321
        %v323 = vmul.f32 %v322, %v321
        %v324 = vmul.f32 %v323, %v322
        %v325 = vmul.f32 0.5, %v324
        %v326 = vsub.f32 1.5, %v325
        %v327 = vmul.f32 %v322, %v326
        %vm328 = vweird.f32 %v321
        %vm329 = vweird.f32 %v322
        %vm330 = vmor %vm328, %vm329
        %v331 = vsel %vm330, %v322, %v327
        %v332 = vmul.f32 %v315, %v331
        %v333 = vld [vmem:[%s1] sm:$0x1]
        %v335 = vperm.slane %v333, 0
        %v337 = vmul.f32 %v332, %v335
        %v338 = vld [vmem:[%s2] sm:$0x1]
        %v340 = vperm.slane %v338, 0
        %v342 = vadd.f32 %v337, %v340
        %v343 = vld [vmem:[%s294] sm:$0xff]
        %v344 = vld [vmem:[%s294 + $0x8] sm:$0xff]
        %v345 = vld [vmem:[%s294 + $0x10] sm:$0xff]
        %v346 = vld [vmem:[%s294 + $0x18] sm:$0xff]
        %v347 = vld [vmem:[#allocation2] sm:$0x1]
        %v349 = vperm.slane %v347, 0
        %v352 = vsel %vm303, %v342, 0
        %354 = vmatpush.msra.mxu0 0.0
        %355 = vmatpush.msra.mxu0 0.0
        %356 = vmatpush.msra.mxu0 0.0
        %357 = vmatpush.msra.mxu0 0.0
        %358 = vmatpush.msra.mxu0 0.0
        %359 = vmatpush.msra.mxu0 0.0
        %360 = vmatpush.msra.mxu0 0.0
        %361 = vmatpush.msra.mxu0 0.0
        %362 = vmatpush.msra.mxu0 0.0
        %363 = vmatpush.msra.mxu0 0.0
        %364 = vmatpush.msra.mxu0 0.0
        %365 = vmatpush.msra.mxu0 0.0
        %366 = vmatpush.msra.mxu0 %v346
        %367 = vmatpush.msra.mxu0 %v345
        %368 = vmatpush.msra.mxu0 %v344
        %369 = vmatpush.msra.mxu0 %v343
        %370 = vmatmul.f32.gmra.mxu0 %v352
        %v371 = vpop.f32.mrf.mxu0
        %v372 = vadd.f32 %v349, %v371
        %373 = vdwg.mxu0
        %v374 = vmax.f32 %v372, 0.0
        %vm375 = vcmask 523264
        %376 = vst.msk [vmem:[%s301] sm:$0xff] %vm375, %v374
        %p377 = scmp.lt.s32.totalorder %s22, 1
        %s378 = scalar_select %p377, %s22, 1
        %p379 = scmp.lt.s32.totalorder %s24, 0
        %s380 = scalar_select %p379, %s24, 0
        %s381 = sadd.s32 %s380, %s378
        %s382 = smul.addr %s381, 8
        %s383 = scalar_lea.vmem %s5, %s382
        // Predicated region
        $region45: #{transformer_forward.18} parent=39 // pred_check
          %p384 = pneg %p180
        $region46: #{transformer_forward.18} parent=39 // pred_check_branch
          %386 = sbr.rel (%p384) target = $region48
        $region47: #{transformer_forward.18} parent=39 // pred_region
          _
        $region48: #{transformer_forward.18} parent=39 // pred_fallthru
          _
      $region40: #{transformer_forward.18} parent=5 // pred_fallthru
        _
      %p387 = scmp.le.s32.totalorder 2, %s12
      // Predicated region
      $region49: #{transformer_forward.18} parent=5 // pred_check
        %p388 = pneg %p387
      $region50: #{transformer_forward.18} parent=5 // pred_check_branch
        %390 = sbr.rel (%p388) target = $region52
      $region51: #{transformer_forward.18} parent=5 // pred_region
        %s391 = ssub.s32 %s12, 2
        // Predicated region
        $region53: #{transformer_forward.18} parent=51 // pred_check
          %p392 = pneg %p186
        $region54: #{transformer_forward.18} parent=51 // pred_check_branch
          %394 = sbr.rel (%p392) target = $region56
        $region55: #{transformer_forward.18} parent=51 // pred_region
          %p395 = scmp.lt.s32.totalorder %s25, 1
          %s396 = scalar_select %p395, %s25, 1
          %p397 = scmp.lt.s32.totalorder %s27, 0
          %s398 = scalar_select %p397, %s27, 0
          %s399 = sadd.s32 %s398, %s396
          %s400 = smul.addr %s399, 8
          %s401 = scalar_lea.vmem %s5, %s400
        $region56: #{transformer_forward.18} parent=51 // pred_fallthru
          _
      $region52: #{transformer_forward.18} parent=5 // pred_fallthru
        _
    $region6: #{transformer_forward.18} parent=1 // loop_footer
      %s16 = sadd.s32 1, %s12
    $region7: #{transformer_forward.18} parent=1 // loop_footer_branch
      %11 = sbr.rel target = $region3
    $region8: #{transformer_forward.18} parent=1 // loop_exit
      _
    %402 = vsyncpa [#allocation3], 1
    %s403 = scalar_lea.sflag [#allocation3], 1
    %404 = vsyncpa %s403, 1

</llo_original>
